<compile_context>
chip_gen: v6e
topology: v6e:2x2x1
jax: 0.10.0
libtpu: 0.0.40
codegen_flags: <defaults>
</compile_context>

<pallas_src>
import math
from functools import partial

import jax
import jax.numpy as jnp
from jax.experimental import pallas as pl
from jax.experimental.pallas import tpu as pltpu

F32 = jnp.float32
BF16 = jnp.bfloat16
NEG = -1e9          # BERT-style additive mask value (avoids -inf/NaN pitfalls)
VMEM_LIMIT = 64 * 1024 * 1024
FUSED_LAYER_VMEM_BUDGET = 24 * 1024 * 1024   # heuristic switch fused <-> modular


def _pick_tile_m(M):
    """Largest row tile (pref. multiples of 128) that evenly divides M."""
    for t in (512, 256, 128, 64, 32, 16, 8):
        if M % t == 0:
            return t
    return M


def _gelu_exact(x):
    # matches torch.nn.GELU() (erf formulation)
    return 0.5 * x * (1.0 + jax.lax.erf(x * (1.0 / math.sqrt(2.0))))


def _ln_f32(y, gamma, beta, eps):
    mean = jnp.mean(y, axis=-1, keepdims=True)
    d = y - mean
    var = jnp.mean(d * d, axis=-1, keepdims=True)
    return d * jax.lax.rsqrt(var + eps) * gamma + beta


# ----------------------------------------------------------------------------
# Fully fused transformer layer (one pallas_call per layer, grid over batch)
# ----------------------------------------------------------------------------
def _fused_layer_kernel(x_ref, m_ref,
                        wqkv_ref, bqkv_ref,
                        wao_ref, bao_ref, ln1g_ref, ln1b_ref,
                        wi_ref, bi_ref,
                        wo_ref, bo_ref, ln2g_ref, ln2b_ref,
                        o_ref, *, nh, d, scale, eps, ln1_ident):
    H = nh * d
    x = x_ref[0].astype(F32)                       # (S, H)
    m = m_ref[0].astype(F32)                       # (1, S) additive mask

    # --- fused QKV projection -------------------------------------------------
    qkv = jnp.dot(x.astype(BF16), wqkv_ref[...].astype(BF16),
                  preferred_element_type=F32) + bqkv_ref[...].astype(F32)

    # --- multi-head self attention (heads statically unrolled) ----------------
    outs = []
    for h in range(nh):
        q = qkv[:, h * d:(h + 1) * d].astype(BF16)
        k = qkv[:, H + h * d:H + (h + 1) * d].astype(BF16)
        v = qkv[:, 2 * H + h * d:2 * H + (h + 1) * d].astype(BF16)
        s = jax.lax.dot_general(q, k, (((1,), (1,)), ((), ())),
                                preferred_element_type=F32) * scale
        s = s + m
        s = s - jnp.max(s, axis=-1, keepdims=True)
        p = jnp.exp(s)
        p = p / jnp.sum(p, axis=-1, keepdims=True)
        outs.append(jnp.dot(p.astype(BF16), v, preferred_element_type=F32))
    ctx = jnp.concatenate(outs, axis=-1)           # (S, H)

    # --- self-output: dense + residual (+ LayerNorm / Identity) ---------------
    h1 = jnp.dot(ctx.astype(BF16), wao_ref[...].astype(BF16),
                 preferred_element_type=F32) + bao_ref[...].astype(F32) + x
    if not ln1_ident:
        h1 = _ln_f32(h1, ln1g_ref[...].astype(F32), ln1b_ref[...].astype(F32), eps)

    # --- intermediate: dense + GELU -------------------------------------------
    inter = _gelu_exact(
        jnp.dot(h1.astype(BF16), wi_ref[...].astype(BF16),
                preferred_element_type=F32) + bi_ref[...].astype(F32))

    # --- output: dense + residual + LayerNorm ---------------------------------
    h2 = jnp.dot(inter.astype(BF16), wo_ref[...].astype(BF16),
                 preferred_element_type=F32) + bo_ref[...].astype(F32) + h1
    h2 = _ln_f32(h2, ln2g_ref[...].astype(F32), ln2b_ref[...].astype(F32), eps)

    o_ref[...] = h2[None].astype(o_ref.dtype)


def _fused_layer_fits(B, S, H, I, nh):
    """Rough f32 VMEM footprint of the per-batch fused layer kernel."""
    weights = H * 3 * H + H * H + H * I + I * H + 3 * H + 6 * H + 2 * I
    acts = S * 3 * H + 4 * S * H + S * I + nh * S * S
    # double-buffered inputs + scratch headroom
    return 4 * (weights + acts) * 3 < FUSED_LAYER_VMEM_BUDGET


def bert_layer_fused(x, mask3, lp, cfg, repl_norm_1_ident):
    B, S, H = x.shape
    NH = cfg["num_attention_heads"]
    D = H // NH
    I = cfg["intermediate_size"]
    eps = cfg["layer_norm_eps"]

    wqkv, bqkv = lp["qkv"]
    wao, bao = lp["ao"]
    wi, bi = lp["inter"]
    wo, bo = lp["out"]

    def rep(shape):
        # weight/bias block = full array, replicated across the batch grid
        return pl.BlockSpec(shape, lambda b: tuple(0 for _ in shape))

    in_specs = [
        pl.BlockSpec((1, S, H), lambda b: (b, 0, 0)),        # x
        pl.BlockSpec((1, 1, S), lambda b: (b, 0, 0)),        # additive mask
        rep((H, 3 * H)), rep((1, 3 * H)),                    # qkv
        rep((H, H)), rep((1, H)), rep((1, H)), rep((1, H)),  # ao + ln1
        rep((H, I)), rep((1, I)),                            # intermediate
        rep((I, H)), rep((1, H)), rep((1, H)), rep((1, H)),  # out + ln2
    ]
    args = [
        x, mask3,
        wqkv, bqkv.reshape(1, 3 * H),
        wao, bao.reshape(1, H), lp["ln1_g"].reshape(1, H), lp["ln1_b"].reshape(1, H),
        wi, bi.reshape(1, I),
        wo, bo.reshape(1, H), lp["ln2_g"].reshape(1, H), lp["ln2_b"].reshape(1, H),
    ]

    flops = 2 * B * S * (H * 3 * H + H * H + H * I + I * H) + 4 * B * NH * S * S * D
    cost = pl.CostEstimate(
        flops=flops,
        transcendentals=B * S * I + B * NH * S * S,
        bytes_accessed=4 * (2 * B * S * H + H * 3 * H + H * H + 2 * H * I + B * S),
    )

    return pl.pallas_call(
        partial(_fused_layer_kernel, nh=NH, d=D, scale=1.0 / math.sqrt(D),
                eps=eps, ln1_ident=repl_norm_1_ident),
        out_shape=jax.ShapeDtypeStruct((B, S, H), x.dtype),
        grid=(B,),
        in_specs=in_specs,
        out_specs=pl.BlockSpec((1, S, H), lambda b: (b, 0, 0)),
        compiler_params=pltpu.CompilerParams(
            dimension_semantics=("parallel",),
            vmem_limit_bytes=VMEM_LIMIT),
        cost_estimate=cost,
    )(*args)


# ----------------------------------------------------------------------------
# Modular kernels (fallback path for large configs; validated previously)
# ----------------------------------------------------------------------------
def _linear_kernel(x_ref, *rest, act, has_res, has_ln, eps):
    """y = LN( act(x @ W + b) [+ residual] )  with optional pieces."""
    idx = 0
    r_ref = None
    if has_res:
        r_ref = rest[idx]
        idx += 1
    w_ref, b_ref = rest[idx], rest[idx + 1]
    idx += 2
    g_ref = be_ref = None
    if has_ln:
        g_ref, be_ref = rest[idx], rest[idx + 1]
        idx += 2
    o_ref = rest[idx]

    x = x_ref[...].astype(BF16)
    w = w_ref[...].astype(BF16)
    y = jnp.dot(x, w, preferred_element_type=jnp.float32)
    y = y + b_ref[...].astype(jnp.float32)
    if act == "gelu":
        y = _gelu_exact(y)
    if has_res:
        y = y + r_ref[...].astype(jnp.float32)
    if has_ln:
        y = _ln_f32(y, g_ref[...].astype(F32), be_ref[...].astype(F32), eps)
    o_ref[...] = y.astype(o_ref.dtype)


def linear(x2d, w, b, *, act="none", residual=None, ln=None, eps=1e-12):
    """Fused linear:  LN( act(x @ W + b) [+ residual] )."""
    M, K = x2d.shape
    K2, N = w.shape
    assert K == K2
    has_res = residual is not None
    has_ln = ln is not None

    tm = _pick_tile_m(M)
    # N tiling only for row-independent epilogues (LayerNorm needs the full row).
    if (not has_ln) and N > 512 and N % 128 == 0:
        tn = 256 if N % 256 == 0 else 128
    else:
        tn = N
    grid = (M // tm, N // tn)

    in_specs = [pl.BlockSpec((tm, K), lambda i, j: (i, 0))]
    args = [x2d]
    if has_res:
        in_specs.append(pl.BlockSpec((tm, tn), lambda i, j: (i, j)))
        args.append(residual)
    in_specs += [pl.BlockSpec((K, tn), lambda i, j: (0, j)),
                 pl.BlockSpec((1, tn), lambda i, j: (0, j))]
    args += [w, b.reshape(1, N)]
    if has_ln:
        gamma, beta = ln
        in_specs += [pl.BlockSpec((1, tn), lambda i, j: (0, j)),
                     pl.BlockSpec((1, tn), lambda i, j: (0, j))]
        args += [gamma.reshape(1, N), beta.reshape(1, N)]

    cost = pl.CostEstimate(
        flops=2 * M * K * N,
        transcendentals=(M * N if act == "gelu" else 0),
        bytes_accessed=4 * (M * K + K * N + 2 * M * N + (M * N if has_res else 0)),
    )

    return pl.pallas_call(
        partial(_linear_kernel, act=act, has_res=has_res, has_ln=has_ln, eps=eps),
        out_shape=jax.ShapeDtypeStruct((M, N), x2d.dtype),
        grid=grid,
        in_specs=in_specs,
        out_specs=pl.BlockSpec((tm, tn), lambda i, j: (i, j)),
        compiler_params=pltpu.CompilerParams(
            dimension_semantics=("parallel", "parallel"),
            vmem_limit_bytes=VMEM_LIMIT),
        cost_estimate=cost,
    )(*args)


def _ln_kernel(x_ref, g_ref, b_ref, o_ref, *, eps):
    x = x_ref[...].astype(jnp.float32)
    o_ref[...] = _ln_f32(x, g_ref[...], b_ref[...], eps).astype(o_ref.dtype)


def layernorm(x2d, gamma, beta, eps):
    """Plain LayerNorm over the last dim; x2d: (M, H)."""
    M, H = x2d.shape
    tm = _pick_tile_m(M)
    return pl.pallas_call(
        partial(_ln_kernel, eps=eps),
        out_shape=jax.ShapeDtypeStruct((M, H), x2d.dtype),
        grid=(M // tm,),
        in_specs=[pl.BlockSpec((tm, H), lambda i: (i, 0)),
                  pl.BlockSpec((1, H), lambda i: (0, 0)),
                  pl.BlockSpec((1, H), lambda i: (0, 0))],
        out_specs=pl.BlockSpec((tm, H), lambda i: (i, 0)),
        compiler_params=pltpu.CompilerParams(
            dimension_semantics=("parallel",),
            vmem_limit_bytes=VMEM_LIMIT),
    )(x2d, gamma.reshape(1, H), beta.reshape(1, H))


def _attn_kernel(qkv_ref, m_ref, o_ref, *, nh, d, scale):
    """Per-batch multi-head attention; head split/merge done in-kernel."""
    H = nh * d
    qkv = qkv_ref[0]                           # (S, 3H)
    m = m_ref[0].astype(jnp.float32)           # (1, S) additive mask
    outs = []
    for h in range(nh):                        # static unroll over heads
        q = qkv[:, h * d:(h + 1) * d].astype(BF16)
        k = qkv[:, H + h * d:H + (h + 1) * d].astype(BF16)
        v = qkv[:, 2 * H + h * d:2 * H + (h + 1) * d].astype(BF16)
        s = jax.lax.dot_general(q, k, (((1,), (1,)), ((), ())),
                                preferred_element_type=jnp.float32) * scale
        s = s + m
        s = s - jnp.max(s, axis=-1, keepdims=True)
        p = jnp.exp(s)
        p = p / jnp.sum(p, axis=-1, keepdims=True)
        outs.append(jnp.dot(p.astype(BF16), v, preferred_element_type=jnp.float32))
    o_ref[...] = jnp.concatenate(outs, axis=-1)[None].astype(o_ref.dtype)


def attention(qkv, mask3, nh, d):
    """Multi-head self-attention on the fused QKV tensor (B, S, 3H)."""
    # TODO(synk): for large S (>=256) replace with a flash-attention style
    # (batch*head, q-tile, kv-tile) grid with online softmax (v7x 64 MiB VMEM).
    B, S, H3 = qkv.shape
    H = nh * d
    cost = pl.CostEstimate(
        flops=4 * B * nh * S * S * d,
        transcendentals=B * nh * S * S,
        bytes_accessed=4 * (B * S * H3 + B * S * H + B * S),
    )
    return pl.pallas_call(
        partial(_attn_kernel, nh=nh, d=d, scale=1.0 / math.sqrt(d)),
        out_shape=jax.ShapeDtypeStruct((B, S, H), qkv.dtype),
        grid=(B,),
        in_specs=[pl.BlockSpec((1, S, H3), lambda b: (b, 0, 0)),
                  pl.BlockSpec((1, 1, S), lambda b: (b, 0, 0))],
        out_specs=pl.BlockSpec((1, S, H), lambda b: (b, 0, 0)),
        compiler_params=pltpu.CompilerParams(
            dimension_semantics=("parallel",),
            vmem_limit_bytes=VMEM_LIMIT),
        cost_estimate=cost,
    )(qkv, mask3)


# ----------------------------------------------------------------------------
# Parameter init (deterministic, synthetic)
# ----------------------------------------------------------------------------
def _lin_params(key, din, dout):
    w = jax.random.normal(key, (din, dout), F32) * 0.02
    b = jnp.zeros((dout,), F32)
    return (w, b)


def init_layer_params(key, cfg):
    H, I = cfg["hidden_size"], cfg["intermediate_size"]
    ks = jax.random.split(key, 6)
    wq, bq = _lin_params(ks[0], H, H)
    wk, bk = _lin_params(ks[1], H, H)
    wv, bv = _lin_params(ks[2], H, H)
    return {
        # fused QKV projection: (H, 3H)
        "qkv": (jnp.concatenate([wq, wk, wv], axis=1),
                jnp.concatenate([bq, bk, bv], axis=0)),
        "ao": _lin_params(ks[3], H, H),
        "ln1_g": jnp.ones((H,), F32), "ln1_b": jnp.zeros((H,), F32),
        "inter": _lin_params(ks[4], H, I),
        "out": _lin_params(ks[5], I, H),
        "ln2_g": jnp.ones((H,), F32), "ln2_b": jnp.zeros((H,), F32),
    }


def init_bert_params(key, cfg):
    H = cfg["hidden_size"]
    ks = jax.random.split(key, 3 + cfg["num_hidden_layers"])
    word = jax.random.normal(ks[0], (cfg["vocab_size"], H), F32) * 0.02
    word = word.at[cfg["pad_token_id"]].set(0.0)   # nn.Embedding padding_idx
    return {
        "word": word,
        "pos": jax.random.normal(ks[1], (cfg["max_position_embeddings"], H), F32) * 0.02,
        "type": jax.random.normal(ks[2], (cfg["type_vocab_size"], H), F32) * 0.02,
        "emb_ln_g": jnp.ones((H,), F32),
        "emb_ln_b": jnp.zeros((H,), F32),
        "layers": [init_layer_params(ks[3 + i], cfg)
                   for i in range(cfg["num_hidden_layers"])],
    }


def init_final_params(key, cfg):
    H = cfg["hidden_size"]
    W = cfg["explainer_head_hidden_size"]
    L = cfg["num_labels"]
    kc, ke = jax.random.split(key)
    kcb, kcp, kcc = jax.random.split(kc, 3)
    classifier = {
        "bert": init_bert_params(kcb, cfg),
        "pooler": _lin_params(kcp, H, H),
        "cls": _lin_params(kcc, H, L),
    }
    keb, kea, km1, km2, km3 = jax.random.split(ke, 5)
    attn_keys = jax.random.split(kea, cfg["explainer_attn_num_layers"])
    explainer = {
        "bert": init_bert_params(keb, cfg),
        "attn_layers": [init_layer_params(k, cfg) for k in attn_keys],
        "mlp": [_lin_params(km1, H, W), _lin_params(km2, W, W), _lin_params(km3, W, L)],
    }
    # TODO(synk): surrogate branch + normalize_shapley_explanation are only used
    # when explainer_normalize=True (helper not defined in reference); disabled here.
    return {"classifier": classifier, "explainer": explainer}


# ----------------------------------------------------------------------------
# Forward (JAX glue around Pallas kernels)
# ----------------------------------------------------------------------------
def extended_attention_mask(attention_mask):
    # (B, 1, S) additive mask; -1e9 for masked keys (BERT convention).
    return (1.0 - attention_mask.astype(F32))[:, None, :] * NEG


def bert_layer_forward(x, mask3, lp, cfg, repl_norm_1_ident=False):
    B, S, H = x.shape
    NH = cfg["num_attention_heads"]
    D = H // NH
    I = cfg["intermediate_size"]
    eps = cfg["layer_norm_eps"]

    if _fused_layer_fits(B, S, H, I, NH):
        # whole transformer layer in a single pallas_call (overhead-dominated regime)
        return bert_layer_fused(x, mask3, lp, cfg, repl_norm_1_ident)

    # modular fallback for large configs
    x2 = x.reshape(B * S, H)
    qkv = linear(x2, *lp["qkv"])                              # (B*S, 3H) fused
    ctx = attention(qkv.reshape(B, S, 3 * H), mask3, NH, D)   # (B, S, H)
    ctx2 = ctx.reshape(B * S, H)

    if repl_norm_1_ident:
        h = linear(ctx2, *lp["ao"], residual=x2)              # LayerNorm -> Identity
    else:
        h = linear(ctx2, *lp["ao"], residual=x2,
                   ln=(lp["ln1_g"], lp["ln1_b"]), eps=eps)

    inter = linear(h, *lp["inter"], act="gelu")
    h2 = linear(inter, *lp["out"], residual=h,
                ln=(lp["ln2_g"], lp["ln2_b"]), eps=eps)
    return h2.reshape(B, S, H)


def bert_forward(p, cfg, input_ids, attention_mask, token_type_ids):
    B, S = input_ids.shape
    H = cfg["hidden_size"]
    we = jnp.take(p["word"], input_ids, axis=0)
    te = jnp.take(p["type"], token_type_ids, axis=0)
    pe = p["pos"][:S][None, :, :]
    emb = (we + te + pe).reshape(B * S, H)
    emb = layernorm(emb, p["emb_ln_g"], p["emb_ln_b"],
                    cfg["layer_norm_eps"]).reshape(B, S, H)
    mask3 = extended_attention_mask(attention_mask)
    x = emb
    for lp in p["layers"]:
        x = bert_layer_forward(x, mask3, lp, cfg)
    return x


def classifier_forward(params, cfg, input_ids, attention_mask, token_type_ids):
    seq = bert_forward(params["bert"], cfg, input_ids, attention_mask, token_type_ids)
    first = seq[:, 0, :]                                  # (B, H)
    # Tiny tail ops (last dim < 128): plain XLA.
    pw, pb = params["pooler"]
    pooled = jnp.tanh(first @ pw + pb)
    cw, cb = params["cls"]
    logits = jax.nn.softmax(pooled @ cw + cb, axis=-1)
    return logits


def explainer_forward(params, cfg, input_ids, attention_mask, token_type_ids):
    out = bert_forward(params["bert"], cfg, input_ids, attention_mask, token_type_ids)
    mask3 = extended_attention_mask(attention_mask)
    for i, lp in enumerate(params["attn_layers"]):
        out = bert_layer_forward(out, mask3, lp, cfg, repl_norm_1_ident=(i == 0))
    B, S, H = out.shape
    x2 = out.reshape(B * S, H)
    # Explainer MLP widths (32 -> 32 -> 3) are far below one lane tile: plain XLA.
    (w1, b1), (w2, b2), (w3, b3) = params["mlp"]
    h = _gelu_exact(x2 @ w1 + b1)
    h = _gelu_exact(h @ w2 + b2)
    h = h @ w3 + b3
    out = h.reshape(B, S, cfg["num_labels"])
    # explainer_normalize = False -> no shapley normalization
    out = out[:, 1:, :].transpose(0, 2, 1)                # (B, num_labels, S-1)
    return out


def vanilla_bert_final_forward(params, cfg, input_ids, attention_mask, token_type_ids):
    logits = classifier_forward(params["classifier"], cfg,
                                input_ids, attention_mask, token_type_ids)
    explanation = explainer_forward(params["explainer"], cfg,
                                    input_ids, attention_mask, token_type_ids)
    return logits, explanation


# ----------------------------------------------------------------------------
if __name__ == "__main__":
    cfg = dict(
        attention_probs_dropout_prob=0.1,
        explainer_attn_num_layers=1,
        explainer_head_hidden_size=32,
        explainer_normalize=False,
        hidden_dropout_prob=0.1,
        hidden_size=32,
        intermediate_size=64,
        layer_norm_eps=1e-12,
        max_position_embeddings=16,
        num_attention_heads=4,
        num_hidden_layers=2,
        num_labels=3,
        pad_token_id=0,
        type_vocab_size=2,
        vocab_size=50,
    )
    key = jax.random.PRNGKey(0)
    k_params, k_ids = jax.random.split(key)
    params = init_final_params(k_params, cfg)

    B, S = 2, 8
    input_ids = jax.random.randint(k_ids, (B, S), 1, cfg["vocab_size"], dtype=jnp.int32)
    attention_mask = jnp.ones((B, S), jnp.int32)
    token_type_ids = jnp.zeros((B, S), jnp.int32)

    fwd = jax.jit(lambda p, ii, am, tt: vanilla_bert_final_forward(p, cfg, ii, am, tt))
    logits, explanation = fwd(params, input_ids, attention_mask, token_type_ids)
    jax.block_until_ready((logits, explanation))

    assert logits.shape == (B, cfg["num_labels"])
    assert explanation.shape == (B, cfg["num_labels"], S - 1)
    assert bool(jnp.allclose(jnp.sum(logits, axis=-1), 1.0, atol=1e-5))
    assert bool(jnp.all(jnp.isfinite(explanation)))
    print("KERNEL_OK")
</pallas_src>

<mosaic_0001>
module attributes {stable_mosaic.version = 11 : i64} {
  func.func @_ln_kernel(%arg0: i32, %arg1: memref<16x32xf32, #tpu.memory_space<vmem>>, %arg2: memref<1x32xf32, #tpu.memory_space<vmem>>, %arg3: memref<1x32xf32, #tpu.memory_space<vmem>>, %arg4: memref<16x32xf32, #tpu.memory_space<vmem>>) attributes {dimension_semantics = [#tpu.dimension_semantics<parallel>], iteration_bounds = array<i64: 1>, scalar_prefetch = 0 : i64, scratch_operands = 0 : i64, tpu.core_type = #tpu.core_type<tc>, window_params = [{transform_indices = @transform_0, window_bounds = array<i64: 16, 32>}, {pipeline_mode = #tpu.pipeline_mode<synchronous>, transform_indices = @transform_1, window_bounds = array<i64: 1, 32>}, {pipeline_mode = #tpu.pipeline_mode<synchronous>, transform_indices = @transform_2, window_bounds = array<i64: 1, 32>}, {transform_indices = @transform_3, window_bounds = array<i64: 16, 32>}]} {
    %c0 = arith.constant 0 : index
    %c0_0 = arith.constant 0 : index
    %0 = vector.load %arg1[%c0, %c0_0] : memref<16x32xf32, #tpu.memory_space<vmem>>, vector<16x32xf32>
    %c0_1 = arith.constant 0 : index
    %c0_2 = arith.constant 0 : index
    %1 = vector.load %arg2[%c0_1, %c0_2] : memref<1x32xf32, #tpu.memory_space<vmem>>, vector<1x32xf32>
    %c0_3 = arith.constant 0 : index
    %c0_4 = arith.constant 0 : index
    %2 = vector.load %arg3[%c0_3, %c0_4] : memref<1x32xf32, #tpu.memory_space<vmem>>, vector<1x32xf32>
    %cst = arith.constant dense<0.000000e+00> : vector<16xf32>
    %3 = vector.multi_reduction <add>, %0, %cst [1] : vector<16x32xf32> to vector<16xf32>
    %4 = vector.shape_cast %3 : vector<16xf32> to vector<16x1xf32>
    %cst_5 = arith.constant 3.200000e+01 : f32
    %5 = vector.broadcast %cst_5 : f32 to vector<16x1xf32>
    %6 = arith.divf %4, %5 : vector<16x1xf32>
    %7 = vector.broadcast %6 : vector<16x1xf32> to vector<16x32xf32>
    %8 = arith.subf %0, %7 : vector<16x32xf32>
    %9 = arith.mulf %8, %8 : vector<16x32xf32>
    %cst_6 = arith.constant dense<0.000000e+00> : vector<16xf32>
    %10 = vector.multi_reduction <add>, %9, %cst_6 [1] : vector<16x32xf32> to vector<16xf32>
    %11 = vector.shape_cast %10 : vector<16xf32> to vector<16x1xf32>
    %cst_7 = arith.constant 3.200000e+01 : f32
    %12 = vector.broadcast %cst_7 : f32 to vector<16x1xf32>
    %13 = arith.divf %11, %12 : vector<16x1xf32>
    %cst_8 = arith.constant 9.99999996E-13 : f32
    %14 = vector.broadcast %cst_8 : f32 to vector<16x1xf32>
    %15 = arith.addf %13, %14 : vector<16x1xf32>
    %16 = math.rsqrt %15 : vector<16x1xf32>
    %17 = vector.broadcast %16 : vector<16x1xf32> to vector<16x32xf32>
    %18 = arith.mulf %8, %17 : vector<16x32xf32>
    %19 = vector.broadcast %1 : vector<1x32xf32> to vector<16x32xf32>
    %20 = arith.mulf %18, %19 : vector<16x32xf32>
    %21 = vector.broadcast %2 : vector<1x32xf32> to vector<16x32xf32>
    %22 = arith.addf %20, %21 : vector<16x32xf32>
    %c0_9 = arith.constant 0 : index
    %c0_10 = arith.constant 0 : index
    %23 = vector.load %arg4[%c0_9, %c0_10] : memref<16x32xf32, #tpu.memory_space<vmem>>, vector<16x32xf32>
    tpu.vector_store %arg4[%c0_9, %c0_10], %22 {strides = array<i32>} : memref<16x32xf32, #tpu.memory_space<vmem>>, vector<16x32xf32>,
    return
  }
  func.func @transform_0(%arg0: i32) -> (i32, i32) {
    %c0_i32 = arith.constant 0 : i32
    %c0_i32_0 = arith.constant 0 : i32
    return %arg0, %c0_i32 : i32, i32
  }
  func.func @transform_1(%arg0: i32) -> (i32, i32) {
    %c0_i32 = arith.constant 0 : i32
    %c0_i32_0 = arith.constant 0 : i32
    %c0_i32_1 = arith.constant 0 : i32
    return %c0_i32, %c0_i32_0 : i32, i32
  }
  func.func @transform_2(%arg0: i32) -> (i32, i32) {
    %c0_i32 = arith.constant 0 : i32
    %c0_i32_0 = arith.constant 0 : i32
    %c0_i32_1 = arith.constant 0 : i32
    return %c0_i32, %c0_i32_0 : i32, i32
  }
  func.func @transform_3(%arg0: i32) -> (i32, i32) {
    %c0_i32 = arith.constant 0 : i32
    %c0_i32_0 = arith.constant 0 : i32
    return %arg0, %c0_i32 : i32, i32
  }
}

module attributes {stable_mosaic.version = 11 : i64} {
  func.func @_fused_layer_kernel(%arg0: i32, %arg1: memref<1x8x32xf32, #tpu.memory_space<vmem>>, %arg2: memref<1x1x8xf32, #tpu.memory_space<vmem>>, %arg3: memref<32x96xf32, #tpu.memory_space<vmem>>, %arg4: memref<1x96xf32, #tpu.memory_space<vmem>>, %arg5: memref<32x32xf32, #tpu.memory_space<vmem>>, %arg6: memref<1x32xf32, #tpu.memory_space<vmem>>, %arg7: memref<1x32xf32, #tpu.memory_space<vmem>>, %arg8: memref<1x32xf32, #tpu.memory_space<vmem>>, %arg9: memref<32x64xf32, #tpu.memory_space<vmem>>, %arg10: memref<1x64xf32, #tpu.memory_space<vmem>>, %arg11: memref<64x32xf32, #tpu.memory_space<vmem>>, %arg12: memref<1x32xf32, #tpu.memory_space<vmem>>, %arg13: memref<1x32xf32, #tpu.memory_space<vmem>>, %arg14: memref<1x32xf32, #tpu.memory_space<vmem>>, %arg15: memref<1x8x32xf32, #tpu.memory_space<vmem>>) attributes {dimension_semantics = [#tpu.dimension_semantics<parallel>], iteration_bounds = array<i64: 2>, scalar_prefetch = 0 : i64, scratch_operands = 0 : i64, tpu.core_type = #tpu.core_type<tc>, window_params = [{transform_indices = @transform_0, window_bounds = array<i64: 1, 8, 32>}, {transform_indices = @transform_1, window_bounds = array<i64: 1, 1, 8>}, {pipeline_mode = #tpu.pipeline_mode<synchronous>, transform_indices = @transform_2, window_bounds = array<i64: 32, 96>}, {pipeline_mode = #tpu.pipeline_mode<synchronous>, transform_indices = @transform_3, window_bounds = array<i64: 1, 96>}, {pipeline_mode = #tpu.pipeline_mode<synchronous>, transform_indices = @transform_4, window_bounds = array<i64: 32, 32>}, {pipeline_mode = #tpu.pipeline_mode<synchronous>, transform_indices = @transform_5, window_bounds = array<i64: 1, 32>}, {pipeline_mode = #tpu.pipeline_mode<synchronous>, transform_indices = @transform_6, window_bounds = array<i64: 1, 32>}, {pipeline_mode = #tpu.pipeline_mode<synchronous>, transform_indices = @transform_7, window_bounds = array<i64: 1, 32>}, {pipeline_mode = #tpu.pipeline_mode<synchronous>, transform_indices = @transform_8, window_bounds = array<i64: 32, 64>}, {pipeline_mode = #tpu.pipeline_mode<synchronous>, transform_indices = @transform_9, window_bounds = array<i64: 1, 64>}, {pipeline_mode = #tpu.pipeline_mode<synchronous>, transform_indices = @transform_10, window_bounds = array<i64: 64, 32>}, {pipeline_mode = #tpu.pipeline_mode<synchronous>, transform_indices = @transform_11, window_bounds = array<i64: 1, 32>}, {pipeline_mode = #tpu.pipeline_mode<synchronous>, transform_indices = @transform_12, window_bounds = array<i64: 1, 32>}, {pipeline_mode = #tpu.pipeline_mode<synchronous>, transform_indices = @transform_13, window_bounds = array<i64: 1, 32>}, {transform_indices = @transform_14, window_bounds = array<i64: 1, 8, 32>}]} {
    %c0 = arith.constant 0 : index
    %c0_0 = arith.constant 0 : index
    %c0_1 = arith.constant 0 : index
    %0 = vector.load %arg1[%c0, %c0_0, %c0_1] : memref<1x8x32xf32, #tpu.memory_space<vmem>>, vector<1x8x32xf32>
    %1 = vector.shape_cast %0 : vector<1x8x32xf32> to vector<8x32xf32>
    %c0_2 = arith.constant 0 : index
    %c0_3 = arith.constant 0 : index
    %c0_4 = arith.constant 0 : index
    %2 = vector.load %arg2[%c0_2, %c0_3, %c0_4] : memref<1x1x8xf32, #tpu.memory_space<vmem>>, vector<1x1x8xf32>
    %3 = vector.shape_cast %2 : vector<1x1x8xf32> to vector<1x8xf32>
    %4 = arith.truncf %1 : vector<8x32xf32> to vector<8x32xbf16>
    %c0_5 = arith.constant 0 : index
    %c0_6 = arith.constant 0 : index
    %5 = vector.load %arg3[%c0_5, %c0_6] : memref<32x96xf32, #tpu.memory_space<vmem>>, vector<32x96xf32>
    %6 = arith.truncf %5 : vector<32x96xf32> to vector<32x96xbf16>
    %cst = arith.constant dense<0.000000e+00> : vector<8x96xf32>
    %7 = tpu.matmul %4, %6, %cst {dimension_numbers = #tpu.dot_dimension_numbers<[1], [0], [0], [1], [0, 0, 1, 1], [], []>} : vector<8x32xbf16>, vector<32x96xbf16>, vector<8x96xf32> -> vector<8x96xf32>
    %c0_7 = arith.constant 0 : index
    %c0_8 = arith.constant 0 : index
    %8 = vector.load %arg4[%c0_7, %c0_8] : memref<1x96xf32, #tpu.memory_space<vmem>>, vector<1x96xf32>
    %9 = vector.broadcast %8 : vector<1x96xf32> to vector<8x96xf32>
    %10 = arith.addf %7, %9 : vector<8x96xf32>
    %11 = vector.extract_strided_slice %10 {offsets = [0, 0], sizes = [8, 8], strides = [1, 1]} : vector<8x96xf32> to vector<8x8xf32>
    %12 = arith.truncf %11 : vector<8x8xf32> to vector<8x8xbf16>
    %13 = vector.extract_strided_slice %10 {offsets = [0, 32], sizes = [8, 8], strides = [1, 1]} : vector<8x96xf32> to vector<8x8xf32>
    %14 = arith.truncf %13 : vector<8x8xf32> to vector<8x8xbf16>
    %15 = vector.extract_strided_slice %10 {offsets = [0, 64], sizes = [8, 8], strides = [1, 1]} : vector<8x96xf32> to vector<8x8xf32>
    %16 = arith.truncf %15 : vector<8x8xf32> to vector<8x8xbf16>
    %cst_9 = arith.constant dense<0.000000e+00> : vector<8x8xf32>
    %17 = tpu.matmul %12, %14, %cst_9 {dimension_numbers = #tpu.dot_dimension_numbers<[1], [1], [0], [0], [0, 0, 1, 0], [], []>} : vector<8x8xbf16>, vector<8x8xbf16>, vector<8x8xf32> -> vector<8x8xf32>
    %cst_10 = arith.constant 0.353553385 : f32
    %18 = vector.broadcast %cst_10 : f32 to vector<8x8xf32>
    %19 = arith.mulf %17, %18 : vector<8x8xf32>
    %20 = vector.broadcast %3 : vector<1x8xf32> to vector<8x8xf32>
    %21 = arith.addf %19, %20 : vector<8x8xf32>
    %cst_11 = arith.constant dense<0xFF800000> : vector<8xf32>
    %22 = vector.multi_reduction <maximumf>, %21, %cst_11 [1] : vector<8x8xf32> to vector<8xf32>
    %23 = vector.shape_cast %22 : vector<8xf32> to vector<8x1xf32>
    %24 = vector.broadcast %23 : vector<8x1xf32> to vector<8x8xf32>
    %25 = arith.subf %21, %24 : vector<8x8xf32>
    %26 = math.exp %25 : vector<8x8xf32>
    %cst_12 = arith.constant dense<0.000000e+00> : vector<8xf32>
    %27 = vector.multi_reduction <add>, %26, %cst_12 [1] : vector<8x8xf32> to vector<8xf32>
    %28 = vector.shape_cast %27 : vector<8xf32> to vector<8x1xf32>
    %29 = vector.broadcast %28 : vector<8x1xf32> to vector<8x8xf32>
    %30 = arith.divf %26, %29 : vector<8x8xf32>
    %31 = arith.truncf %30 : vector<8x8xf32> to vector<8x8xbf16>
    %cst_13 = arith.constant dense<0.000000e+00> : vector<8x8xf32>
    %32 = tpu.matmul %31, %16, %cst_13 {dimension_numbers = #tpu.dot_dimension_numbers<[1], [0], [0], [1], [0, 0, 1, 1], [], []>} : vector<8x8xbf16>, vector<8x8xbf16>, vector<8x8xf32> -> vector<8x8xf32>
    %33 = vector.extract_strided_slice %10 {offsets = [0, 8], sizes = [8, 8], strides = [1, 1]} : vector<8x96xf32> to vector<8x8xf32>
    %34 = arith.truncf %33 : vector<8x8xf32> to vector<8x8xbf16>
    %35 = vector.extract_strided_slice %10 {offsets = [0, 40], sizes = [8, 8], strides = [1, 1]} : vector<8x96xf32> to vector<8x8xf32>
    %36 = arith.truncf %35 : vector<8x8xf32> to vector<8x8xbf16>
    %37 = vector.extract_strided_slice %10 {offsets = [0, 72], sizes = [8, 8], strides = [1, 1]} : vector<8x96xf32> to vector<8x8xf32>
    %38 = arith.truncf %37 : vector<8x8xf32> to vector<8x8xbf16>
    %cst_14 = arith.constant dense<0.000000e+00> : vector<8x8xf32>
    %39 = tpu.matmul %34, %36, %cst_14 {dimension_numbers = #tpu.dot_dimension_numbers<[1], [1], [0], [0], [0, 0, 1, 0], [], []>} : vector<8x8xbf16>, vector<8x8xbf16>, vector<8x8xf32> -> vector<8x8xf32>
    %cst_15 = arith.constant 0.353553385 : f32
    %40 = vector.broadcast %cst_15 : f32 to vector<8x8xf32>
    %41 = arith.mulf %39, %40 : vector<8x8xf32>
    %42 = vector.broadcast %3 : vector<1x8xf32> to vector<8x8xf32>
    %43 = arith.addf %41, %42 : vector<8x8xf32>
    %cst_16 = arith.constant dense<0xFF800000> : vector<8xf32>
    %44 = vector.multi_reduction <maximumf>, %43, %cst_16 [1] : vector<8x8xf32> to vector<8xf32>
    %45 = vector.shape_cast %44 : vector<8xf32> to vector<8x1xf32>
    %46 = vector.broadcast %45 : vector<8x1xf32> to vector<8x8xf32>
    %47 = arith.subf %43, %46 : vector<8x8xf32>
    %48 = math.exp %47 : vector<8x8xf32>
    %cst_17 = arith.constant dense<0.000000e+00> : vector<8xf32>
    %49 = vector.multi_reduction <add>, %48, %cst_17 [1] : vector<8x8xf32> to vector<8xf32>
    %50 = vector.shape_cast %49 : vector<8xf32> to vector<8x1xf32>
    %51 = vector.broadcast %50 : vector<8x1xf32> to vector<8x8xf32>
    %52 = arith.divf %48, %51 : vector<8x8xf32>
    %53 = arith.truncf %52 : vector<8x8xf32> to vector<8x8xbf16>
    %cst_18 = arith.constant dense<0.000000e+00> : vector<8x8xf32>
    %54 = tpu.matmul %53, %38, %cst_18 {dimension_numbers = #tpu.dot_dimension_numbers<[1], [0], [0], [1], [0, 0, 1, 1], [], []>} : vector<8x8xbf16>, vector<8x8xbf16>, vector<8x8xf32> -> vector<8x8xf32>
    %55 = vector.extract_strided_slice %10 {offsets = [0, 16], sizes = [8, 8], strides = [1, 1]} : vector<8x96xf32> to vector<8x8xf32>
    %56 = arith.truncf %55 : vector<8x8xf32> to vector<8x8xbf16>
    %57 = vector.extract_strided_slice %10 {offsets = [0, 48], sizes = [8, 8], strides = [1, 1]} : vector<8x96xf32> to vector<8x8xf32>
    %58 = arith.truncf %57 : vector<8x8xf32> to vector<8x8xbf16>
    %59 = vector.extract_strided_slice %10 {offsets = [0, 80], sizes = [8, 8], strides = [1, 1]} : vector<8x96xf32> to vector<8x8xf32>
    %60 = arith.truncf %59 : vector<8x8xf32> to vector<8x8xbf16>
    %cst_19 = arith.constant dense<0.000000e+00> : vector<8x8xf32>
    %61 = tpu.matmul %56, %58, %cst_19 {dimension_numbers = #tpu.dot_dimension_numbers<[1], [1], [0], [0], [0, 0, 1, 0], [], []>} : vector<8x8xbf16>, vector<8x8xbf16>, vector<8x8xf32> -> vector<8x8xf32>
    %cst_20 = arith.constant 0.353553385 : f32
    %62 = vector.broadcast %cst_20 : f32 to vector<8x8xf32>
    %63 = arith.mulf %61, %62 : vector<8x8xf32>
    %64 = vector.broadcast %3 : vector<1x8xf32> to vector<8x8xf32>
    %65 = arith.addf %63, %64 : vector<8x8xf32>
    %cst_21 = arith.constant dense<0xFF800000> : vector<8xf32>
    %66 = vector.multi_reduction <maximumf>, %65, %cst_21 [1] : vector<8x8xf32> to vector<8xf32>
    %67 = vector.shape_cast %66 : vector<8xf32> to vector<8x1xf32>
    %68 = vector.broadcast %67 : vector<8x1xf32> to vector<8x8xf32>
    %69 = arith.subf %65, %68 : vector<8x8xf32>
    %70 = math.exp %69 : vector<8x8xf32>
    %cst_22 = arith.constant dense<0.000000e+00> : vector<8xf32>
    %71 = vector.multi_reduction <add>, %70, %cst_22 [1] : vector<8x8xf32> to vector<8xf32>
    %72 = vector.shape_cast %71 : vector<8xf32> to vector<8x1xf32>
    %73 = vector.broadcast %72 : vector<8x1xf32> to vector<8x8xf32>
    %74 = arith.divf %70, %73 : vector<8x8xf32>
    %75 = arith.truncf %74 : vector<8x8xf32> to vector<8x8xbf16>
    %cst_23 = arith.constant dense<0.000000e+00> : vector<8x8xf32>
    %76 = tpu.matmul %75, %60, %cst_23 {dimension_numbers = #tpu.dot_dimension_numbers<[1], [0], [0], [1], [0, 0, 1, 1], [], []>} : vector<8x8xbf16>, vector<8x8xbf16>, vector<8x8xf32> -> vector<8x8xf32>
    %77 = vector.extract_strided_slice %10 {offsets = [0, 24], sizes = [8, 8], strides = [1, 1]} : vector<8x96xf32> to vector<8x8xf32>
    %78 = arith.truncf %77 : vector<8x8xf32> to vector<8x8xbf16>
    %79 = vector.extract_strided_slice %10 {offsets = [0, 56], sizes = [8, 8], strides = [1, 1]} : vector<8x96xf32> to vector<8x8xf32>
    %80 = arith.truncf %79 : vector<8x8xf32> to vector<8x8xbf16>
    %81 = vector.extract_strided_slice %10 {offsets = [0, 88], sizes = [8, 8], strides = [1, 1]} : vector<8x96xf32> to vector<8x8xf32>
    %82 = arith.truncf %81 : vector<8x8xf32> to vector<8x8xbf16>
    %cst_24 = arith.constant dense<0.000000e+00> : vector<8x8xf32>
    %83 = tpu.matmul %78, %80, %cst_24 {dimension_numbers = #tpu.dot_dimension_numbers<[1], [1], [0], [0], [0, 0, 1, 0], [], []>} : vector<8x8xbf16>, vector<8x8xbf16>, vector<8x8xf32> -> vector<8x8xf32>
    %cst_25 = arith.constant 0.353553385 : f32
    %84 = vector.broadcast %cst_25 : f32 to vector<8x8xf32>
    %85 = arith.mulf %83, %84 : vector<8x8xf32>
    %86 = vector.broadcast %3 : vector<1x8xf32> to vector<8x8xf32>
    %87 = arith.addf %85, %86 : vector<8x8xf32>
    %cst_26 = arith.constant dense<0xFF800000> : vector<8xf32>
    %88 = vector.multi_reduction <maximumf>, %87, %cst_26 [1] : vector<8x8xf32> to vector<8xf32>
    %89 = vector.shape_cast %88 : vector<8xf32> to vector<8x1xf32>
    %90 = vector.broadcast %89 : vector<8x1xf32> to vector<8x8xf32>
    %91 = arith.subf %87, %90 : vector<8x8xf32>
    %92 = math.exp %91 : vector<8x8xf32>
    %cst_27 = arith.constant dense<0.000000e+00> : vector<8xf32>
    %93 = vector.multi_reduction <add>, %92, %cst_27 [1] : vector<8x8xf32> to vector<8xf32>
    %94 = vector.shape_cast %93 : vector<8xf32> to vector<8x1xf32>
    %95 = vector.broadcast %94 : vector<8x1xf32> to vector<8x8xf32>
    %96 = arith.divf %92, %95 : vector<8x8xf32>
    %97 = arith.truncf %96 : vector<8x8xf32> to vector<8x8xbf16>
    %cst_28 = arith.constant dense<0.000000e+00> : vector<8x8xf32>
    %98 = tpu.matmul %97, %82, %cst_28 {dimension_numbers = #tpu.dot_dimension_numbers<[1], [0], [0], [1], [0, 0, 1, 1], [], []>} : vector<8x8xbf16>, vector<8x8xbf16>, vector<8x8xf32> -> vector<8x8xf32>
    %99 = tpu.concatenate %32, %54, %76, %98 in 1 : vector<8x8xf32>, vector<8x8xf32>, vector<8x8xf32>, vector<8x8xf32> -> vector<8x32xf32>
    %100 = arith.truncf %99 : vector<8x32xf32> to vector<8x32xbf16>
    %c0_29 = arith.constant 0 : index
    %c0_30 = arith.constant 0 : index
    %101 = vector.load %arg5[%c0_29, %c0_30] : memref<32x32xf32, #tpu.memory_space<vmem>>, vector<32x32xf32>
    %102 = arith.truncf %101 : vector<32x32xf32> to vector<32x32xbf16>
    %cst_31 = arith.constant dense<0.000000e+00> : vector<8x32xf32>
    %103 = tpu.matmul %100, %102, %cst_31 {dimension_numbers = #tpu.dot_dimension_numbers<[1], [0], [0], [1], [0, 0, 1, 1], [], []>} : vector<8x32xbf16>, vector<32x32xbf16>, vector<8x32xf32> -> vector<8x32xf32>
    %c0_32 = arith.constant 0 : index
    %c0_33 = arith.constant 0 : index
    %104 = vector.load %arg6[%c0_32, %c0_33] : memref<1x32xf32, #tpu.memory_space<vmem>>, vector<1x32xf32>
    %105 = vector.broadcast %104 : vector<1x32xf32> to vector<8x32xf32>
    %106 = arith.addf %103, %105 : vector<8x32xf32>
    %107 = arith.addf %106, %1 : vector<8x32xf32>
    %c0_34 = arith.constant 0 : index
    %c0_35 = arith.constant 0 : index
    %108 = vector.load %arg7[%c0_34, %c0_35] : memref<1x32xf32, #tpu.memory_space<vmem>>, vector<1x32xf32>
    %c0_36 = arith.constant 0 : index
    %c0_37 = arith.constant 0 : index
    %109 = vector.load %arg8[%c0_36, %c0_37] : memref<1x32xf32, #tpu.memory_space<vmem>>, vector<1x32xf32>
    %cst_38 = arith.constant dense<0.000000e+00> : vector<8xf32>
    %110 = vector.multi_reduction <add>, %107, %cst_38 [1] : vector<8x32xf32> to vector<8xf32>
    %111 = vector.shape_cast %110 : vector<8xf32> to vector<8x1xf32>
    %cst_39 = arith.constant 3.200000e+01 : f32
    %112 = vector.broadcast %cst_39 : f32 to vector<8x1xf32>
    %113 = arith.divf %111, %112 : vector<8x1xf32>
    %114 = vector.broadcast %113 : vector<8x1xf32> to vector<8x32xf32>
    %115 = arith.subf %107, %114 : vector<8x32xf32>
    %116 = arith.mulf %115, %115 : vector<8x32xf32>
    %cst_40 = arith.constant dense<0.000000e+00> : vector<8xf32>
    %117 = vector.multi_reduction <add>, %116, %cst_40 [1] : vector<8x32xf32> to vector<8xf32>
    %118 = vector.shape_cast %117 : vector<8xf32> to vector<8x1xf32>
    %cst_41 = arith.constant 3.200000e+01 : f32
    %119 = vector.broadcast %cst_41 : f32 to vector<8x1xf32>
    %120 = arith.divf %118, %119 : vector<8x1xf32>
    %cst_42 = arith.constant 9.99999996E-13 : f32
    %121 = vector.broadcast %cst_42 : f32 to vector<8x1xf32>
    %122 = arith.addf %120, %121 : vector<8x1xf32>
    %123 = math.rsqrt %122 : vector<8x1xf32>
    %124 = vector.broadcast %123 : vector<8x1xf32> to vector<8x32xf32>
    %125 = arith.mulf %115, %124 : vector<8x32xf32>
    %126 = vector.broadcast %108 : vector<1x32xf32> to vector<8x32xf32>
    %127 = arith.mulf %125, %126 : vector<8x32xf32>
    %128 = vector.broadcast %109 : vector<1x32xf32> to vector<8x32xf32>
    %129 = arith.addf %127, %128 : vector<8x32xf32>
    %130 = arith.truncf %129 : vector<8x32xf32> to vector<8x32xbf16>
    %c0_43 = arith.constant 0 : index
    %c0_44 = arith.constant 0 : index
    %131 = vector.load %arg9[%c0_43, %c0_44] : memref<32x64xf32, #tpu.memory_space<vmem>>, vector<32x64xf32>
    %132 = arith.truncf %131 : vector<32x64xf32> to vector<32x64xbf16>
    %cst_45 = arith.constant dense<0.000000e+00> : vector<8x64xf32>
    %133 = tpu.matmul %130, %132, %cst_45 {dimension_numbers = #tpu.dot_dimension_numbers<[1], [0], [0], [1], [0, 0, 1, 1], [], []>} : vector<8x32xbf16>, vector<32x64xbf16>, vector<8x64xf32> -> vector<8x64xf32>
    %c0_46 = arith.constant 0 : index
    %c0_47 = arith.constant 0 : index
    %134 = vector.load %arg10[%c0_46, %c0_47] : memref<1x64xf32, #tpu.memory_space<vmem>>, vector<1x64xf32>
    %135 = vector.broadcast %134 : vector<1x64xf32> to vector<8x64xf32>
    %136 = arith.addf %133, %135 : vector<8x64xf32>
    %cst_48 = arith.constant 5.000000e-01 : f32
    %137 = vector.broadcast %cst_48 : f32 to vector<8x64xf32>
    %138 = arith.mulf %137, %136 : vector<8x64xf32>
    %cst_49 = arith.constant 0.707106769 : f32
    %139 = vector.broadcast %cst_49 : f32 to vector<8x64xf32>
    %140 = arith.mulf %136, %139 : vector<8x64xf32>
    %141 = math.erf %140 : vector<8x64xf32>
    %cst_50 = arith.constant 1.000000e+00 : f32
    %142 = vector.broadcast %cst_50 : f32 to vector<8x64xf32>
    %143 = arith.addf %142, %141 : vector<8x64xf32>
    %144 = arith.mulf %138, %143 : vector<8x64xf32>
    %145 = arith.truncf %144 : vector<8x64xf32> to vector<8x64xbf16>
    %c0_51 = arith.constant 0 : index
    %c0_52 = arith.constant 0 : index
    %146 = vector.load %arg11[%c0_51, %c0_52] : memref<64x32xf32, #tpu.memory_space<vmem>>, vector<64x32xf32>
    %147 = arith.truncf %146 : vector<64x32xf32> to vector<64x32xbf16>
    %cst_53 = arith.constant dense<0.000000e+00> : vector<8x32xf32>
    %148 = tpu.matmul %145, %147, %cst_53 {dimension_numbers = #tpu.dot_dimension_numbers<[1], [0], [0], [1], [0, 0, 1, 1], [], []>} : vector<8x64xbf16>, vector<64x32xbf16>, vector<8x32xf32> -> vector<8x32xf32>
    %c0_54 = arith.constant 0 : index
    %c0_55 = arith.constant 0 : index
    %149 = vector.load %arg12[%c0_54, %c0_55] : memref<1x32xf32, #tpu.memory_space<vmem>>, vector<1x32xf32>
    %150 = vector.broadcast %149 : vector<1x32xf32> to vector<8x32xf32>
    %151 = arith.addf %148, %150 : vector<8x32xf32>
    %152 = arith.addf %151, %129 : vector<8x32xf32>
    %c0_56 = arith.constant 0 : index
    %c0_57 = arith.constant 0 : index
    %153 = vector.load %arg13[%c0_56, %c0_57] : memref<1x32xf32, #tpu.memory_space<vmem>>, vector<1x32xf32>
    %c0_58 = arith.constant 0 : index
    %c0_59 = arith.constant 0 : index
    %154 = vector.load %arg14[%c0_58, %c0_59] : memref<1x32xf32, #tpu.memory_space<vmem>>, vector<1x32xf32>
    %cst_60 = arith.constant dense<0.000000e+00> : vector<8xf32>
    %155 = vector.multi_reduction <add>, %152, %cst_60 [1] : vector<8x32xf32> to vector<8xf32>
    %156 = vector.shape_cast %155 : vector<8xf32> to vector<8x1xf32>
    %cst_61 = arith.constant 3.200000e+01 : f32
    %157 = vector.broadcast %cst_61 : f32 to vector<8x1xf32>
    %158 = arith.divf %156, %157 : vector<8x1xf32>
    %159 = vector.broadcast %158 : vector<8x1xf32> to vector<8x32xf32>
    %160 = arith.subf %152, %159 : vector<8x32xf32>
    %161 = arith.mulf %160, %160 : vector<8x32xf32>
    %cst_62 = arith.constant dense<0.000000e+00> : vector<8xf32>
    %162 = vector.multi_reduction <add>, %161, %cst_62 [1] : vector<8x32xf32> to vector<8xf32>
    %163 = vector.shape_cast %162 : vector<8xf32> to vector<8x1xf32>
    %cst_63 = arith.constant 3.200000e+01 : f32
    %164 = vector.broadcast %cst_63 : f32 to vector<8x1xf32>
    %165 = arith.divf %163, %164 : vector<8x1xf32>
    %cst_64 = arith.constant 9.99999996E-13 : f32
    %166 = vector.broadcast %cst_64 : f32 to vector<8x1xf32>
    %167 = arith.addf %165, %166 : vector<8x1xf32>
    %168 = math.rsqrt %167 : vector<8x1xf32>
    %169 = vector.broadcast %168 : vector<8x1xf32> to vector<8x32xf32>
    %170 = arith.mulf %160, %169 : vector<8x32xf32>
    %171 = vector.broadcast %153 : vector<1x32xf32> to vector<8x32xf32>
    %172 = arith.mulf %170, %171 : vector<8x32xf32>
    %173 = vector.broadcast %154 : vector<1x32xf32> to vector<8x32xf32>
    %174 = arith.addf %172, %173 : vector<8x32xf32>
    %175 = vector.shape_cast %174 : vector<8x32xf32> to vector<1x8x32xf32>
    %c0_65 = arith.constant 0 : index
    %c0_66 = arith.constant 0 : index
    %c0_67 = arith.constant 0 : index
    %176 = vector.load %arg15[%c0_65, %c0_66, %c0_67] : memref<1x8x32xf32, #tpu.memory_space<vmem>>, vector<1x8x32xf32>
    tpu.vector_store %arg15[%c0_65, %c0_66, %c0_67], %175 {strides = array<i32>} : memref<1x8x32xf32, #tpu.memory_space<vmem>>, vector<1x8x32xf32>,
    return
  }
  func.func @transform_0(%arg0: i32) -> (i32, i32, i32) {
    %c0_i32 = arith.constant 0 : i32
    %c0_i32_0 = arith.constant 0 : i32
    %c0_i32_1 = arith.constant 0 : i32
    return %arg0, %c0_i32, %c0_i32_0 : i32, i32, i32
  }
  func.func @transform_1(%arg0: i32) -> (i32, i32, i32) {
    %c0_i32 = arith.constant 0 : i32
    %c0_i32_0 = arith.constant 0 : i32
    %c0_i32_1 = arith.constant 0 : i32
    return %arg0, %c0_i32, %c0_i32_0 : i32, i32, i32
  }
  func.func @transform_2(%arg0: i32) -> (i32, i32) {
    %c0_i32 = arith.constant 0 : i32
    %c0_i32_0 = arith.constant 0 : i32
    %c0_i32_1 = arith.constant 0 : i32
    return %c0_i32, %c0_i32_0 : i32, i32
  }
  func.func @transform_3(%arg0: i32) -> (i32, i32) {
    %c0_i32 = arith.constant 0 : i32
    %c0_i32_0 = arith.constant 0 : i32
    %c0_i32_1 = arith.constant 0 : i32
    return %c0_i32, %c0_i32_0 : i32, i32
  }
  func.func @transform_4(%arg0: i32) -> (i32, i32) {
    %c0_i32 = arith.constant 0 : i32
    %c0_i32_0 = arith.constant 0 : i32
    %c0_i32_1 = arith.constant 0 : i32
    return %c0_i32, %c0_i32_0 : i32, i32
  }
  func.func @transform_5(%arg0: i32) -> (i32, i32) {
    %c0_i32 = arith.constant 0 : i32
    %c0_i32_0 = arith.constant 0 : i32
    %c0_i32_1 = arith.constant 0 : i32
    return %c0_i32, %c0_i32_0 : i32, i32
  }
  func.func @transform_6(%arg0: i32) -> (i32, i32) {
    %c0_i32 = arith.constant 0 : i32
    %c0_i32_0 = arith.constant 0 : i32
    %c0_i32_1 = arith.constant 0 : i32
    return %c0_i32, %c0_i32_0 : i32, i32
  }
  func.func @transform_7(%arg0: i32) -> (i32, i32) {
    %c0_i32 = arith.constant 0 : i32
    %c0_i32_0 = arith.constant 0 : i32
    %c0_i32_1 = arith.constant 0 : i32
    return %c0_i32, %c0_i32_0 : i32, i32
  }
  func.func @transform_8(%arg0: i32) -> (i32, i32) {
    %c0_i32 = arith.constant 0 : i32
    %c0_i32_0 = arith.constant 0 : i32
    %c0_i32_1 = arith.constant 0 : i32
    return %c0_i32, %c0_i32_0 : i32, i32
  }
  func.func @transform_9(%arg0: i32) -> (i32, i32) {
    %c0_i32 = arith.constant 0 : i32
    %c0_i32_0 = arith.constant 0 : i32
    %c0_i32_1 = arith.constant 0 : i32
    return %c0_i32, %c0_i32_0 : i32, i32
  }
  func.func @transform_10(%arg0: i32) -> (i32, i32) {
    %c0_i32 = arith.constant 0 : i32
    %c0_i32_0 = arith.constant 0 : i32
    %c0_i32_1 = arith.constant 0 : i32
    return %c0_i32, %c0_i32_0 : i32, i32
  }
  func.func @transform_11(%arg0: i32) -> (i32, i32) {
    %c0_i32 = arith.constant 0 : i32
    %c0_i32_0 = arith.constant 0 : i32
    %c0_i32_1 = arith.constant 0 : i32
    return %c0_i32, %c0_i32_0 : i32, i32
  }
  func.func @transform_12(%arg0: i32) -> (i32, i32) {
    %c0_i32 = arith.constant 0 : i32
    %c0_i32_0 = arith.constant 0 : i32
    %c0_i32_1 = arith.constant 0 : i32
    return %c0_i32, %c0_i32_0 : i32, i32
  }
  func.func @transform_13(%arg0: i32) -> (i32, i32) {
    %c0_i32 = arith.constant 0 : i32
    %c0_i32_0 = arith.constant 0 : i32
    %c0_i32_1 = arith.constant 0 : i32
    return %c0_i32, %c0_i32_0 : i32, i32
  }
  func.func @transform_14(%arg0: i32) -> (i32, i32, i32) {
    %c0_i32 = arith.constant 0 : i32
    %c0_i32_0 = arith.constant 0 : i32
    %c0_i32_1 = arith.constant 0 : i32
    return %arg0, %c0_i32, %c0_i32_0 : i32, i32, i32
  }
}

module attributes {stable_mosaic.version = 11 : i64} {
  func.func @_fused_layer_kernel(%arg0: i32, %arg1: memref<1x8x32xf32, #tpu.memory_space<vmem>>, %arg2: memref<1x1x8xf32, #tpu.memory_space<vmem>>, %arg3: memref<32x96xf32, #tpu.memory_space<vmem>>, %arg4: memref<1x96xf32, #tpu.memory_space<vmem>>, %arg5: memref<32x32xf32, #tpu.memory_space<vmem>>, %arg6: memref<1x32xf32, #tpu.memory_space<vmem>>, %arg7: memref<1x32xf32, #tpu.memory_space<vmem>>, %arg8: memref<1x32xf32, #tpu.memory_space<vmem>>, %arg9: memref<32x64xf32, #tpu.memory_space<vmem>>, %arg10: memref<1x64xf32, #tpu.memory_space<vmem>>, %arg11: memref<64x32xf32, #tpu.memory_space<vmem>>, %arg12: memref<1x32xf32, #tpu.memory_space<vmem>>, %arg13: memref<1x32xf32, #tpu.memory_space<vmem>>, %arg14: memref<1x32xf32, #tpu.memory_space<vmem>>, %arg15: memref<1x8x32xf32, #tpu.memory_space<vmem>>) attributes {dimension_semantics = [#tpu.dimension_semantics<parallel>], iteration_bounds = array<i64: 2>, scalar_prefetch = 0 : i64, scratch_operands = 0 : i64, tpu.core_type = #tpu.core_type<tc>, window_params = [{transform_indices = @transform_0, window_bounds = array<i64: 1, 8, 32>}, {transform_indices = @transform_1, window_bounds = array<i64: 1, 1, 8>}, {pipeline_mode = #tpu.pipeline_mode<synchronous>, transform_indices = @transform_2, window_bounds = array<i64: 32, 96>}, {pipeline_mode = #tpu.pipeline_mode<synchronous>, transform_indices = @transform_3, window_bounds = array<i64: 1, 96>}, {pipeline_mode = #tpu.pipeline_mode<synchronous>, transform_indices = @transform_4, window_bounds = array<i64: 32, 32>}, {pipeline_mode = #tpu.pipeline_mode<synchronous>, transform_indices = @transform_5, window_bounds = array<i64: 1, 32>}, {pipeline_mode = #tpu.pipeline_mode<synchronous>, transform_indices = @transform_6, window_bounds = array<i64: 1, 32>}, {pipeline_mode = #tpu.pipeline_mode<synchronous>, transform_indices = @transform_7, window_bounds = array<i64: 1, 32>}, {pipeline_mode = #tpu.pipeline_mode<synchronous>, transform_indices = @transform_8, window_bounds = array<i64: 32, 64>}, {pipeline_mode = #tpu.pipeline_mode<synchronous>, transform_indices = @transform_9, window_bounds = array<i64: 1, 64>}, {pipeline_mode = #tpu.pipeline_mode<synchronous>, transform_indices = @transform_10, window_bounds = array<i64: 64, 32>}, {pipeline_mode = #tpu.pipeline_mode<synchronous>, transform_indices = @transform_11, window_bounds = array<i64: 1, 32>}, {pipeline_mode = #tpu.pipeline_mode<synchronous>, transform_indices = @transform_12, window_bounds = array<i64: 1, 32>}, {pipeline_mode = #tpu.pipeline_mode<synchronous>, transform_indices = @transform_13, window_bounds = array<i64: 1, 32>}, {transform_indices = @transform_14, window_bounds = array<i64: 1, 8, 32>}]} {
    %c0 = arith.constant 0 : index
    %c0_0 = arith.constant 0 : index
    %c0_1 = arith.constant 0 : index
    %0 = vector.load %arg1[%c0, %c0_0, %c0_1] : memref<1x8x32xf32, #tpu.memory_space<vmem>>, vector<1x8x32xf32>
    %1 = vector.shape_cast %0 : vector<1x8x32xf32> to vector<8x32xf32>
    %c0_2 = arith.constant 0 : index
    %c0_3 = arith.constant 0 : index
    %c0_4 = arith.constant 0 : index
    %2 = vector.load %arg2[%c0_2, %c0_3, %c0_4] : memref<1x1x8xf32, #tpu.memory_space<vmem>>, vector<1x1x8xf32>
    %3 = vector.shape_cast %2 : vector<1x1x8xf32> to vector<1x8xf32>
    %4 = arith.truncf %1 : vector<8x32xf32> to vector<8x32xbf16>
    %c0_5 = arith.constant 0 : index
    %c0_6 = arith.constant 0 : index
    %5 = vector.load %arg3[%c0_5, %c0_6] : memref<32x96xf32, #tpu.memory_space<vmem>>, vector<32x96xf32>
    %6 = arith.truncf %5 : vector<32x96xf32> to vector<32x96xbf16>
    %cst = arith.constant dense<0.000000e+00> : vector<8x96xf32>
    %7 = tpu.matmul %4, %6, %cst {dimension_numbers = #tpu.dot_dimension_numbers<[1], [0], [0], [1], [0, 0, 1, 1], [], []>} : vector<8x32xbf16>, vector<32x96xbf16>, vector<8x96xf32> -> vector<8x96xf32>
    %c0_7 = arith.constant 0 : index
    %c0_8 = arith.constant 0 : index
    %8 = vector.load %arg4[%c0_7, %c0_8] : memref<1x96xf32, #tpu.memory_space<vmem>>, vector<1x96xf32>
    %9 = vector.broadcast %8 : vector<1x96xf32> to vector<8x96xf32>
    %10 = arith.addf %7, %9 : vector<8x96xf32>
    %11 = vector.extract_strided_slice %10 {offsets = [0, 0], sizes = [8, 8], strides = [1, 1]} : vector<8x96xf32> to vector<8x8xf32>
    %12 = arith.truncf %11 : vector<8x8xf32> to vector<8x8xbf16>
    %13 = vector.extract_strided_slice %10 {offsets = [0, 32], sizes = [8, 8], strides = [1, 1]} : vector<8x96xf32> to vector<8x8xf32>
    %14 = arith.truncf %13 : vector<8x8xf32> to vector<8x8xbf16>
    %15 = vector.extract_strided_slice %10 {offsets = [0, 64], sizes = [8, 8], strides = [1, 1]} : vector<8x96xf32> to vector<8x8xf32>
    %16 = arith.truncf %15 : vector<8x8xf32> to vector<8x8xbf16>
    %cst_9 = arith.constant dense<0.000000e+00> : vector<8x8xf32>
    %17 = tpu.matmul %12, %14, %cst_9 {dimension_numbers = #tpu.dot_dimension_numbers<[1], [1], [0], [0], [0, 0, 1, 0], [], []>} : vector<8x8xbf16>, vector<8x8xbf16>, vector<8x8xf32> -> vector<8x8xf32>
    %cst_10 = arith.constant 0.353553385 : f32
    %18 = vector.broadcast %cst_10 : f32 to vector<8x8xf32>
    %19 = arith.mulf %17, %18 : vector<8x8xf32>
    %20 = vector.broadcast %3 : vector<1x8xf32> to vector<8x8xf32>
    %21 = arith.addf %19, %20 : vector<8x8xf32>
    %cst_11 = arith.constant dense<0xFF800000> : vector<8xf32>
    %22 = vector.multi_reduction <maximumf>, %21, %cst_11 [1] : vector<8x8xf32> to vector<8xf32>
    %23 = vector.shape_cast %22 : vector<8xf32> to vector<8x1xf32>
    %24 = vector.broadcast %23 : vector<8x1xf32> to vector<8x8xf32>
    %25 = arith.subf %21, %24 : vector<8x8xf32>
    %26 = math.exp %25 : vector<8x8xf32>
    %cst_12 = arith.constant dense<0.000000e+00> : vector<8xf32>
    %27 = vector.multi_reduction <add>, %26, %cst_12 [1] : vector<8x8xf32> to vector<8xf32>
    %28 = vector.shape_cast %27 : vector<8xf32> to vector<8x1xf32>
    %29 = vector.broadcast %28 : vector<8x1xf32> to vector<8x8xf32>
    %30 = arith.divf %26, %29 : vector<8x8xf32>
    %31 = arith.truncf %30 : vector<8x8xf32> to vector<8x8xbf16>
    %cst_13 = arith.constant dense<0.000000e+00> : vector<8x8xf32>
    %32 = tpu.matmul %31, %16, %cst_13 {dimension_numbers = #tpu.dot_dimension_numbers<[1], [0], [0], [1], [0, 0, 1, 1], [], []>} : vector<8x8xbf16>, vector<8x8xbf16>, vector<8x8xf32> -> vector<8x8xf32>
    %33 = vector.extract_strided_slice %10 {offsets = [0, 8], sizes = [8, 8], strides = [1, 1]} : vector<8x96xf32> to vector<8x8xf32>
    %34 = arith.truncf %33 : vector<8x8xf32> to vector<8x8xbf16>
    %35 = vector.extract_strided_slice %10 {offsets = [0, 40], sizes = [8, 8], strides = [1, 1]} : vector<8x96xf32> to vector<8x8xf32>
    %36 = arith.truncf %35 : vector<8x8xf32> to vector<8x8xbf16>
    %37 = vector.extract_strided_slice %10 {offsets = [0, 72], sizes = [8, 8], strides = [1, 1]} : vector<8x96xf32> to vector<8x8xf32>
    %38 = arith.truncf %37 : vector<8x8xf32> to vector<8x8xbf16>
    %cst_14 = arith.constant dense<0.000000e+00> : vector<8x8xf32>
    %39 = tpu.matmul %34, %36, %cst_14 {dimension_numbers = #tpu.dot_dimension_numbers<[1], [1], [0], [0], [0, 0, 1, 0], [], []>} : vector<8x8xbf16>, vector<8x8xbf16>, vector<8x8xf32> -> vector<8x8xf32>
    %cst_15 = arith.constant 0.353553385 : f32
    %40 = vector.broadcast %cst_15 : f32 to vector<8x8xf32>
    %41 = arith.mulf %39, %40 : vector<8x8xf32>
    %42 = vector.broadcast %3 : vector<1x8xf32> to vector<8x8xf32>
    %43 = arith.addf %41, %42 : vector<8x8xf32>
    %cst_16 = arith.constant dense<0xFF800000> : vector<8xf32>
    %44 = vector.multi_reduction <maximumf>, %43, %cst_16 [1] : vector<8x8xf32> to vector<8xf32>
    %45 = vector.shape_cast %44 : vector<8xf32> to vector<8x1xf32>
    %46 = vector.broadcast %45 : vector<8x1xf32> to vector<8x8xf32>
    %47 = arith.subf %43, %46 : vector<8x8xf32>
    %48 = math.exp %47 : vector<8x8xf32>
    %cst_17 = arith.constant dense<0.000000e+00> : vector<8xf32>
    %49 = vector.multi_reduction <add>, %48, %cst_17 [1] : vector<8x8xf32> to vector<8xf32>
    %50 = vector.shape_cast %49 : vector<8xf32> to vector<8x1xf32>
    %51 = vector.broadcast %50 : vector<8x1xf32> to vector<8x8xf32>
    %52 = arith.divf %48, %51 : vector<8x8xf32>
    %53 = arith.truncf %52 : vector<8x8xf32> to vector<8x8xbf16>
    %cst_18 = arith.constant dense<0.000000e+00> : vector<8x8xf32>
    %54 = tpu.matmul %53, %38, %cst_18 {dimension_numbers = #tpu.dot_dimension_numbers<[1], [0], [0], [1], [0, 0, 1, 1], [], []>} : vector<8x8xbf16>, vector<8x8xbf16>, vector<8x8xf32> -> vector<8x8xf32>
    %55 = vector.extract_strided_slice %10 {offsets = [0, 16], sizes = [8, 8], strides = [1, 1]} : vector<8x96xf32> to vector<8x8xf32>
    %56 = arith.truncf %55 : vector<8x8xf32> to vector<8x8xbf16>
    %57 = vector.extract_strided_slice %10 {offsets = [0, 48], sizes = [8, 8], strides = [1, 1]} : vector<8x96xf32> to vector<8x8xf32>
    %58 = arith.truncf %57 : vector<8x8xf32> to vector<8x8xbf16>
    %59 = vector.extract_strided_slice %10 {offsets = [0, 80], sizes = [8, 8], strides = [1, 1]} : vector<8x96xf32> to vector<8x8xf32>
    %60 = arith.truncf %59 : vector<8x8xf32> to vector<8x8xbf16>
    %cst_19 = arith.constant dense<0.000000e+00> : vector<8x8xf32>
    %61 = tpu.matmul %56, %58, %cst_19 {dimension_numbers = #tpu.dot_dimension_numbers<[1], [1], [0], [0], [0, 0, 1, 0], [], []>} : vector<8x8xbf16>, vector<8x8xbf16>, vector<8x8xf32> -> vector<8x8xf32>
    %cst_20 = arith.constant 0.353553385 : f32
    %62 = vector.broadcast %cst_20 : f32 to vector<8x8xf32>
    %63 = arith.mulf %61, %62 : vector<8x8xf32>
    %64 = vector.broadcast %3 : vector<1x8xf32> to vector<8x8xf32>
    %65 = arith.addf %63, %64 : vector<8x8xf32>
    %cst_21 = arith.constant dense<0xFF800000> : vector<8xf32>
    %66 = vector.multi_reduction <maximumf>, %65, %cst_21 [1] : vector<8x8xf32> to vector<8xf32>
    %67 = vector.shape_cast %66 : vector<8xf32> to vector<8x1xf32>
    %68 = vector.broadcast %67 : vector<8x1xf32> to vector<8x8xf32>
    %69 = arith.subf %65, %68 : vector<8x8xf32>
    %70 = math.exp %69 : vector<8x8xf32>
    %cst_22 = arith.constant dense<0.000000e+00> : vector<8xf32>
    %71 = vector.multi_reduction <add>, %70, %cst_22 [1] : vector<8x8xf32> to vector<8xf32>
    %72 = vector.shape_cast %71 : vector<8xf32> to vector<8x1xf32>
    %73 = vector.broadcast %72 : vector<8x1xf32> to vector<8x8xf32>
    %74 = arith.divf %70, %73 : vector<8x8xf32>
    %75 = arith.truncf %74 : vector<8x8xf32> to vector<8x8xbf16>
    %cst_23 = arith.constant dense<0.000000e+00> : vector<8x8xf32>
    %76 = tpu.matmul %75, %60, %cst_23 {dimension_numbers = #tpu.dot_dimension_numbers<[1], [0], [0], [1], [0, 0, 1, 1], [], []>} : vector<8x8xbf16>, vector<8x8xbf16>, vector<8x8xf32> -> vector<8x8xf32>
    %77 = vector.extract_strided_slice %10 {offsets = [0, 24], sizes = [8, 8], strides = [1, 1]} : vector<8x96xf32> to vector<8x8xf32>
    %78 = arith.truncf %77 : vector<8x8xf32> to vector<8x8xbf16>
    %79 = vector.extract_strided_slice %10 {offsets = [0, 56], sizes = [8, 8], strides = [1, 1]} : vector<8x96xf32> to vector<8x8xf32>
    %80 = arith.truncf %79 : vector<8x8xf32> to vector<8x8xbf16>
    %81 = vector.extract_strided_slice %10 {offsets = [0, 88], sizes = [8, 8], strides = [1, 1]} : vector<8x96xf32> to vector<8x8xf32>
    %82 = arith.truncf %81 : vector<8x8xf32> to vector<8x8xbf16>
    %cst_24 = arith.constant dense<0.000000e+00> : vector<8x8xf32>
    %83 = tpu.matmul %78, %80, %cst_24 {dimension_numbers = #tpu.dot_dimension_numbers<[1], [1], [0], [0], [0, 0, 1, 0], [], []>} : vector<8x8xbf16>, vector<8x8xbf16>, vector<8x8xf32> -> vector<8x8xf32>
    %cst_25 = arith.constant 0.353553385 : f32
    %84 = vector.broadcast %cst_25 : f32 to vector<8x8xf32>
    %85 = arith.mulf %83, %84 : vector<8x8xf32>
    %86 = vector.broadcast %3 : vector<1x8xf32> to vector<8x8xf32>
    %87 = arith.addf %85, %86 : vector<8x8xf32>
    %cst_26 = arith.constant dense<0xFF800000> : vector<8xf32>
    %88 = vector.multi_reduction <maximumf>, %87, %cst_26 [1] : vector<8x8xf32> to vector<8xf32>
    %89 = vector.shape_cast %88 : vector<8xf32> to vector<8x1xf32>
    %90 = vector.broadcast %89 : vector<8x1xf32> to vector<8x8xf32>
    %91 = arith.subf %87, %90 : vector<8x8xf32>
    %92 = math.exp %91 : vector<8x8xf32>
    %cst_27 = arith.constant dense<0.000000e+00> : vector<8xf32>
    %93 = vector.multi_reduction <add>, %92, %cst_27 [1] : vector<8x8xf32> to vector<8xf32>
    %94 = vector.shape_cast %93 : vector<8xf32> to vector<8x1xf32>
    %95 = vector.broadcast %94 : vector<8x1xf32> to vector<8x8xf32>
    %96 = arith.divf %92, %95 : vector<8x8xf32>
    %97 = arith.truncf %96 : vector<8x8xf32> to vector<8x8xbf16>
    %cst_28 = arith.constant dense<0.000000e+00> : vector<8x8xf32>
    %98 = tpu.matmul %97, %82, %cst_28 {dimension_numbers = #tpu.dot_dimension_numbers<[1], [0], [0], [1], [0, 0, 1, 1], [], []>} : vector<8x8xbf16>, vector<8x8xbf16>, vector<8x8xf32> -> vector<8x8xf32>
    %99 = tpu.concatenate %32, %54, %76, %98 in 1 : vector<8x8xf32>, vector<8x8xf32>, vector<8x8xf32>, vector<8x8xf32> -> vector<8x32xf32>
    %100 = arith.truncf %99 : vector<8x32xf32> to vector<8x32xbf16>
    %c0_29 = arith.constant 0 : index
    %c0_30 = arith.constant 0 : index
    %101 = vector.load %arg5[%c0_29, %c0_30] : memref<32x32xf32, #tpu.memory_space<vmem>>, vector<32x32xf32>
    %102 = arith.truncf %101 : vector<32x32xf32> to vector<32x32xbf16>
    %cst_31 = arith.constant dense<0.000000e+00> : vector<8x32xf32>
    %103 = tpu.matmul %100, %102, %cst_31 {dimension_numbers = #tpu.dot_dimension_numbers<[1], [0], [0], [1], [0, 0, 1, 1], [], []>} : vector<8x32xbf16>, vector<32x32xbf16>, vector<8x32xf32> -> vector<8x32xf32>
    %c0_32 = arith.constant 0 : index
    %c0_33 = arith.constant 0 : index
    %104 = vector.load %arg6[%c0_32, %c0_33] : memref<1x32xf32, #tpu.memory_space<vmem>>, vector<1x32xf32>
    %105 = vector.broadcast %104 : vector<1x32xf32> to vector<8x32xf32>
    %106 = arith.addf %103, %105 : vector<8x32xf32>
    %107 = arith.addf %106, %1 : vector<8x32xf32>
    %108 = arith.truncf %107 : vector<8x32xf32> to vector<8x32xbf16>
    %c0_34 = arith.constant 0 : index
    %c0_35 = arith.constant 0 : index
    %109 = vector.load %arg9[%c0_34, %c0_35] : memref<32x64xf32, #tpu.memory_space<vmem>>, vector<32x64xf32>
    %110 = arith.truncf %109 : vector<32x64xf32> to vector<32x64xbf16>
    %cst_36 = arith.constant dense<0.000000e+00> : vector<8x64xf32>
    %111 = tpu.matmul %108, %110, %cst_36 {dimension_numbers = #tpu.dot_dimension_numbers<[1], [0], [0], [1], [0, 0, 1, 1], [], []>} : vector<8x32xbf16>, vector<32x64xbf16>, vector<8x64xf32> -> vector<8x64xf32>
    %c0_37 = arith.constant 0 : index
    %c0_38 = arith.constant 0 : index
    %112 = vector.load %arg10[%c0_37, %c0_38] : memref<1x64xf32, #tpu.memory_space<vmem>>, vector<1x64xf32>
    %113 = vector.broadcast %112 : vector<1x64xf32> to vector<8x64xf32>
    %114 = arith.addf %111, %113 : vector<8x64xf32>
    %cst_39 = arith.constant 5.000000e-01 : f32
    %115 = vector.broadcast %cst_39 : f32 to vector<8x64xf32>
    %116 = arith.mulf %115, %114 : vector<8x64xf32>
    %cst_40 = arith.constant 0.707106769 : f32
    %117 = vector.broadcast %cst_40 : f32 to vector<8x64xf32>
    %118 = arith.mulf %114, %117 : vector<8x64xf32>
    %119 = math.erf %118 : vector<8x64xf32>
    %cst_41 = arith.constant 1.000000e+00 : f32
    %120 = vector.broadcast %cst_41 : f32 to vector<8x64xf32>
    %121 = arith.addf %120, %119 : vector<8x64xf32>
    %122 = arith.mulf %116, %121 : vector<8x64xf32>
    %123 = arith.truncf %122 : vector<8x64xf32> to vector<8x64xbf16>
    %c0_42 = arith.constant 0 : index
    %c0_43 = arith.constant 0 : index
    %124 = vector.load %arg11[%c0_42, %c0_43] : memref<64x32xf32, #tpu.memory_space<vmem>>, vector<64x32xf32>
    %125 = arith.truncf %124 : vector<64x32xf32> to vector<64x32xbf16>
    %cst_44 = arith.constant dense<0.000000e+00> : vector<8x32xf32>
    %126 = tpu.matmul %123, %125, %cst_44 {dimension_numbers = #tpu.dot_dimension_numbers<[1], [0], [0], [1], [0, 0, 1, 1], [], []>} : vector<8x64xbf16>, vector<64x32xbf16>, vector<8x32xf32> -> vector<8x32xf32>
    %c0_45 = arith.constant 0 : index
    %c0_46 = arith.constant 0 : index
    %127 = vector.load %arg12[%c0_45, %c0_46] : memref<1x32xf32, #tpu.memory_space<vmem>>, vector<1x32xf32>
    %128 = vector.broadcast %127 : vector<1x32xf32> to vector<8x32xf32>
    %129 = arith.addf %126, %128 : vector<8x32xf32>
    %130 = arith.addf %129, %107 : vector<8x32xf32>
    %c0_47 = arith.constant 0 : index
    %c0_48 = arith.constant 0 : index
    %131 = vector.load %arg13[%c0_47, %c0_48] : memref<1x32xf32, #tpu.memory_space<vmem>>, vector<1x32xf32>
    %c0_49 = arith.constant 0 : index
    %c0_50 = arith.constant 0 : index
    %132 = vector.load %arg14[%c0_49, %c0_50] : memref<1x32xf32, #tpu.memory_space<vmem>>, vector<1x32xf32>
    %cst_51 = arith.constant dense<0.000000e+00> : vector<8xf32>
    %133 = vector.multi_reduction <add>, %130, %cst_51 [1] : vector<8x32xf32> to vector<8xf32>
    %134 = vector.shape_cast %133 : vector<8xf32> to vector<8x1xf32>
    %cst_52 = arith.constant 3.200000e+01 : f32
    %135 = vector.broadcast %cst_52 : f32 to vector<8x1xf32>
    %136 = arith.divf %134, %135 : vector<8x1xf32>
    %137 = vector.broadcast %136 : vector<8x1xf32> to vector<8x32xf32>
    %138 = arith.subf %130, %137 : vector<8x32xf32>
    %139 = arith.mulf %138, %138 : vector<8x32xf32>
    %cst_53 = arith.constant dense<0.000000e+00> : vector<8xf32>
    %140 = vector.multi_reduction <add>, %139, %cst_53 [1] : vector<8x32xf32> to vector<8xf32>
    %141 = vector.shape_cast %140 : vector<8xf32> to vector<8x1xf32>
    %cst_54 = arith.constant 3.200000e+01 : f32
    %142 = vector.broadcast %cst_54 : f32 to vector<8x1xf32>
    %143 = arith.divf %141, %142 : vector<8x1xf32>
    %cst_55 = arith.constant 9.99999996E-13 : f32
    %144 = vector.broadcast %cst_55 : f32 to vector<8x1xf32>
    %145 = arith.addf %143, %144 : vector<8x1xf32>
    %146 = math.rsqrt %145 : vector<8x1xf32>
    %147 = vector.broadcast %146 : vector<8x1xf32> to vector<8x32xf32>
    %148 = arith.mulf %138, %147 : vector<8x32xf32>
    %149 = vector.broadcast %131 : vector<1x32xf32> to vector<8x32xf32>
    %150 = arith.mulf %148, %149 : vector<8x32xf32>
    %151 = vector.broadcast %132 : vector<1x32xf32> to vector<8x32xf32>
    %152 = arith.addf %150, %151 : vector<8x32xf32>
    %153 = vector.shape_cast %152 : vector<8x32xf32> to vector<1x8x32xf32>
    %c0_56 = arith.constant 0 : index
    %c0_57 = arith.constant 0 : index
    %c0_58 = arith.constant 0 : index
    %154 = vector.load %arg15[%c0_56, %c0_57, %c0_58] : memref<1x8x32xf32, #tpu.memory_space<vmem>>, vector<1x8x32xf32>
    tpu.vector_store %arg15[%c0_56, %c0_57, %c0_58], %153 {strides = array<i32>} : memref<1x8x32xf32, #tpu.memory_space<vmem>>, vector<1x8x32xf32>,
    return
  }
  func.func @transform_0(%arg0: i32) -> (i32, i32, i32) {
    %c0_i32 = arith.constant 0 : i32
    %c0_i32_0 = arith.constant 0 : i32
    %c0_i32_1 = arith.constant 0 : i32
    return %arg0, %c0_i32, %c0_i32_0 : i32, i32, i32
  }
  func.func @transform_1(%arg0: i32) -> (i32, i32, i32) {
    %c0_i32 = arith.constant 0 : i32
    %c0_i32_0 = arith.constant 0 : i32
    %c0_i32_1 = arith.constant 0 : i32
    return %arg0, %c0_i32, %c0_i32_0 : i32, i32, i32
  }
  func.func @transform_2(%arg0: i32) -> (i32, i32) {
    %c0_i32 = arith.constant 0 : i32
    %c0_i32_0 = arith.constant 0 : i32
    %c0_i32_1 = arith.constant 0 : i32
    return %c0_i32, %c0_i32_0 : i32, i32
  }
  func.func @transform_3(%arg0: i32) -> (i32, i32) {
    %c0_i32 = arith.constant 0 : i32
    %c0_i32_0 = arith.constant 0 : i32
    %c0_i32_1 = arith.constant 0 : i32
    return %c0_i32, %c0_i32_0 : i32, i32
  }
  func.func @transform_4(%arg0: i32) -> (i32, i32) {
    %c0_i32 = arith.constant 0 : i32
    %c0_i32_0 = arith.constant 0 : i32
    %c0_i32_1 = arith.constant 0 : i32
    return %c0_i32, %c0_i32_0 : i32, i32
  }
  func.func @transform_5(%arg0: i32) -> (i32, i32) {
    %c0_i32 = arith.constant 0 : i32
    %c0_i32_0 = arith.constant 0 : i32
    %c0_i32_1 = arith.constant 0 : i32
    return %c0_i32, %c0_i32_0 : i32, i32
  }
  func.func @transform_6(%arg0: i32) -> (i32, i32) {
    %c0_i32 = arith.constant 0 : i32
    %c0_i32_0 = arith.constant 0 : i32
    %c0_i32_1 = arith.constant 0 : i32
    return %c0_i32, %c0_i32_0 : i32, i32
  }
  func.func @transform_7(%arg0: i32) -> (i32, i32) {
    %c0_i32 = arith.constant 0 : i32
    %c0_i32_0 = arith.constant 0 : i32
    %c0_i32_1 = arith.constant 0 : i32
    return %c0_i32, %c0_i32_0 : i32, i32
  }
  func.func @transform_8(%arg0: i32) -> (i32, i32) {
    %c0_i32 = arith.constant 0 : i32
    %c0_i32_0 = arith.constant 0 : i32
    %c0_i32_1 = arith.constant 0 : i32
    return %c0_i32, %c0_i32_0 : i32, i32
  }
  func.func @transform_9(%arg0: i32) -> (i32, i32) {
    %c0_i32 = arith.constant 0 : i32
    %c0_i32_0 = arith.constant 0 : i32
    %c0_i32_1 = arith.constant 0 : i32
    return %c0_i32, %c0_i32_0 : i32, i32
  }
  func.func @transform_10(%arg0: i32) -> (i32, i32) {
    %c0_i32 = arith.constant 0 : i32
    %c0_i32_0 = arith.constant 0 : i32
    %c0_i32_1 = arith.constant 0 : i32
    return %c0_i32, %c0_i32_0 : i32, i32
  }
  func.func @transform_11(%arg0: i32) -> (i32, i32) {
    %c0_i32 = arith.constant 0 : i32
    %c0_i32_0 = arith.constant 0 : i32
    %c0_i32_1 = arith.constant 0 : i32
    return %c0_i32, %c0_i32_0 : i32, i32
  }
  func.func @transform_12(%arg0: i32) -> (i32, i32) {
    %c0_i32 = arith.constant 0 : i32
    %c0_i32_0 = arith.constant 0 : i32
    %c0_i32_1 = arith.constant 0 : i32
    return %c0_i32, %c0_i32_0 : i32, i32
  }
  func.func @transform_13(%arg0: i32) -> (i32, i32) {
    %c0_i32 = arith.constant 0 : i32
    %c0_i32_0 = arith.constant 0 : i32
    %c0_i32_1 = arith.constant 0 : i32
    return %c0_i32, %c0_i32_0 : i32, i32
  }
  func.func @transform_14(%arg0: i32) -> (i32, i32, i32) {
    %c0_i32 = arith.constant 0 : i32
    %c0_i32_0 = arith.constant 0 : i32
    %c0_i32_1 = arith.constant 0 : i32
    return %arg0, %c0_i32, %c0_i32_0 : i32, i32, i32
  }
}

</mosaic_0001>

<llo_original>
// kernel: _lambda_.7
$region0: #{_lambda_.7}
  #allocation0 [shape = 'u32[]', space=smem, size = 0x4, offset = 0x4, fixed_abs, tag = 'smem constant byte address 0x4 - core index']
  #allocation1 [shape = 'u32[144,128]{1,0:T(1,128)}', space=vmem, size = 0x12000, scoped, tag = 'internal scratch']
  %s0 = inlined_call_operand.vmem [shape: f32[16,32], index: 0, kind: input, shape index: {}]
  %s1 = inlined_call_operand.vmem [shape: f32[1,32], index: 1, kind: input, shape index: {}]
  %s2 = inlined_call_operand.vmem [shape: f32[1,32], index: 2, kind: input, shape index: {}]
  %s3 = inlined_call_operand.vmem [shape: f32[16,32], index: 3, kind: output, shape index: {}]
  %s4 = sld [smem:[#allocation0]]
  $region22: #{_lambda_.7} parent=0
    _
  %s6 = ssub.s32 1, %s4
  %s7 = scalar_select 0, %s6, %s4
  // Predicated region
  $region2: #{_lambda_.7} parent=0 // pred_check
    _
  $region3: #{_lambda_.7} parent=0 // pred_check_branch
    %9 = sbr.rel (0) target = $region5
  $region4: #{_lambda_.7} parent=0 // pred_region
    _
  $region5: #{_lambda_.7} parent=0 // pred_fallthru
    _
  // Predicated region
  $region6: #{_lambda_.7} parent=0 // pred_check
    _
  $region7: #{_lambda_.7} parent=0 // pred_check_branch
    %11 = sbr.rel (0) target = $region9
  $region8: #{_lambda_.7} parent=0 // pred_region
    _
  $region9: #{_lambda_.7} parent=0 // pred_fallthru
    _
  // Predicated region
  $region10: #{_lambda_.7} parent=0 // pred_check
    _
  $region11: #{_lambda_.7} parent=0 // pred_check_branch
    %13 = sbr.rel (0) target = $region13
  $region12: #{_lambda_.7} parent=0 // pred_region
    _
  $region13: #{_lambda_.7} parent=0 // pred_fallthru
    _
  %v14 = vld [vmem:[%s0] sm:$0xff]
  %v15 = vld [vmem:[%s0 + $0x8] sm:$0xff]
  %v16 = vld [vmem:[%s1] sm:$0x1]
  %v17 = vld [vmem:[%s2] sm:$0x1]
  %vm18 = vcmask 261120
  %v19 = vsel %vm18, %v14, 0.0
  %20 = vadd.xlane.f32.xlu0 %v19
  %v21 = vpop.xlane.xlu0 %20
  %v22 = vsel %vm18, %v15, 0.0
  %23 = vadd.xlane.f32.xlu0 %v22
  %v24 = vpop.xlane.xlu0 %23
  %v25 = vrcp.pop 32.0
  %v26 = vmul.f32 %v21, %v25
  %v27 = vmul.f32 %v24, %v25
  %v28 = vsub.f32 %v14, %v26
  %v29 = vsub.f32 %v15, %v27
  %v30 = vmul.f32 %v28, %v28
  %v31 = vmul.f32 %v29, %v29
  %v32 = vsel %vm18, %v30, 0.0
  %33 = vadd.xlane.f32.xlu0 %v32
  %v34 = vpop.xlane.xlu0 %33
  %v35 = vsel %vm18, %v31, 0.0
  %36 = vadd.xlane.f32.xlu0 %v35
  %v37 = vpop.xlane.xlu0 %36
  %v38 = vmul.f32 %v34, %v25
  %v39 = vmul.f32 %v37, %v25
  %v40 = vadd.f32 %v38, 1e-12
  %v41 = vadd.f32 %v39, 1e-12
  %v42 = vrsqrt.pop %v40
  %v43 = vrsqrt.pop %v41
  %v44 = vmul.f32 %v28, %v42
  %v45 = vmul.f32 %v29, %v43
  %v47 = vlaneseq
  %v48 = vshrl.u32 %v47, 7
  %v49 = vsub.s32 0, %v48
  %v50 = vrot.slane %v16, %v49
  %v52 = vmul.f32 %v44, %v50
  %v53 = vmul.f32 %v45, %v50
  %v55 = vlaneseq
  %v56 = vshrl.u32 %v55, 7
  %v57 = vsub.s32 0, %v56
  %v58 = vrot.slane %v17, %v57
  %v60 = vadd.f32 %v52, %v58
  %v61 = vadd.f32 %v53, %v58
  %62 = vst.msk [vmem:[%s3] sm:$0xff] %vm18, %v60
  %63 = vst.msk [vmem:[%s3 + $0x8] sm:$0xff] %vm18, %v61
  // Predicated region
  $region14: #{_lambda_.7} parent=0 // pred_check
    _
  $region15: #{_lambda_.7} parent=0 // pred_check_branch
    %65 = sbr.rel (0) target = $region17
  $region16: #{_lambda_.7} parent=0 // pred_region
    _
  $region17: #{_lambda_.7} parent=0 // pred_fallthru
    _
  // Predicated region
  $region18: #{_lambda_.7} parent=0 // pred_check
    _
  $region19: #{_lambda_.7} parent=0 // pred_check_branch
    %67 = sbr.rel (0) target = $region21
  $region20: #{_lambda_.7} parent=0 // pred_region
    _
  $region21: #{_lambda_.7} parent=0 // pred_fallthru
    _

// kernel: _lambda_.8
$region0: #{_lambda_.8}
  #allocation0 [shape = 'u32[]', space=smem, size = 0x4, offset = 0x4, fixed_abs, tag = 'smem constant byte address 0x4 - core index']
  #allocation1 [shape = 'u32[144,128]{1,0:T(1,128)}', space=vmem, size = 0x12000, scoped, tag = 'internal scratch']
  %s0 = inlined_call_operand.vmem [shape: f32[2,8,32], index: 0, kind: input, shape index: {}]
  %s1 = inlined_call_operand.vmem [shape: f32[2,1,8], index: 1, kind: input, shape index: {}]
  %s2 = inlined_call_operand.vmem [shape: f32[32,96], index: 2, kind: input, shape index: {}]
  %s3 = inlined_call_operand.vmem [shape: f32[1,96], index: 3, kind: input, shape index: {}]
  %s4 = inlined_call_operand.vmem [shape: f32[32,32], index: 4, kind: input, shape index: {}]
  %s5 = inlined_call_operand.vmem [shape: f32[1,32], index: 5, kind: input, shape index: {}]
  %s6 = inlined_call_operand.vmem [shape: f32[1,32], index: 6, kind: input, shape index: {}]
  %s7 = inlined_call_operand.vmem [shape: f32[1,32], index: 7, kind: input, shape index: {}]
  %s8 = inlined_call_operand.vmem [shape: f32[32,64], index: 8, kind: input, shape index: {}]
  %s9 = inlined_call_operand.vmem [shape: f32[1,64], index: 9, kind: input, shape index: {}]
  %s10 = inlined_call_operand.vmem [shape: f32[64,32], index: 10, kind: input, shape index: {}]
  %s11 = inlined_call_operand.vmem [shape: f32[1,32], index: 11, kind: input, shape index: {}]
  %s12 = inlined_call_operand.vmem [shape: f32[1,32], index: 12, kind: input, shape index: {}]
  %s13 = inlined_call_operand.vmem [shape: f32[1,32], index: 13, kind: input, shape index: {}]
  %s14 = inlined_call_operand.vmem [shape: f32[2,8,32], index: 14, kind: output, shape index: {}]
  %s15 = sld [smem:[#allocation0]]
  $region89: #{_lambda_.8} parent=0
    _
  %s17 = ssub.s32 1, %s15
  %s18 = scalar_select 0, %s17, %s15
  loop: start=0, step=1, limit=4
  $region2: #{_lambda_.8} parent=0 // loop_pre_header
    _
  $region3: #{_lambda_.8} parent=0 // loop_header
    %s20 = sphi 0, %s24
    %p21 = scmp.ge.s32.totalorder %s20, 4
    %s30 = sphi 0, %s32
    %s33 = sphi 0, %s30
    %s34 = sphi 0, %s33
    %s50 = sphi 0, %s34
    %s56 = sphi 0, %s58
    %s59 = sphi 0, %s56
    %s60 = sphi 0, %s59
    %s76 = sphi 0, %s60
    %s80 = sphi 0, %s80
    %s82 = sphi 0, %s80
    %s83 = sphi 0, %s82
    %s97 = sphi 0, %s83
    %s101 = sphi 0, %s101
    %s103 = sphi 0, %s101
    %s104 = sphi 0, %s103
    %s118 = sphi 0, %s104
    %s122 = sphi 0, %s122
    %s124 = sphi 0, %s122
    %s125 = sphi 0, %s124
    %s139 = sphi 0, %s125
    %s143 = sphi 0, %s143
    %s145 = sphi 0, %s143
    %s146 = sphi 0, %s145
    %s160 = sphi 0, %s146
    %s164 = sphi 0, %s164
    %s166 = sphi 0, %s164
    %s167 = sphi 0, %s166
    %s181 = sphi 0, %s167
    %s185 = sphi 0, %s185
    %s187 = sphi 0, %s185
    %s188 = sphi 0, %s187
    %s202 = sphi 0, %s188
    %s206 = sphi 0, %s206
    %s208 = sphi 0, %s206
    %s209 = sphi 0, %s208
    %s223 = sphi 0, %s209
    %s227 = sphi 0, %s227
    %s229 = sphi 0, %s227
    %s230 = sphi 0, %s229
    %s244 = sphi 0, %s230
    %s248 = sphi 0, %s248
    %s250 = sphi 0, %s248
    %s251 = sphi 0, %s250
    %s265 = sphi 0, %s251
    %s269 = sphi 0, %s269
    %s271 = sphi 0, %s269
    %s272 = sphi 0, %s271
    %s286 = sphi 0, %s272
    %s290 = sphi 0, %s290
    %s292 = sphi 0, %s290
    %s293 = sphi 0, %s292
    %s307 = sphi 0, %s293
    %s311 = sphi 0, %s311
    %s313 = sphi 0, %s311
    %s314 = sphi 0, %s313
    %s328 = sphi 0, %s314
    %s334 = sphi 0, %s336
    %s337 = sphi 0, %s334
    %s338 = sphi 0, %s337
    %s354 = sphi 0, %s338
  $region4: #{_lambda_.8} parent=0 // loop_header_branch
    %23 = sbr.rel (%p21) target = $region8
  $region5: #{_lambda_.8} parent=0 // loop_body
    %s25 = ssub.s32 %s20, 1
    %s26 = ssub.s32 %s20, 2
    %s27 = sadd.s32 %s20, 1
    %s28 = ssub.s32 %s20, %s27
    %p29 = scmp.eq.s32.totalorder %s28, 0
    %s31 = sadd.s32 %s30, 1
    %s32 = scalar_select %p29, %s30, %s31
    %p35 = pneg %p29
    %p36 = scmp.eq.s32.totalorder %s20, 1
    %p37 = por %p35, %p36
    %p38 = scmp.ne.s32.totalorder %s30, %s33
    %p39 = scmp.eq.s32.totalorder %s20, 0
    %p40 = por %p38, %p39
    %p41 = scmp.ne.s32.totalorder %s30, %s33
    %p42 = scmp.eq.s32.totalorder %s25, 1
    %p43 = por %p41, %p42
    %p44 = scmp.ne.s32.totalorder %s33, %s34
    %p45 = scmp.eq.s32.totalorder %s25, 0
    %p46 = por %p44, %p45
    %p47 = scmp.ne.s32.totalorder %s33, %s34
    %p48 = scmp.eq.s32.totalorder %s26, 1
    %p49 = por %p47, %p48
    %p51 = scmp.ne.s32.totalorder %s34, %s50
    %p52 = scmp.eq.s32.totalorder %s26, 0
    %p53 = por %p51, %p52
    %s54 = ssub.s32 %s20, %s27
    %p55 = scmp.eq.s32.totalorder %s54, 0
    %s57 = sadd.s32 %s56, 1
    %s58 = scalar_select %p55, %s56, %s57
    %p61 = pneg %p55
    %p62 = scmp.eq.s32.totalorder %s20, 1
    %p63 = por %p61, %p62
    %p64 = scmp.ne.s32.totalorder %s56, %s59
    %p65 = scmp.eq.s32.totalorder %s20, 0
    %p66 = por %p64, %p65
    %p67 = scmp.ne.s32.totalorder %s56, %s59
    %p68 = scmp.eq.s32.totalorder %s25, 1
    %p69 = por %p67, %p68
    %p70 = scmp.ne.s32.totalorder %s59, %s60
    %p71 = scmp.eq.s32.totalorder %s25, 0
    %p72 = por %p70, %p71
    %p73 = scmp.ne.s32.totalorder %s59, %s60
    %p74 = scmp.eq.s32.totalorder %s26, 1
    %p75 = por %p73, %p74
    %p77 = scmp.ne.s32.totalorder %s60, %s76
    %p78 = scmp.eq.s32.totalorder %s26, 0
    %p79 = por %p77, %p78
    %s81 = sadd.s32 %s80, 1
    %p84 = scmp.eq.s32.totalorder %s20, 1
    %p85 = scmp.ne.s32.totalorder %s80, %s82
    %p86 = scmp.eq.s32.totalorder %s20, 0
    %p87 = por %p85, %p86
    %p88 = scmp.ne.s32.totalorder %s80, %s82
    %p89 = scmp.eq.s32.totalorder %s25, 1
    %p90 = por %p88, %p89
    %p91 = scmp.ne.s32.totalorder %s82, %s83
    %p92 = scmp.eq.s32.totalorder %s25, 0
    %p93 = por %p91, %p92
    %p94 = scmp.ne.s32.totalorder %s82, %s83
    %p95 = scmp.eq.s32.totalorder %s26, 1
    %p96 = por %p94, %p95
    %p98 = scmp.ne.s32.totalorder %s83, %s97
    %p99 = scmp.eq.s32.totalorder %s26, 0
    %p100 = por %p98, %p99
    %s102 = sadd.s32 %s101, 1
    %p105 = scmp.eq.s32.totalorder %s20, 1
    %p106 = scmp.ne.s32.totalorder %s101, %s103
    %p107 = scmp.eq.s32.totalorder %s20, 0
    %p108 = por %p106, %p107
    %p109 = scmp.ne.s32.totalorder %s101, %s103
    %p110 = scmp.eq.s32.totalorder %s25, 1
    %p111 = por %p109, %p110
    %p112 = scmp.ne.s32.totalorder %s103, %s104
    %p113 = scmp.eq.s32.totalorder %s25, 0
    %p114 = por %p112, %p113
    %p115 = scmp.ne.s32.totalorder %s103, %s104
    %p116 = scmp.eq.s32.totalorder %s26, 1
    %p117 = por %p115, %p116
    %p119 = scmp.ne.s32.totalorder %s104, %s118
    %p120 = scmp.eq.s32.totalorder %s26, 0
    %p121 = por %p119, %p120
    %s123 = sadd.s32 %s122, 1
    %p126 = scmp.eq.s32.totalorder %s20, 1
    %p127 = scmp.ne.s32.totalorder %s122, %s124
    %p128 = scmp.eq.s32.totalorder %s20, 0
    %p129 = por %p127, %p128
    %p130 = scmp.ne.s32.totalorder %s122, %s124
    %p131 = scmp.eq.s32.totalorder %s25, 1
    %p132 = por %p130, %p131
    %p133 = scmp.ne.s32.totalorder %s124, %s125
    %p134 = scmp.eq.s32.totalorder %s25, 0
    %p135 = por %p133, %p134
    %p136 = scmp.ne.s32.totalorder %s124, %s125
    %p137 = scmp.eq.s32.totalorder %s26, 1
    %p138 = por %p136, %p137
    %p140 = scmp.ne.s32.totalorder %s125, %s139
    %p141 = scmp.eq.s32.totalorder %s26, 0
    %p142 = por %p140, %p141
    %s144 = sadd.s32 %s143, 1
    %p147 = scmp.eq.s32.totalorder %s20, 1
    %p148 = scmp.ne.s32.totalorder %s143, %s145
    %p149 = scmp.eq.s32.totalorder %s20, 0
    %p150 = por %p148, %p149
    %p151 = scmp.ne.s32.totalorder %s143, %s145
    %p152 = scmp.eq.s32.totalorder %s25, 1
    %p153 = por %p151, %p152
    %p154 = scmp.ne.s32.totalorder %s145, %s146
    %p155 = scmp.eq.s32.totalorder %s25, 0
    %p156 = por %p154, %p155
    %p157 = scmp.ne.s32.totalorder %s145, %s146
    %p158 = scmp.eq.s32.totalorder %s26, 1
    %p159 = por %p157, %p158
    %p161 = scmp.ne.s32.totalorder %s146, %s160
    %p162 = scmp.eq.s32.totalorder %s26, 0
    %p163 = por %p161, %p162
    %s165 = sadd.s32 %s164, 1
    %p168 = scmp.eq.s32.totalorder %s20, 1
    %p169 = scmp.ne.s32.totalorder %s164, %s166
    %p170 = scmp.eq.s32.totalorder %s20, 0
    %p171 = por %p169, %p170
    %p172 = scmp.ne.s32.totalorder %s164, %s166
    %p173 = scmp.eq.s32.totalorder %s25, 1
    %p174 = por %p172, %p173
    %p175 = scmp.ne.s32.totalorder %s166, %s167
    %p176 = scmp.eq.s32.totalorder %s25, 0
    %p177 = por %p175, %p176
    %p178 = scmp.ne.s32.totalorder %s166, %s167
    %p179 = scmp.eq.s32.totalorder %s26, 1
    %p180 = por %p178, %p179
    %p182 = scmp.ne.s32.totalorder %s167, %s181
    %p183 = scmp.eq.s32.totalorder %s26, 0
    %p184 = por %p182, %p183
    %s186 = sadd.s32 %s185, 1
    %p189 = scmp.eq.s32.totalorder %s20, 1
    %p190 = scmp.ne.s32.totalorder %s185, %s187
    %p191 = scmp.eq.s32.totalorder %s20, 0
    %p192 = por %p190, %p191
    %p193 = scmp.ne.s32.totalorder %s185, %s187
    %p194 = scmp.eq.s32.totalorder %s25, 1
    %p195 = por %p193, %p194
    %p196 = scmp.ne.s32.totalorder %s187, %s188
    %p197 = scmp.eq.s32.totalorder %s25, 0
    %p198 = por %p196, %p197
    %p199 = scmp.ne.s32.totalorder %s187, %s188
    %p200 = scmp.eq.s32.totalorder %s26, 1
    %p201 = por %p199, %p200
    %p203 = scmp.ne.s32.totalorder %s188, %s202
    %p204 = scmp.eq.s32.totalorder %s26, 0
    %p205 = por %p203, %p204
    %s207 = sadd.s32 %s206, 1
    %p210 = scmp.eq.s32.totalorder %s20, 1
    %p211 = scmp.ne.s32.totalorder %s206, %s208
    %p212 = scmp.eq.s32.totalorder %s20, 0
    %p213 = por %p211, %p212
    %p214 = scmp.ne.s32.totalorder %s206, %s208
    %p215 = scmp.eq.s32.totalorder %s25, 1
    %p216 = por %p214, %p215
    %p217 = scmp.ne.s32.totalorder %s208, %s209
    %p218 = scmp.eq.s32.totalorder %s25, 0
    %p219 = por %p217, %p218
    %p220 = scmp.ne.s32.totalorder %s208, %s209
    %p221 = scmp.eq.s32.totalorder %s26, 1
    %p222 = por %p220, %p221
    %p224 = scmp.ne.s32.totalorder %s209, %s223
    %p225 = scmp.eq.s32.totalorder %s26, 0
    %p226 = por %p224, %p225
    %s228 = sadd.s32 %s227, 1
    %p231 = scmp.eq.s32.totalorder %s20, 1
    %p232 = scmp.ne.s32.totalorder %s227, %s229
    %p233 = scmp.eq.s32.totalorder %s20, 0
    %p234 = por %p232, %p233
    %p235 = scmp.ne.s32.totalorder %s227, %s229
    %p236 = scmp.eq.s32.totalorder %s25, 1
    %p237 = por %p235, %p236
    %p238 = scmp.ne.s32.totalorder %s229, %s230
    %p239 = scmp.eq.s32.totalorder %s25, 0
    %p240 = por %p238, %p239
    %p241 = scmp.ne.s32.totalorder %s229, %s230
    %p242 = scmp.eq.s32.totalorder %s26, 1
    %p243 = por %p241, %p242
    %p245 = scmp.ne.s32.totalorder %s230, %s244
    %p246 = scmp.eq.s32.totalorder %s26, 0
    %p247 = por %p245, %p246
    %s249 = sadd.s32 %s248, 1
    %p252 = scmp.eq.s32.totalorder %s20, 1
    %p253 = scmp.ne.s32.totalorder %s248, %s250
    %p254 = scmp.eq.s32.totalorder %s20, 0
    %p255 = por %p253, %p254
    %p256 = scmp.ne.s32.totalorder %s248, %s250
    %p257 = scmp.eq.s32.totalorder %s25, 1
    %p258 = por %p256, %p257
    %p259 = scmp.ne.s32.totalorder %s250, %s251
    %p260 = scmp.eq.s32.totalorder %s25, 0
    %p261 = por %p259, %p260
    %p262 = scmp.ne.s32.totalorder %s250, %s251
    %p263 = scmp.eq.s32.totalorder %s26, 1
    %p264 = por %p262, %p263
    %p266 = scmp.ne.s32.totalorder %s251, %s265
    %p267 = scmp.eq.s32.totalorder %s26, 0
    %p268 = por %p266, %p267
    %s270 = sadd.s32 %s269, 1
    %p273 = scmp.eq.s32.totalorder %s20, 1
    %p274 = scmp.ne.s32.totalorder %s269, %s271
    %p275 = scmp.eq.s32.totalorder %s20, 0
    %p276 = por %p274, %p275
    %p277 = scmp.ne.s32.totalorder %s269, %s271
    %p278 = scmp.eq.s32.totalorder %s25, 1
    %p279 = por %p277, %p278
    %p280 = scmp.ne.s32.totalorder %s271, %s272
    %p281 = scmp.eq.s32.totalorder %s25, 0
    %p282 = por %p280, %p281
    %p283 = scmp.ne.s32.totalorder %s271, %s272
    %p284 = scmp.eq.s32.totalorder %s26, 1
    %p285 = por %p283, %p284
    %p287 = scmp.ne.s32.totalorder %s272, %s286
    %p288 = scmp.eq.s32.totalorder %s26, 0
    %p289 = por %p287, %p288
    %s291 = sadd.s32 %s290, 1
    %p294 = scmp.eq.s32.totalorder %s20, 1
    %p295 = scmp.ne.s32.totalorder %s290, %s292
    %p296 = scmp.eq.s32.totalorder %s20, 0
    %p297 = por %p295, %p296
    %p298 = scmp.ne.s32.totalorder %s290, %s292
    %p299 = scmp.eq.s32.totalorder %s25, 1
    %p300 = por %p298, %p299
    %p301 = scmp.ne.s32.totalorder %s292, %s293
    %p302 = scmp.eq.s32.totalorder %s25, 0
    %p303 = por %p301, %p302
    %p304 = scmp.ne.s32.totalorder %s292, %s293
    %p305 = scmp.eq.s32.totalorder %s26, 1
    %p306 = por %p304, %p305
    %p308 = scmp.ne.s32.totalorder %s293, %s307
    %p309 = scmp.eq.s32.totalorder %s26, 0
    %p310 = por %p308, %p309
    %s312 = sadd.s32 %s311, 1
    %p315 = scmp.eq.s32.totalorder %s20, 1
    %p316 = scmp.ne.s32.totalorder %s311, %s313
    %p317 = scmp.eq.s32.totalorder %s20, 0
    %p318 = por %p316, %p317
    %p319 = scmp.ne.s32.totalorder %s311, %s313
    %p320 = scmp.eq.s32.totalorder %s25, 1
    %p321 = por %p319, %p320
    %p322 = scmp.ne.s32.totalorder %s313, %s314
    %p323 = scmp.eq.s32.totalorder %s25, 0
    %p324 = por %p322, %p323
    %p325 = scmp.ne.s32.totalorder %s313, %s314
    %p326 = scmp.eq.s32.totalorder %s26, 1
    %p327 = por %p325, %p326
    %p329 = scmp.ne.s32.totalorder %s314, %s328
    %p330 = scmp.eq.s32.totalorder %s26, 0
    %p331 = por %p329, %p330
    %s332 = ssub.s32 %s20, %s27
    %p333 = scmp.eq.s32.totalorder %s332, 0
    %s335 = sadd.s32 %s334, 1
    %s336 = scalar_select %p333, %s334, %s335
    %p339 = pneg %p333
    %p340 = scmp.eq.s32.totalorder %s20, 1
    %p341 = por %p339, %p340
    %p342 = scmp.ne.s32.totalorder %s334, %s337
    %p343 = scmp.eq.s32.totalorder %s20, 0
    %p344 = por %p342, %p343
    %p345 = scmp.ne.s32.totalorder %s334, %s337
    %p346 = scmp.eq.s32.totalorder %s25, 1
    %p347 = por %p345, %p346
    %p348 = scmp.ne.s32.totalorder %s337, %s338
    %p349 = scmp.eq.s32.totalorder %s25, 0
    %p350 = por %p348, %p349
    %p351 = scmp.ne.s32.totalorder %s337, %s338
    %p352 = scmp.eq.s32.totalorder %s26, 1
    %p353 = por %p351, %p352
    %p355 = scmp.ne.s32.totalorder %s338, %s354
    %p356 = scmp.eq.s32.totalorder %s26, 0
    %p357 = por %p355, %p356
    %p358 = scmp.le.s32.totalorder 1, %s20
    %p359 = scmp.lt.s32.totalorder %s20, 3
    %p360 = pnand %p358, %p359
    %p361 = pneg %p360
    // Predicated region
    $region9: #{_lambda_.8} parent=5 // pred_check
      _
    $region10: #{_lambda_.8} parent=5 // pred_check_branch
      %363 = sbr.rel (%p360) target = $region12
    $region11: #{_lambda_.8} parent=5 // pred_region
      %s364 = ssub.s32 %s20, 1
      // Predicated region
      $region13: #{_lambda_.8} parent=11 // pred_check
        %p365 = pneg %p93
      $region14: #{_lambda_.8} parent=11 // pred_check_branch
        %367 = sbr.rel (%p365) target = $region16
      $region15: #{_lambda_.8} parent=11 // pred_region
        _
      $region16: #{_lambda_.8} parent=11 // pred_fallthru
        _
      // Predicated region
      $region17: #{_lambda_.8} parent=11 // pred_check
        %p368 = pneg %p114
      $region18: #{_lambda_.8} parent=11 // pred_check_branch
        %370 = sbr.rel (%p368) target = $region20
      $region19: #{_lambda_.8} parent=11 // pred_region
        _
      $region20: #{_lambda_.8} parent=11 // pred_fallthru
        _
      // Predicated region
      $region21: #{_lambda_.8} parent=11 // pred_check
        %p371 = pneg %p135
      $region22: #{_lambda_.8} parent=11 // pred_check_branch
        %373 = sbr.rel (%p371) target = $region24
      $region23: #{_lambda_.8} parent=11 // pred_region
        _
      $region24: #{_lambda_.8} parent=11 // pred_fallthru
        _
      // Predicated region
      $region25: #{_lambda_.8} parent=11 // pred_check
        %p374 = pneg %p156
      $region26: #{_lambda_.8} parent=11 // pred_check_branch
        %376 = sbr.rel (%p374) target = $region28
      $region27: #{_lambda_.8} parent=11 // pred_region
        _
      $region28: #{_lambda_.8} parent=11 // pred_fallthru
        _
      // Predicated region
      $region29: #{_lambda_.8} parent=11 // pred_check
        %p377 = pneg %p177
      $region30: #{_lambda_.8} parent=11 // pred_check_branch
        %379 = sbr.rel (%p377) target = $region32
      $region31: #{_lambda_.8} parent=11 // pred_region
        _
      $region32: #{_lambda_.8} parent=11 // pred_fallthru
        _
      // Predicated region
      $region33: #{_lambda_.8} parent=11 // pred_check
        %p380 = pneg %p198
      $region34: #{_lambda_.8} parent=11 // pred_check_branch
        %382 = sbr.rel (%p380) target = $region36
      $region35: #{_lambda_.8} parent=11 // pred_region
        _
      $region36: #{_lambda_.8} parent=11 // pred_fallthru
        _
      // Predicated region
      $region37: #{_lambda_.8} parent=11 // pred_check
        %p383 = pneg %p219
      $region38: #{_lambda_.8} parent=11 // pred_check_branch
        %385 = sbr.rel (%p383) target = $region40
      $region39: #{_lambda_.8} parent=11 // pred_region
        _
      $region40: #{_lambda_.8} parent=11 // pred_fallthru
        _
      // Predicated region
      $region41: #{_lambda_.8} parent=11 // pred_check
        %p386 = pneg %p240
      $region42: #{_lambda_.8} parent=11 // pred_check_branch
        %388 = sbr.rel (%p386) target = $region44
      $region43: #{_lambda_.8} parent=11 // pred_region
        _
      $region44: #{_lambda_.8} parent=11 // pred_fallthru
        _
      // Predicated region
      $region45: #{_lambda_.8} parent=11 // pred_check
        %p389 = pneg %p261
      $region46: #{_lambda_.8} parent=11 // pred_check_branch
        %391 = sbr.rel (%p389) target = $region48
      $region47: #{_lambda_.8} parent=11 // pred_region
        _
      $region48: #{_lambda_.8} parent=11 // pred_fallthru
        _
      // Predicated region
      $region49: #{_lambda_.8} parent=11 // pred_check
        %p392 = pneg %p282
      $region50: #{_lambda_.8} parent=11 // pred_check_branch
        %394 = sbr.rel (%p392) target = $region52
      $region51: #{_lambda_.8} parent=11 // pred_region
        _
      $region52: #{_lambda_.8} parent=11 // pred_fallthru
        _
      // Predicated region
      $region53: #{_lambda_.8} parent=11 // pred_check
        %p395 = pneg %p303
      $region54: #{_lambda_.8} parent=11 // pred_check_branch
        %397 = sbr.rel (%p395) target = $region56
      $region55: #{_lambda_.8} parent=11 // pred_region
        _
      $region56: #{_lambda_.8} parent=11 // pred_fallthru
        _
      // Predicated region
      $region57: #{_lambda_.8} parent=11 // pred_check
        %p398 = pneg %p324
      $region58: #{_lambda_.8} parent=11 // pred_check_branch
        %400 = sbr.rel (%p398) target = $region60
      $region59: #{_lambda_.8} parent=11 // pred_region
        _
      $region60: #{_lambda_.8} parent=11 // pred_fallthru
        _
    $region12: #{_lambda_.8} parent=5 // pred_fallthru
      _
    %p401 = scmp.lt.s32.totalorder %s20, 2
    // Predicated region
    $region61: #{_lambda_.8} parent=5 // pred_check
      %p402 = pneg %p401
    $region62: #{_lambda_.8} parent=5 // pred_check_branch
      %404 = sbr.rel (%p402) target = $region64
    $region63: #{_lambda_.8} parent=5 // pred_region
      // Predicated region
      $region65: #{_lambda_.8} parent=63 // pred_check
        %p405 = pneg %p40
      $region66: #{_lambda_.8} parent=63 // pred_check_branch
        %407 = sbr.rel (%p405) target = $region68
      $region67: #{_lambda_.8} parent=63 // pred_region
        %p408 = scmp.lt.s32.totalorder %s20, 1
        %s409 = scalar_select %p408, %s20, 1
        %s410 = smul.addr %s409, 8
        %s411 = scalar_lea.vmem %s0, %s410
      $region68: #{_lambda_.8} parent=63 // pred_fallthru
        _
      // Predicated region
      $region69: #{_lambda_.8} parent=63 // pred_check
        %p412 = pneg %p66
      $region70: #{_lambda_.8} parent=63 // pred_check_branch
        %414 = sbr.rel (%p412) target = $region72
      $region71: #{_lambda_.8} parent=63 // pred_region
        %p415 = scmp.lt.s32.totalorder %s20, 1
        %s416 = scalar_select %p415, %s20, 1
        %s417 = scalar_lea.vmem %s1, %s416
      $region72: #{_lambda_.8} parent=63 // pred_fallthru
        _
    $region64: #{_lambda_.8} parent=5 // pred_fallthru
      _
    %p418 = scmp.le.s32.totalorder 1, %s20
    %p419 = scmp.lt.s32.totalorder %s20, 3
    %p420 = pnand %p418, %p419
    %p421 = pneg %p420
    // Predicated region
    $region73: #{_lambda_.8} parent=5 // pred_check
      _
    $region74: #{_lambda_.8} parent=5 // pred_check_branch
      %423 = sbr.rel (%p420) target = $region76
    $region75: #{_lambda_.8} parent=5 // pred_region
      %s424 = ssub.s32 %s20, 1
      %p425 = scmp.lt.s32.totalorder %s25, 1
      %s426 = scalar_select %p425, %s25, 1
      %s427 = smul.addr %s426, 8
      %s428 = scalar_lea.vmem %s0, %s427
      %p429 = pneg %p46
      %p430 = pneg %p43
      %p431 = scmp.lt.s32.totalorder %s25, 1
      %s432 = scalar_select %p431, %s25, 1
      %s433 = scalar_lea.vmem %s1, %s432
      %p434 = pneg %p72
      %p435 = pneg %p69
      %p436 = pneg %p93
      %p437 = pneg %p90
      %p438 = pneg %p114
      %p439 = pneg %p111
      %p440 = pneg %p135
      %p441 = pneg %p132
      %p442 = pneg %p156
      %p443 = pneg %p153
      %p444 = pneg %p177
      %p445 = pneg %p174
      %p446 = pneg %p198
      %p447 = pneg %p195
      %p448 = pneg %p219
      %p449 = pneg %p216
      %p450 = pneg %p240
      %p451 = pneg %p237
      %p452 = pneg %p261
      %p453 = pneg %p258
      %p454 = pneg %p282
      %p455 = pneg %p279
      %p456 = pneg %p303
      %p457 = pneg %p300
      %p458 = pneg %p324
      %p459 = pneg %p321
      %p460 = pneg %p350
      %p461 = pneg %p347
      %p462 = scmp.lt.s32.totalorder %s25, 1
      %s463 = scalar_select %p462, %s25, 1
      %s464 = smul.addr %s463, 8
      %s465 = scalar_lea.vmem %s14, %s464
      %p466 = scmp.lt.s32.totalorder %s25, 1
      %s467 = scalar_select %p466, %s25, 1
      %s468 = smul.addr %s467, 8
      %s469 = scalar_lea.vmem %s0, %s468
      %p470 = scmp.lt.s32.totalorder %s25, 1
      %s471 = scalar_select %p470, %s25, 1
      %s472 = scalar_lea.vmem %s1, %s471
      %p473 = scmp.lt.s32.totalorder %s25, 1
      %s474 = scalar_select %p473, %s25, 1
      %s475 = smul.addr %s474, 8
      %s476 = scalar_lea.vmem %s14, %s475
      %v478 = vld [vmem:[%s469] sm:$0xff]
      %v479 = vld [vmem:[%s472] sm:$0x1]
      %v480 = vpack.c.bf16 %v478, %v478
      %v481 = vld [vmem:[%s2] sm:$0xff]
      %v482 = vld [vmem:[%s2 + $0x8] sm:$0xff]
      %v483 = vld [vmem:[%s2 + $0x10] sm:$0xff]
      %v484 = vld [vmem:[%s2 + $0x18] sm:$0xff]
      %v485 = vpack.c.bf16 %v482, %v481
      %v486 = vpack.c.bf16 %v484, %v483
      %v487 = vld [vmem:[%s3] sm:$0x1]
      %v489 = vlaneseq
      %v490 = vshrl.u32 %v489, 7
      %v491 = vsub.s32 0, %v490
      %v492 = vrot.slane %v487, %v491
      %vm494 = vcmask 261120
      %v496 = vsel %vm494, %v480, 0
      %498 = vmatprep.subr.bf16.mxu0 0
      %499 = vmatpush1.bf16.msra.mxu0 0
      %500 = vmatprep.subr.bf16.mxu0 0
      %501 = vmatpush1.bf16.msra.mxu0 0
      %502 = vmatprep.subr.bf16.mxu0 0
      %503 = vmatpush1.bf16.msra.mxu0 0
      %504 = vmatprep.subr.bf16.mxu0 0
      %505 = vmatpush1.bf16.msra.mxu0 0
      %506 = vmatprep.subr.bf16.mxu0 0
      %507 = vmatpush1.bf16.msra.mxu0 0
      %508 = vmatprep.subr.bf16.mxu0 0
      %509 = vmatpush1.bf16.msra.mxu0 0
      %510 = vmatprep.subr.bf16.mxu0 0
      %511 = vmatpush1.bf16.msra.mxu0 %v486
      %512 = vmatprep.subr.bf16.mxu0 0
      %513 = vmatpush1.bf16.msra.mxu0 %v485
      %514 = vmatprep.subr.bf16.mxu0 0
      %515 = vmatpush2.bf16.msra.mxu0 0
      %516 = vmatprep.subr.bf16.mxu0 0
      %517 = vmatpush2.bf16.msra.mxu0 0
      %518 = vmatprep.subr.bf16.mxu0 0
      %519 = vmatpush2.bf16.msra.mxu0 0
      %520 = vmatprep.subr.bf16.mxu0 0
      %521 = vmatpush2.bf16.msra.mxu0 0
      %522 = vmatprep.subr.bf16.mxu0 0
      %523 = vmatpush2.bf16.msra.mxu0 0
      %524 = vmatprep.subr.bf16.mxu0 0
      %525 = vmatpush2.bf16.msra.mxu0 0
      %526 = vmatprep.subr.bf16.mxu0 0
      %527 = vmatpush2.bf16.msra.mxu0 0
      %528 = vmatprep.subr.bf16.mxu0 0
      %529 = vmatpush2.bf16.msra.mxu0 0
      %530 = vmatprep.mubr.bf16.mxu0 0
      %531 = vmatmul.mubr.bf16.gmra.mxu0 %v496
      %v532 = vpop.f32.mrf.mxu0
      %v533 = vadd.f32 %v492, %v532
      %v534 = vpop.f32.mrf.mxu0
      %v535 = vpop.f32.mrf.mxu0
      %v536 = vpop.f32.mrf.mxu0
      %537 = vdwg.mxu0
      %v538 = vpack.c.bf16 %v533, %v533
      %540 = vrot.lane.b32.xlu0 %v538, 96
      %v541 = vpop.permute.xlu0 %540
      %vm542 = vcmask 64512
      %v544 = vsel %vm542, %v538, 0
      %v547 = vsel %vm542, %v541, 0
      %549 = vmatprep.subr.bf16.mxu0 0
      %550 = vmatpush1.bf16.xpose.msra.mxu0 0
      %551 = vmatprep.subr.bf16.mxu0 0
      %552 = vmatpush1.bf16.xpose.msra.mxu0 0
      %553 = vmatprep.subr.bf16.mxu0 0
      %554 = vmatpush1.bf16.xpose.msra.mxu0 0
      %555 = vmatprep.subr.bf16.mxu0 0
      %556 = vmatpush1.bf16.xpose.msra.mxu0 0
      %557 = vmatprep.subr.bf16.mxu0 0
      %558 = vmatpush1.bf16.xpose.msra.mxu0 0
      %559 = vmatprep.subr.bf16.mxu0 0
      %560 = vmatpush1.bf16.xpose.msra.mxu0 0
      %561 = vmatprep.subr.bf16.mxu0 0
      %562 = vmatpush1.bf16.xpose.msra.mxu0 0
      %563 = vmatprep.subr.bf16.mxu0 0
      %564 = vmatpush1.bf16.xpose.msra.mxu0 %v547
      %565 = vmatprep.subr.bf16.mxu0 0
      %566 = vmatpush2.bf16.xpose.msra.mxu0 0
      %567 = vmatprep.subr.bf16.mxu0 0
      %568 = vmatpush2.bf16.xpose.msra.mxu0 0
      %569 = vmatprep.subr.bf16.mxu0 0
      %570 = vmatpush2.bf16.xpose.msra.mxu0 0
      %571 = vmatprep.subr.bf16.mxu0 0
      %572 = vmatpush2.bf16.xpose.msra.mxu0 0
      %573 = vmatprep.subr.bf16.mxu0 0
      %574 = vmatpush2.bf16.xpose.msra.mxu0 0
      %575 = vmatprep.subr.bf16.mxu0 0
      %576 = vmatpush2.bf16.xpose.msra.mxu0 0
      %577 = vmatprep.subr.bf16.mxu0 0
      %578 = vmatpush2.bf16.xpose.msra.mxu0 0
      %579 = vmatprep.subr.bf16.mxu0 0
      %580 = vmatpush2.bf16.xpose.msra.mxu0 0
      %581 = vmatprep.mubr.bf16.mxu0 0
      %582 = vmatmul.mubr.bf16.gmra.mxu0 %v544
      %v583 = vpop.f32.mrf.mxu0
      %v584 = vadd.f32 0.0, %v583
      %v585 = vpop.f32.mrf.mxu0
      %v586 = vpop.f32.mrf.mxu0
      %v587 = vpop.f32.mrf.mxu0
      %588 = vdwg.mxu0
      %v589 = vmul.f32 %v584, 0.35355338
      %v591 = vlaneseq
      %v592 = vshrl.u32 %v591, 7
      %v593 = vsub.s32 0, %v592
      %v594 = vrot.slane %v479, %v593
      %v596 = vadd.f32 %v589, %v594
      %v597 = vsel %vm542, %v596, -inf
      %598 = vmax.xlane.f32.xlu0 %v597
      %v599 = vpop.xlane.xlu0 %598
      %v600 = vsub.f32 %v596, %v599
      %v601 = vmul.f32 %v600, 1.442695
      %v602 = vpow.pop %v601
      %v603 = vsel %vm542, %v602, 0.0
      %604 = vadd.xlane.f32.xlu0 %v603
      %v605 = vpop.xlane.xlu0 %604
      %v606 = vrcp.pop %v605
      %v607 = vmul.f32 %v602, %v606
      %v608 = vpack.c.bf16 %v607, %v607
      %609 = vrot.lane.b32.xlu0 %v538, 64
      %v610 = vpop.permute.xlu0 %609
      %v612 = vsel %vm542, %v608, 0
      %vm614 = vcmask 1043456
      %v616 = vsel %vm614, %v610, 0
      %618 = vmatprep.subr.bf16.mxu0 0
      %619 = vmatpush1.bf16.msra.mxu0 0
      %620 = vmatprep.subr.bf16.mxu0 0
      %621 = vmatpush1.bf16.msra.mxu0 0
      %622 = vmatprep.subr.bf16.mxu0 0
      %623 = vmatpush1.bf16.msra.mxu0 0
      %624 = vmatprep.subr.bf16.mxu0 0
      %625 = vmatpush1.bf16.msra.mxu0 0
      %626 = vmatprep.subr.bf16.mxu0 0
      %627 = vmatpush1.bf16.msra.mxu0 0
      %628 = vmatprep.subr.bf16.mxu0 0
      %629 = vmatpush1.bf16.msra.mxu0 0
      %630 = vmatprep.subr.bf16.mxu0 0
      %631 = vmatpush1.bf16.msra.mxu0 0
      %632 = vmatprep.subr.bf16.mxu0 0
      %633 = vmatpush1.bf16.msra.mxu0 %v616
      %634 = vmatprep.subr.bf16.mxu0 0
      %635 = vmatpush2.bf16.msra.mxu0 0
      %636 = vmatprep.subr.bf16.mxu0 0
      %637 = vmatpush2.bf16.msra.mxu0 0
      %638 = vmatprep.subr.bf16.mxu0 0
      %639 = vmatpush2.bf16.msra.mxu0 0
      %640 = vmatprep.subr.bf16.mxu0 0
      %641 = vmatpush2.bf16.msra.mxu0 0
      %642 = vmatprep.subr.bf16.mxu0 0
      %643 = vmatpush2.bf16.msra.mxu0 0
      %644 = vmatprep.subr.bf16.mxu0 0
      %645 = vmatpush2.bf16.msra.mxu0 0
      %646 = vmatprep.subr.bf16.mxu0 0
      %647 = vmatpush2.bf16.msra.mxu0 0
      %648 = vmatprep.subr.bf16.mxu0 0
      %649 = vmatpush2.bf16.msra.mxu0 0
      %650 = vmatprep.mubr.bf16.mxu0 0
      %651 = vmatmul.mubr.bf16.gmra.mxu0 %v612
      %v652 = vpop.f32.mrf.mxu0
      %v653 = vadd.f32 0.0, %v652
      %v654 = vpop.f32.mrf.mxu0
      %v655 = vpop.f32.mrf.mxu0
      %v656 = vpop.f32.mrf.mxu0
      %657 = vdwg.mxu0
      %658 = vrot.lane.b32.xlu0 %v538, 120
      %v659 = vpop.permute.xlu0 %658
      %660 = vrot.lane.b32.xlu0 %v538, 88
      %v661 = vpop.permute.xlu0 %660
      %v663 = vsel %vm542, %v659, 0
      %v666 = vsel %vm542, %v661, 0
      %668 = vmatprep.subr.bf16.mxu0 0
      %669 = vmatpush1.bf16.xpose.msra.mxu0 0
      %670 = vmatprep.subr.bf16.mxu0 0
      %671 = vmatpush1.bf16.xpose.msra.mxu0 0
      %672 = vmatprep.subr.bf16.mxu0 0
      %673 = vmatpush1.bf16.xpose.msra.mxu0 0
      %674 = vmatprep.subr.bf16.mxu0 0
      %675 = vmatpush1.bf16.xpose.msra.mxu0 0
      %676 = vmatprep.subr.bf16.mxu0 0
      %677 = vmatpush1.bf16.xpose.msra.mxu0 0
      %678 = vmatprep.subr.bf16.mxu0 0
      %679 = vmatpush1.bf16.xpose.msra.mxu0 0
      %680 = vmatprep.subr.bf16.mxu0 0
      %681 = vmatpush1.bf16.xpose.msra.mxu0 0
      %682 = vmatprep.subr.bf16.mxu0 0
      %683 = vmatpush1.bf16.xpose.msra.mxu0 %v666
      %684 = vmatprep.subr.bf16.mxu0 0
      %685 = vmatpush2.bf16.xpose.msra.mxu0 0
      %686 = vmatprep.subr.bf16.mxu0 0
      %687 = vmatpush2.bf16.xpose.msra.mxu0 0
      %688 = vmatprep.subr.bf16.mxu0 0
      %689 = vmatpush2.bf16.xpose.msra.mxu0 0
      %690 = vmatprep.subr.bf16.mxu0 0
      %691 = vmatpush2.bf16.xpose.msra.mxu0 0
      %692 = vmatprep.subr.bf16.mxu0 0
      %693 = vmatpush2.bf16.xpose.msra.mxu0 0
      %694 = vmatprep.subr.bf16.mxu0 0
      %695 = vmatpush2.bf16.xpose.msra.mxu0 0
      %696 = vmatprep.subr.bf16.mxu0 0
      %697 = vmatpush2.bf16.xpose.msra.mxu0 0
      %698 = vmatprep.subr.bf16.mxu0 0
      %699 = vmatpush2.bf16.xpose.msra.mxu0 0
      %700 = vmatprep.mubr.bf16.mxu0 0
      %701 = vmatmul.mubr.bf16.gmra.mxu0 %v663
      %v702 = vpop.f32.mrf.mxu0
      %v703 = vadd.f32 0.0, %v702
      %v704 = vpop.f32.mrf.mxu0
      %v705 = vpop.f32.mrf.mxu0
      %v706 = vpop.f32.mrf.mxu0
      %707 = vdwg.mxu0
      %v708 = vmul.f32 %v703, 0.35355338
      %v709 = vadd.f32 %v708, %v594
      %v710 = vsel %vm542, %v709, -inf
      %711 = vmax.xlane.f32.xlu0 %v710
      %v712 = vpop.xlane.xlu0 %711
      %v713 = vsub.f32 %v709, %v712
      %v714 = vmul.f32 %v713, 1.442695
      %v715 = vpow.pop %v714
      %v716 = vsel %vm542, %v715, 0.0
      %717 = vadd.xlane.f32.xlu0 %v716
      %v718 = vpop.xlane.xlu0 %717
      %v719 = vrcp.pop %v718
      %v720 = vmul.f32 %v715, %v719
      %v721 = vpack.c.bf16 %v720, %v720
      %722 = vrot.lane.b32.xlu0 %v538, 56
      %v723 = vpop.permute.xlu0 %722
      %v725 = vsel %vm542, %v721, 0
      %v728 = vsel %vm614, %v723, 0
      %730 = vmatprep.subr.bf16.mxu0 0
      %731 = vmatpush1.bf16.msra.mxu0 0
      %732 = vmatprep.subr.bf16.mxu0 0
      %733 = vmatpush1.bf16.msra.mxu0 0
      %734 = vmatprep.subr.bf16.mxu0 0
      %735 = vmatpush1.bf16.msra.mxu0 0
      %736 = vmatprep.subr.bf16.mxu0 0
      %737 = vmatpush1.bf16.msra.mxu0 0
      %738 = vmatprep.subr.bf16.mxu0 0
      %739 = vmatpush1.bf16.msra.mxu0 0
      %740 = vmatprep.subr.bf16.mxu0 0
      %741 = vmatpush1.bf16.msra.mxu0 0
      %742 = vmatprep.subr.bf16.mxu0 0
      %743 = vmatpush1.bf16.msra.mxu0 0
      %744 = vmatprep.subr.bf16.mxu0 0
      %745 = vmatpush1.bf16.msra.mxu0 %v728
      %746 = vmatprep.subr.bf16.mxu0 0
      %747 = vmatpush2.bf16.msra.mxu0 0
      %748 = vmatprep.subr.bf16.mxu0 0
      %749 = vmatpush2.bf16.msra.mxu0 0
      %750 = vmatprep.subr.bf16.mxu0 0
      %751 = vmatpush2.bf16.msra.mxu0 0
      %752 = vmatprep.subr.bf16.mxu0 0
      %753 = vmatpush2.bf16.msra.mxu0 0
      %754 = vmatprep.subr.bf16.mxu0 0
      %755 = vmatpush2.bf16.msra.mxu0 0
      %756 = vmatprep.subr.bf16.mxu0 0
      %757 = vmatpush2.bf16.msra.mxu0 0
      %758 = vmatprep.subr.bf16.mxu0 0
      %759 = vmatpush2.bf16.msra.mxu0 0
      %760 = vmatprep.subr.bf16.mxu0 0
      %761 = vmatpush2.bf16.msra.mxu0 0
      %762 = vmatprep.mubr.bf16.mxu0 0
      %763 = vmatmul.mubr.bf16.gmra.mxu0 %v725
      %v764 = vpop.f32.mrf.mxu0
      %v765 = vadd.f32 0.0, %v764
      %v766 = vpop.f32.mrf.mxu0
      %v767 = vpop.f32.mrf.mxu0
      %v768 = vpop.f32.mrf.mxu0
      %769 = vdwg.mxu0
      %770 = vrot.lane.b32.xlu0 %v538, 112
      %v771 = vpop.permute.xlu0 %770
      %772 = vrot.lane.b32.xlu0 %v538, 80
      %v773 = vpop.permute.xlu0 %772
      %v775 = vsel %vm542, %v771, 0
      %v778 = vsel %vm542, %v773, 0
      %780 = vmatprep.subr.bf16.mxu0 0
      %781 = vmatpush1.bf16.xpose.msra.mxu0 0
      %782 = vmatprep.subr.bf16.mxu0 0
      %783 = vmatpush1.bf16.xpose.msra.mxu0 0
      %784 = vmatprep.subr.bf16.mxu0 0
      %785 = vmatpush1.bf16.xpose.msra.mxu0 0
      %786 = vmatprep.subr.bf16.mxu0 0
      %787 = vmatpush1.bf16.xpose.msra.mxu0 0
      %788 = vmatprep.subr.bf16.mxu0 0
      %789 = vmatpush1.bf16.xpose.msra.mxu0 0
      %790 = vmatprep.subr.bf16.mxu0 0
      %791 = vmatpush1.bf16.xpose.msra.mxu0 0
      %792 = vmatprep.subr.bf16.mxu0 0
      %793 = vmatpush1.bf16.xpose.msra.mxu0 0
      %794 = vmatprep.subr.bf16.mxu0 0
      %795 = vmatpush1.bf16.xpose.msra.mxu0 %v778
      %796 = vmatprep.subr.bf16.mxu0 0
      %797 = vmatpush2.bf16.xpose.msra.mxu0 0
      %798 = vmatprep.subr.bf16.mxu0 0
      %799 = vmatpush2.bf16.xpose.msra.mxu0 0
      %800 = vmatprep.subr.bf16.mxu0 0
      %801 = vmatpush2.bf16.xpose.msra.mxu0 0
      %802 = vmatprep.subr.bf16.mxu0 0
      %803 = vmatpush2.bf16.xpose.msra.mxu0 0
      %804 = vmatprep.subr.bf16.mxu0 0
      %805 = vmatpush2.bf16.xpose.msra.mxu0 0
      %806 = vmatprep.subr.bf16.mxu0 0
      %807 = vmatpush2.bf16.xpose.msra.mxu0 0
      %808 = vmatprep.subr.bf16.mxu0 0
      %809 = vmatpush2.bf16.xpose.msra.mxu0 0
      %810 = vmatprep.subr.bf16.mxu0 0
      %811 = vmatpush2.bf16.xpose.msra.mxu0 0
      %812 = vmatprep.mubr.bf16.mxu0 0
      %813 = vmatmul.mubr.bf16.gmra.mxu0 %v775
      %v814 = vpop.f32.mrf.mxu0
      %v815 = vadd.f32 0.0, %v814
      %v816 = vpop.f32.mrf.mxu0
      %v817 = vpop.f32.mrf.mxu0
      %v818 = vpop.f32.mrf.mxu0
      %819 = vdwg.mxu0
      %v820 = vmul.f32 %v815, 0.35355338
      %v821 = vadd.f32 %v820, %v594
      %v822 = vsel %vm542, %v821, -inf
      %823 = vmax.xlane.f32.xlu0 %v822
      %v824 = vpop.xlane.xlu0 %823
      %v825 = vsub.f32 %v821, %v824
      %v826 = vmul.f32 %v825, 1.442695
      %v827 = vpow.pop %v826
      %v828 = vsel %vm542, %v827, 0.0
      %829 = vadd.xlane.f32.xlu0 %v828
      %v830 = vpop.xlane.xlu0 %829
      %v831 = vrcp.pop %v830
      %v832 = vmul.f32 %v827, %v831
      %v833 = vpack.c.bf16 %v832, %v832
      %834 = vrot.lane.b32.xlu0 %v538, 48
      %v835 = vpop.permute.xlu0 %834
      %v837 = vsel %vm542, %v833, 0
      %v840 = vsel %vm614, %v835, 0
      %842 = vmatprep.subr.bf16.mxu0 0
      %843 = vmatpush1.bf16.msra.mxu0 0
      %844 = vmatprep.subr.bf16.mxu0 0
      %845 = vmatpush1.bf16.msra.mxu0 0
      %846 = vmatprep.subr.bf16.mxu0 0
      %847 = vmatpush1.bf16.msra.mxu0 0
      %848 = vmatprep.subr.bf16.mxu0 0
      %849 = vmatpush1.bf16.msra.mxu0 0
      %850 = vmatprep.subr.bf16.mxu0 0
      %851 = vmatpush1.bf16.msra.mxu0 0
      %852 = vmatprep.subr.bf16.mxu0 0
      %853 = vmatpush1.bf16.msra.mxu0 0
      %854 = vmatprep.subr.bf16.mxu0 0
      %855 = vmatpush1.bf16.msra.mxu0 0
      %856 = vmatprep.subr.bf16.mxu0 0
      %857 = vmatpush1.bf16.msra.mxu0 %v840
      %858 = vmatprep.subr.bf16.mxu0 0
      %859 = vmatpush2.bf16.msra.mxu0 0
      %860 = vmatprep.subr.bf16.mxu0 0
      %861 = vmatpush2.bf16.msra.mxu0 0
      %862 = vmatprep.subr.bf16.mxu0 0
      %863 = vmatpush2.bf16.msra.mxu0 0
      %864 = vmatprep.subr.bf16.mxu0 0
      %865 = vmatpush2.bf16.msra.mxu0 0
      %866 = vmatprep.subr.bf16.mxu0 0
      %867 = vmatpush2.bf16.msra.mxu0 0
      %868 = vmatprep.subr.bf16.mxu0 0
      %869 = vmatpush2.bf16.msra.mxu0 0
      %870 = vmatprep.subr.bf16.mxu0 0
      %871 = vmatpush2.bf16.msra.mxu0 0
      %872 = vmatprep.subr.bf16.mxu0 0
      %873 = vmatpush2.bf16.msra.mxu0 0
      %874 = vmatprep.mubr.bf16.mxu0 0
      %875 = vmatmul.mubr.bf16.gmra.mxu0 %v837
      %v876 = vpop.f32.mrf.mxu0
      %v877 = vadd.f32 0.0, %v876
      %v878 = vpop.f32.mrf.mxu0
      %v879 = vpop.f32.mrf.mxu0
      %v880 = vpop.f32.mrf.mxu0
      %881 = vdwg.mxu0
      %882 = vrot.lane.b32.xlu0 %v538, 104
      %v883 = vpop.permute.xlu0 %882
      %884 = vrot.lane.b32.xlu0 %v538, 72
      %v885 = vpop.permute.xlu0 %884
      %v887 = vsel %vm542, %v883, 0
      %v890 = vsel %vm542, %v885, 0
      %892 = vmatprep.subr.bf16.mxu0 0
      %893 = vmatpush1.bf16.xpose.msra.mxu0 0
      %894 = vmatprep.subr.bf16.mxu0 0
      %895 = vmatpush1.bf16.xpose.msra.mxu0 0
      %896 = vmatprep.subr.bf16.mxu0 0
      %897 = vmatpush1.bf16.xpose.msra.mxu0 0
      %898 = vmatprep.subr.bf16.mxu0 0
      %899 = vmatpush1.bf16.xpose.msra.mxu0 0
      %900 = vmatprep.subr.bf16.mxu0 0
      %901 = vmatpush1.bf16.xpose.msra.mxu0 0
      %902 = vmatprep.subr.bf16.mxu0 0
      %903 = vmatpush1.bf16.xpose.msra.mxu0 0
      %904 = vmatprep.subr.bf16.mxu0 0
      %905 = vmatpush1.bf16.xpose.msra.mxu0 0
      %906 = vmatprep.subr.bf16.mxu0 0
      %907 = vmatpush1.bf16.xpose.msra.mxu0 %v890
      %908 = vmatprep.subr.bf16.mxu0 0
      %909 = vmatpush2.bf16.xpose.msra.mxu0 0
      %910 = vmatprep.subr.bf16.mxu0 0
      %911 = vmatpush2.bf16.xpose.msra.mxu0 0
      %912 = vmatprep.subr.bf16.mxu0 0
      %913 = vmatpush2.bf16.xpose.msra.mxu0 0
      %914 = vmatprep.subr.bf16.mxu0 0
      %915 = vmatpush2.bf16.xpose.msra.mxu0 0
      %916 = vmatprep.subr.bf16.mxu0 0
      %917 = vmatpush2.bf16.xpose.msra.mxu0 0
      %918 = vmatprep.subr.bf16.mxu0 0
      %919 = vmatpush2.bf16.xpose.msra.mxu0 0
      %920 = vmatprep.subr.bf16.mxu0 0
      %921 = vmatpush2.bf16.xpose.msra.mxu0 0
      %922 = vmatprep.subr.bf16.mxu0 0
      %923 = vmatpush2.bf16.xpose.msra.mxu0 0
      %924 = vmatprep.mubr.bf16.mxu0 0
      %925 = vmatmul.mubr.bf16.gmra.mxu0 %v887
      %v926 = vpop.f32.mrf.mxu0
      %v927 = vadd.f32 0.0, %v926
      %v928 = vpop.f32.mrf.mxu0
      %v929 = vpop.f32.mrf.mxu0
      %v930 = vpop.f32.mrf.mxu0
      %931 = vdwg.mxu0
      %v932 = vmul.f32 %v927, 0.35355338
      %v933 = vadd.f32 %v932, %v594
      %v934 = vsel %vm542, %v933, -inf
      %935 = vmax.xlane.f32.xlu0 %v934
      %v936 = vpop.xlane.xlu0 %935
      %v937 = vsub.f32 %v933, %v936
      %v938 = vmul.f32 %v937, 1.442695
      %v939 = vpow.pop %v938
      %v940 = vsel %vm542, %v939, 0.0
      %941 = vadd.xlane.f32.xlu0 %v940
      %v942 = vpop.xlane.xlu0 %941
      %v943 = vrcp.pop %v942
      %v944 = vmul.f32 %v939, %v943
      %v945 = vpack.c.bf16 %v944, %v944
      %946 = vrot.lane.b32.xlu0 %v538, 40
      %v947 = vpop.permute.xlu0 %946
      %v949 = vsel %vm542, %v945, 0
      %v952 = vsel %vm614, %v947, 0
      %954 = vmatprep.subr.bf16.mxu0 0
      %955 = vmatpush1.bf16.msra.mxu0 0
      %956 = vmatprep.subr.bf16.mxu0 0
      %957 = vmatpush1.bf16.msra.mxu0 0
      %958 = vmatprep.subr.bf16.mxu0 0
      %959 = vmatpush1.bf16.msra.mxu0 0
      %960 = vmatprep.subr.bf16.mxu0 0
      %961 = vmatpush1.bf16.msra.mxu0 0
      %962 = vmatprep.subr.bf16.mxu0 0
      %963 = vmatpush1.bf16.msra.mxu0 0
      %964 = vmatprep.subr.bf16.mxu0 0
      %965 = vmatpush1.bf16.msra.mxu0 0
      %966 = vmatprep.subr.bf16.mxu0 0
      %967 = vmatpush1.bf16.msra.mxu0 0
      %968 = vmatprep.subr.bf16.mxu0 0
      %969 = vmatpush1.bf16.msra.mxu0 %v952
      %970 = vmatprep.subr.bf16.mxu0 0
      %971 = vmatpush2.bf16.msra.mxu0 0
      %972 = vmatprep.subr.bf16.mxu0 0
      %973 = vmatpush2.bf16.msra.mxu0 0
      %974 = vmatprep.subr.bf16.mxu0 0
      %975 = vmatpush2.bf16.msra.mxu0 0
      %976 = vmatprep.subr.bf16.mxu0 0
      %977 = vmatpush2.bf16.msra.mxu0 0
      %978 = vmatprep.subr.bf16.mxu0 0
      %979 = vmatpush2.bf16.msra.mxu0 0
      %980 = vmatprep.subr.bf16.mxu0 0
      %981 = vmatpush2.bf16.msra.mxu0 0
      %982 = vmatprep.subr.bf16.mxu0 0
      %983 = vmatpush2.bf16.msra.mxu0 0
      %984 = vmatprep.subr.bf16.mxu0 0
      %985 = vmatpush2.bf16.msra.mxu0 0
      %986 = vmatprep.mubr.bf16.mxu0 0
      %987 = vmatmul.mubr.bf16.gmra.mxu0 %v949
      %v988 = vpop.f32.mrf.mxu0
      %v989 = vadd.f32 0.0, %v988
      %v990 = vpop.f32.mrf.mxu0
      %v991 = vpop.f32.mrf.mxu0
      %v992 = vpop.f32.mrf.mxu0
      %993 = vdwg.mxu0
      %995 = vrot.lane.b32.xlu0 %v765, 8
      %v996 = vpop.permute.xlu0 %995
      %999 = vrot.lane.b32.xlu0 %v877, 16
      %v1000 = vpop.permute.xlu0 %999
      %1003 = vrot.lane.b32.xlu0 %v989, 24
      %v1004 = vpop.permute.xlu0 %1003
      %v1006 = vsel %vm542, %v653, %v996
      %vm1007 = vcmask 130048
      %v1008 = vsel %vm1007, %v1006, %v1000
      %vm1009 = vcmask 195584
      %v1010 = vsel %vm1009, %v1008, %v1004
      %v1011 = vpack.c.bf16 %v1010, %v1010
      %v1012 = vld [vmem:[%s4] sm:$0xff]
      %v1013 = vld [vmem:[%s4 + $0x8] sm:$0xff]
      %v1014 = vld [vmem:[%s4 + $0x10] sm:$0xff]
      %v1015 = vld [vmem:[%s4 + $0x18] sm:$0xff]
      %v1016 = vpack.c.bf16 %v1013, %v1012
      %v1017 = vpack.c.bf16 %v1015, %v1014
      %v1018 = vld [vmem:[%s5] sm:$0x1]
      %v1020 = vlaneseq
      %v1021 = vshrl.u32 %v1020, 7
      %v1022 = vsub.s32 0, %v1021
      %v1023 = vrot.slane %v1018, %v1022
      %v1026 = vsel %vm494, %v1011, 0
      %1028 = vmatprep.subr.bf16.mxu0 0
      %1029 = vmatpush1.bf16.msra.mxu0 0
      %1030 = vmatprep.subr.bf16.mxu0 0
      %1031 = vmatpush1.bf16.msra.mxu0 0
      %1032 = vmatprep.subr.bf16.mxu0 0
      %1033 = vmatpush1.bf16.msra.mxu0 0
      %1034 = vmatprep.subr.bf16.mxu0 0
      %1035 = vmatpush1.bf16.msra.mxu0 0
      %1036 = vmatprep.subr.bf16.mxu0 0
      %1037 = vmatpush1.bf16.msra.mxu0 0
      %1038 = vmatprep.subr.bf16.mxu0 0
      %1039 = vmatpush1.bf16.msra.mxu0 0
      %1040 = vmatprep.subr.bf16.mxu0 0
      %1041 = vmatpush1.bf16.msra.mxu0 %v1017
      %1042 = vmatprep.subr.bf16.mxu0 0
      %1043 = vmatpush1.bf16.msra.mxu0 %v1016
      %1044 = vmatprep.subr.bf16.mxu0 0
      %1045 = vmatpush2.bf16.msra.mxu0 0
      %1046 = vmatprep.subr.bf16.mxu0 0
      %1047 = vmatpush2.bf16.msra.mxu0 0
      %1048 = vmatprep.subr.bf16.mxu0 0
      %1049 = vmatpush2.bf16.msra.mxu0 0
      %1050 = vmatprep.subr.bf16.mxu0 0
      %1051 = vmatpush2.bf16.msra.mxu0 0
      %1052 = vmatprep.subr.bf16.mxu0 0
      %1053 = vmatpush2.bf16.msra.mxu0 0
      %1054 = vmatprep.subr.bf16.mxu0 0
      %1055 = vmatpush2.bf16.msra.mxu0 0
      %1056 = vmatprep.subr.bf16.mxu0 0
      %1057 = vmatpush2.bf16.msra.mxu0 0
      %1058 = vmatprep.subr.bf16.mxu0 0
      %1059 = vmatpush2.bf16.msra.mxu0 0
      %1060 = vmatprep.mubr.bf16.mxu0 0
      %1061 = vmatmul.mubr.bf16.gmra.mxu0 %v1026
      %v1062 = vpop.f32.mrf.mxu0
      %v1063 = vadd.f32 %v1023, %v1062
      %v1064 = vpop.f32.mrf.mxu0
      %v1065 = vpop.f32.mrf.mxu0
      %v1066 = vpop.f32.mrf.mxu0
      %1067 = vdwg.mxu0
      %v1068 = vadd.f32 %v1063, %v478
      %v1069 = vld [vmem:[%s6] sm:$0x1]
      %v1070 = vld [vmem:[%s7] sm:$0x1]
      %v1071 = vsel %vm494, %v1068, 0.0
      %1072 = vadd.xlane.f32.xlu0 %v1071
      %v1073 = vpop.xlane.xlu0 %1072
      %v1074 = vrcp.pop 32.0
      %v1075 = vmul.f32 %v1073, %v1074
      %v1076 = vsub.f32 %v1068, %v1075
      %v1077 = vmul.f32 %v1076, %v1076
      %v1078 = vsel %vm494, %v1077, 0.0
      %1079 = vadd.xlane.f32.xlu0 %v1078
      %v1080 = vpop.xlane.xlu0 %1079
      %v1081 = vmul.f32 %v1080, %v1074
      %v1082 = vadd.f32 %v1081, 1e-12
      %v1083 = vrsqrt.pop %v1082
      %v1084 = vmul.f32 %v1076, %v1083
      %v1086 = vlaneseq
      %v1087 = vshrl.u32 %v1086, 7
      %v1088 = vsub.s32 0, %v1087
      %v1089 = vrot.slane %v1069, %v1088
      %v1091 = vmul.f32 %v1084, %v1089
      %v1093 = vlaneseq
      %v1094 = vshrl.u32 %v1093, 7
      %v1095 = vsub.s32 0, %v1094
      %v1096 = vrot.slane %v1070, %v1095
      %v1098 = vadd.f32 %v1091, %v1096
      %v1099 = vpack.c.bf16 %v1098, %v1098
      %v1100 = vld [vmem:[%s8] sm:$0xff]
      %v1101 = vld [vmem:[%s8 + $0x8] sm:$0xff]
      %v1102 = vld [vmem:[%s8 + $0x10] sm:$0xff]
      %v1103 = vld [vmem:[%s8 + $0x18] sm:$0xff]
      %v1104 = vpack.c.bf16 %v1101, %v1100
      %v1105 = vpack.c.bf16 %v1103, %v1102
      %v1106 = vld [vmem:[%s9] sm:$0x1]
      %v1108 = vlaneseq
      %v1109 = vshrl.u32 %v1108, 7
      %v1110 = vsub.s32 0, %v1109
      %v1111 = vrot.slane %v1106, %v1110
      %v1114 = vsel %vm494, %v1099, 0
      %1116 = vmatprep.subr.bf16.mxu0 0
      %1117 = vmatpush1.bf16.msra.mxu0 0
      %1118 = vmatprep.subr.bf16.mxu0 0
      %1119 = vmatpush1.bf16.msra.mxu0 0
      %1120 = vmatprep.subr.bf16.mxu0 0
      %1121 = vmatpush1.bf16.msra.mxu0 0
      %1122 = vmatprep.subr.bf16.mxu0 0
      %1123 = vmatpush1.bf16.msra.mxu0 0
      %1124 = vmatprep.subr.bf16.mxu0 0
      %1125 = vmatpush1.bf16.msra.mxu0 0
      %1126 = vmatprep.subr.bf16.mxu0 0
      %1127 = vmatpush1.bf16.msra.mxu0 0
      %1128 = vmatprep.subr.bf16.mxu0 0
      %1129 = vmatpush1.bf16.msra.mxu0 %v1105
      %1130 = vmatprep.subr.bf16.mxu0 0
      %1131 = vmatpush1.bf16.msra.mxu0 %v1104
      %1132 = vmatprep.subr.bf16.mxu0 0
      %1133 = vmatpush2.bf16.msra.mxu0 0
      %1134 = vmatprep.subr.bf16.mxu0 0
      %1135 = vmatpush2.bf16.msra.mxu0 0
      %1136 = vmatprep.subr.bf16.mxu0 0
      %1137 = vmatpush2.bf16.msra.mxu0 0
      %1138 = vmatprep.subr.bf16.mxu0 0
      %1139 = vmatpush2.bf16.msra.mxu0 0
      %1140 = vmatprep.subr.bf16.mxu0 0
      %1141 = vmatpush2.bf16.msra.mxu0 0
      %1142 = vmatprep.subr.bf16.mxu0 0
      %1143 = vmatpush2.bf16.msra.mxu0 0
      %1144 = vmatprep.subr.bf16.mxu0 0
      %1145 = vmatpush2.bf16.msra.mxu0 0
      %1146 = vmatprep.subr.bf16.mxu0 0
      %1147 = vmatpush2.bf16.msra.mxu0 0
      %1148 = vmatprep.mubr.bf16.mxu0 0
      %1149 = vmatmul.mubr.bf16.gmra.mxu0 %v1114
      %v1150 = vpop.f32.mrf.mxu0
      %v1151 = vadd.f32 %v1111, %v1150
      %v1152 = vpop.f32.mrf.mxu0
      %v1153 = vpop.f32.mrf.mxu0
      %v1154 = vpop.f32.mrf.mxu0
      %1155 = vdwg.mxu0
      %v1156 = vmul.f32 %v1151, 0.5
      %v1157 = vmul.f32 %v1151, 0.70710677
      %v1158 = verf.f32.pop %v1157
      %v1159 = vadd.f32 %v1158, 1.0
      %v1160 = vmul.f32 %v1156, %v1159
      %v1161 = vpack.c.bf16 %v1160, %v1160
      %v1162 = vld [vmem:[%s10] sm:$0xff]
      %v1163 = vld [vmem:[%s10 + $0x8] sm:$0xff]
      %v1164 = vld [vmem:[%s10 + $0x10] sm:$0xff]
      %v1165 = vld [vmem:[%s10 + $0x18] sm:$0xff]
      %v1166 = vld [vmem:[%s10 + $0x20] sm:$0xff]
      %v1167 = vld [vmem:[%s10 + $0x28] sm:$0xff]
      %v1168 = vld [vmem:[%s10 + $0x30] sm:$0xff]
      %v1169 = vld [vmem:[%s10 + $0x38] sm:$0xff]
      %v1170 = vpack.c.bf16 %v1163, %v1162
      %v1171 = vpack.c.bf16 %v1165, %v1164
      %v1172 = vpack.c.bf16 %v1167, %v1166
      %v1173 = vpack.c.bf16 %v1169, %v1168
      %v1174 = vld [vmem:[%s11] sm:$0x1]
      %v1176 = vlaneseq
      %v1177 = vshrl.u32 %v1176, 7
      %v1178 = vsub.s32 0, %v1177
      %v1179 = vrot.slane %v1174, %v1178
      %vm1181 = vcmask 523264
      %v1183 = vsel %vm1181, %v1161, 0
      %1185 = vmatprep.subr.bf16.mxu0 0
      %1186 = vmatpush1.bf16.msra.mxu0 0
      %1187 = vmatprep.subr.bf16.mxu0 0
      %1188 = vmatpush1.bf16.msra.mxu0 0
      %1189 = vmatprep.subr.bf16.mxu0 0
      %1190 = vmatpush1.bf16.msra.mxu0 0
      %1191 = vmatprep.subr.bf16.mxu0 0
      %1192 = vmatpush1.bf16.msra.mxu0 0
      %1193 = vmatprep.subr.bf16.mxu0 0
      %1194 = vmatpush1.bf16.msra.mxu0 %v1173
      %1195 = vmatprep.subr.bf16.mxu0 0
      %1196 = vmatpush1.bf16.msra.mxu0 %v1172
      %1197 = vmatprep.subr.bf16.mxu0 0
      %1198 = vmatpush1.bf16.msra.mxu0 %v1171
      %1199 = vmatprep.subr.bf16.mxu0 0
      %1200 = vmatpush1.bf16.msra.mxu0 %v1170
      %1201 = vmatprep.subr.bf16.mxu0 0
      %1202 = vmatpush2.bf16.msra.mxu0 0
      %1203 = vmatprep.subr.bf16.mxu0 0
      %1204 = vmatpush2.bf16.msra.mxu0 0
      %1205 = vmatprep.subr.bf16.mxu0 0
      %1206 = vmatpush2.bf16.msra.mxu0 0
      %1207 = vmatprep.subr.bf16.mxu0 0
      %1208 = vmatpush2.bf16.msra.mxu0 0
      %1209 = vmatprep.subr.bf16.mxu0 0
      %1210 = vmatpush2.bf16.msra.mxu0 0
      %1211 = vmatprep.subr.bf16.mxu0 0
      %1212 = vmatpush2.bf16.msra.mxu0 0
      %1213 = vmatprep.subr.bf16.mxu0 0
      %1214 = vmatpush2.bf16.msra.mxu0 0
      %1215 = vmatprep.subr.bf16.mxu0 0
      %1216 = vmatpush2.bf16.msra.mxu0 0
      %1217 = vmatprep.mubr.bf16.mxu0 0
      %1218 = vmatmul.mubr.bf16.gmra.mxu0 %v1183
      %v1219 = vpop.f32.mrf.mxu0
      %v1220 = vadd.f32 %v1179, %v1219
      %v1221 = vpop.f32.mrf.mxu0
      %v1222 = vpop.f32.mrf.mxu0
      %v1223 = vpop.f32.mrf.mxu0
      %1224 = vdwg.mxu0
      %v1225 = vadd.f32 %v1220, %v1098
      %v1226 = vld [vmem:[%s12] sm:$0x1]
      %v1227 = vld [vmem:[%s13] sm:$0x1]
      %v1228 = vsel %vm494, %v1225, 0.0
      %1229 = vadd.xlane.f32.xlu0 %v1228
      %v1230 = vpop.xlane.xlu0 %1229
      %v1231 = vmul.f32 %v1230, %v1074
      %v1232 = vsub.f32 %v1225, %v1231
      %v1233 = vmul.f32 %v1232, %v1232
      %v1234 = vsel %vm494, %v1233, 0.0
      %1235 = vadd.xlane.f32.xlu0 %v1234
      %v1236 = vpop.xlane.xlu0 %1235
      %v1237 = vmul.f32 %v1236, %v1074
      %v1238 = vadd.f32 %v1237, 1e-12
      %v1239 = vrsqrt.pop %v1238
      %v1240 = vmul.f32 %v1232, %v1239
      %v1242 = vlaneseq
      %v1243 = vshrl.u32 %v1242, 7
      %v1244 = vsub.s32 0, %v1243
      %v1245 = vrot.slane %v1226, %v1244
      %v1247 = vmul.f32 %v1240, %v1245
      %v1249 = vlaneseq
      %v1250 = vshrl.u32 %v1249, 7
      %v1251 = vsub.s32 0, %v1250
      %v1252 = vrot.slane %v1227, %v1251
      %v1254 = vadd.f32 %v1247, %v1252
      %1255 = vst.msk [vmem:[%s476] sm:$0xff] %vm494, %v1254
      %p1256 = scmp.lt.s32.totalorder %s25, 1
      %s1257 = scalar_select %p1256, %s25, 1
      %s1258 = smul.addr %s1257, 8
      %s1259 = scalar_lea.vmem %s14, %s1258
      // Predicated region
      $region77: #{_lambda_.8} parent=75 // pred_check
        %p1260 = pneg %p347
      $region78: #{_lambda_.8} parent=75 // pred_check_branch
        %1262 = sbr.rel (%p1260) target = $region80
      $region79: #{_lambda_.8} parent=75 // pred_region
        _
      $region80: #{_lambda_.8} parent=75 // pred_fallthru
        _
    $region76: #{_lambda_.8} parent=5 // pred_fallthru
      _
    %p1263 = scmp.le.s32.totalorder 2, %s20
    // Predicated region
    $region81: #{_lambda_.8} parent=5 // pred_check
      %p1264 = pneg %p1263
    $region82: #{_lambda_.8} parent=5 // pred_check_branch
      %1266 = sbr.rel (%p1264) target = $region84
    $region83: #{_lambda_.8} parent=5 // pred_region
      %s1267 = ssub.s32 %s20, 2
      // Predicated region
      $region85: #{_lambda_.8} parent=83 // pred_check
        %p1268 = pneg %p353
      $region86: #{_lambda_.8} parent=83 // pred_check_branch
        %1270 = sbr.rel (%p1268) target = $region88
      $region87: #{_lambda_.8} parent=83 // pred_region
        %p1271 = scmp.lt.s32.totalorder %s26, 1
        %s1272 = scalar_select %p1271, %s26, 1
        %s1273 = smul.addr %s1272, 8
        %s1274 = scalar_lea.vmem %s14, %s1273
      $region88: #{_lambda_.8} parent=83 // pred_fallthru
        _
    $region84: #{_lambda_.8} parent=5 // pred_fallthru
      _
  $region6: #{_lambda_.8} parent=0 // loop_footer
    %s24 = sadd.s32 1, %s20
  $region7: #{_lambda_.8} parent=0 // loop_footer_branch
    %19 = sbr.rel target = $region3
  $region8: #{_lambda_.8} parent=0 // loop_exit
    _

// kernel: _lambda_.13
$region0: #{_lambda_.13}
  #allocation0 [shape = 'u32[]', space=smem, size = 0x4, offset = 0x4, fixed_abs, tag = 'smem constant byte address 0x4 - core index']
  #allocation1 [shape = 'u32[144,128]{1,0:T(1,128)}', space=vmem, size = 0x12000, scoped, tag = 'internal scratch']
  %s0 = inlined_call_operand.vmem [shape: f32[2,8,32], index: 0, kind: input, shape index: {}]
  %s1 = inlined_call_operand.vmem [shape: f32[2,1,8], index: 1, kind: input, shape index: {}]
  %s2 = inlined_call_operand.vmem [shape: f32[32,96], index: 2, kind: input, shape index: {}]
  %s3 = inlined_call_operand.vmem [shape: f32[1,96], index: 3, kind: input, shape index: {}]
  %s4 = inlined_call_operand.vmem [shape: f32[32,32], index: 4, kind: input, shape index: {}]
  %s5 = inlined_call_operand.vmem [shape: f32[1,32], index: 5, kind: input, shape index: {}]
  %s6 = inlined_call_operand.vmem [shape: f32[1,32], index: 6, kind: input, shape index: {}]
  %s7 = inlined_call_operand.vmem [shape: f32[1,32], index: 7, kind: input, shape index: {}]
  %s8 = inlined_call_operand.vmem [shape: f32[32,64], index: 8, kind: input, shape index: {}]
  %s9 = inlined_call_operand.vmem [shape: f32[1,64], index: 9, kind: input, shape index: {}]
  %s10 = inlined_call_operand.vmem [shape: f32[64,32], index: 10, kind: input, shape index: {}]
  %s11 = inlined_call_operand.vmem [shape: f32[1,32], index: 11, kind: input, shape index: {}]
  %s12 = inlined_call_operand.vmem [shape: f32[1,32], index: 12, kind: input, shape index: {}]
  %s13 = inlined_call_operand.vmem [shape: f32[1,32], index: 13, kind: input, shape index: {}]
  %s14 = inlined_call_operand.vmem [shape: f32[2,8,32], index: 14, kind: output, shape index: {}]
  %s15 = sld [smem:[#allocation0]]
  $region89: #{_lambda_.13} parent=0
    _
  %s17 = ssub.s32 1, %s15
  %s18 = scalar_select 0, %s17, %s15
  loop: start=0, step=1, limit=4
  $region2: #{_lambda_.13} parent=0 // loop_pre_header
    _
  $region3: #{_lambda_.13} parent=0 // loop_header
    %s20 = sphi 0, %s24
    %p21 = scmp.ge.s32.totalorder %s20, 4
    %s30 = sphi 0, %s32
    %s33 = sphi 0, %s30
    %s34 = sphi 0, %s33
    %s50 = sphi 0, %s34
    %s56 = sphi 0, %s58
    %s59 = sphi 0, %s56
    %s60 = sphi 0, %s59
    %s76 = sphi 0, %s60
    %s80 = sphi 0, %s80
    %s82 = sphi 0, %s80
    %s83 = sphi 0, %s82
    %s97 = sphi 0, %s83
    %s101 = sphi 0, %s101
    %s103 = sphi 0, %s101
    %s104 = sphi 0, %s103
    %s118 = sphi 0, %s104
    %s122 = sphi 0, %s122
    %s124 = sphi 0, %s122
    %s125 = sphi 0, %s124
    %s139 = sphi 0, %s125
    %s143 = sphi 0, %s143
    %s145 = sphi 0, %s143
    %s146 = sphi 0, %s145
    %s160 = sphi 0, %s146
    %s164 = sphi 0, %s164
    %s166 = sphi 0, %s164
    %s167 = sphi 0, %s166
    %s181 = sphi 0, %s167
    %s185 = sphi 0, %s185
    %s187 = sphi 0, %s185
    %s188 = sphi 0, %s187
    %s202 = sphi 0, %s188
    %s206 = sphi 0, %s206
    %s208 = sphi 0, %s206
    %s209 = sphi 0, %s208
    %s223 = sphi 0, %s209
    %s227 = sphi 0, %s227
    %s229 = sphi 0, %s227
    %s230 = sphi 0, %s229
    %s244 = sphi 0, %s230
    %s248 = sphi 0, %s248
    %s250 = sphi 0, %s248
    %s251 = sphi 0, %s250
    %s265 = sphi 0, %s251
    %s269 = sphi 0, %s269
    %s271 = sphi 0, %s269
    %s272 = sphi 0, %s271
    %s286 = sphi 0, %s272
    %s290 = sphi 0, %s290
    %s292 = sphi 0, %s290
    %s293 = sphi 0, %s292
    %s307 = sphi 0, %s293
    %s311 = sphi 0, %s311
    %s313 = sphi 0, %s311
    %s314 = sphi 0, %s313
    %s328 = sphi 0, %s314
    %s334 = sphi 0, %s336
    %s337 = sphi 0, %s334
    %s338 = sphi 0, %s337
    %s354 = sphi 0, %s338
  $region4: #{_lambda_.13} parent=0 // loop_header_branch
    %23 = sbr.rel (%p21) target = $region8
  $region5: #{_lambda_.13} parent=0 // loop_body
    %s25 = ssub.s32 %s20, 1
    %s26 = ssub.s32 %s20, 2
    %s27 = sadd.s32 %s20, 1
    %s28 = ssub.s32 %s20, %s27
    %p29 = scmp.eq.s32.totalorder %s28, 0
    %s31 = sadd.s32 %s30, 1
    %s32 = scalar_select %p29, %s30, %s31
    %p35 = pneg %p29
    %p36 = scmp.eq.s32.totalorder %s20, 1
    %p37 = por %p35, %p36
    %p38 = scmp.ne.s32.totalorder %s30, %s33
    %p39 = scmp.eq.s32.totalorder %s20, 0
    %p40 = por %p38, %p39
    %p41 = scmp.ne.s32.totalorder %s30, %s33
    %p42 = scmp.eq.s32.totalorder %s25, 1
    %p43 = por %p41, %p42
    %p44 = scmp.ne.s32.totalorder %s33, %s34
    %p45 = scmp.eq.s32.totalorder %s25, 0
    %p46 = por %p44, %p45
    %p47 = scmp.ne.s32.totalorder %s33, %s34
    %p48 = scmp.eq.s32.totalorder %s26, 1
    %p49 = por %p47, %p48
    %p51 = scmp.ne.s32.totalorder %s34, %s50
    %p52 = scmp.eq.s32.totalorder %s26, 0
    %p53 = por %p51, %p52
    %s54 = ssub.s32 %s20, %s27
    %p55 = scmp.eq.s32.totalorder %s54, 0
    %s57 = sadd.s32 %s56, 1
    %s58 = scalar_select %p55, %s56, %s57
    %p61 = pneg %p55
    %p62 = scmp.eq.s32.totalorder %s20, 1
    %p63 = por %p61, %p62
    %p64 = scmp.ne.s32.totalorder %s56, %s59
    %p65 = scmp.eq.s32.totalorder %s20, 0
    %p66 = por %p64, %p65
    %p67 = scmp.ne.s32.totalorder %s56, %s59
    %p68 = scmp.eq.s32.totalorder %s25, 1
    %p69 = por %p67, %p68
    %p70 = scmp.ne.s32.totalorder %s59, %s60
    %p71 = scmp.eq.s32.totalorder %s25, 0
    %p72 = por %p70, %p71
    %p73 = scmp.ne.s32.totalorder %s59, %s60
    %p74 = scmp.eq.s32.totalorder %s26, 1
    %p75 = por %p73, %p74
    %p77 = scmp.ne.s32.totalorder %s60, %s76
    %p78 = scmp.eq.s32.totalorder %s26, 0
    %p79 = por %p77, %p78
    %s81 = sadd.s32 %s80, 1
    %p84 = scmp.eq.s32.totalorder %s20, 1
    %p85 = scmp.ne.s32.totalorder %s80, %s82
    %p86 = scmp.eq.s32.totalorder %s20, 0
    %p87 = por %p85, %p86
    %p88 = scmp.ne.s32.totalorder %s80, %s82
    %p89 = scmp.eq.s32.totalorder %s25, 1
    %p90 = por %p88, %p89
    %p91 = scmp.ne.s32.totalorder %s82, %s83
    %p92 = scmp.eq.s32.totalorder %s25, 0
    %p93 = por %p91, %p92
    %p94 = scmp.ne.s32.totalorder %s82, %s83
    %p95 = scmp.eq.s32.totalorder %s26, 1
    %p96 = por %p94, %p95
    %p98 = scmp.ne.s32.totalorder %s83, %s97
    %p99 = scmp.eq.s32.totalorder %s26, 0
    %p100 = por %p98, %p99
    %s102 = sadd.s32 %s101, 1
    %p105 = scmp.eq.s32.totalorder %s20, 1
    %p106 = scmp.ne.s32.totalorder %s101, %s103
    %p107 = scmp.eq.s32.totalorder %s20, 0
    %p108 = por %p106, %p107
    %p109 = scmp.ne.s32.totalorder %s101, %s103
    %p110 = scmp.eq.s32.totalorder %s25, 1
    %p111 = por %p109, %p110
    %p112 = scmp.ne.s32.totalorder %s103, %s104
    %p113 = scmp.eq.s32.totalorder %s25, 0
    %p114 = por %p112, %p113
    %p115 = scmp.ne.s32.totalorder %s103, %s104
    %p116 = scmp.eq.s32.totalorder %s26, 1
    %p117 = por %p115, %p116
    %p119 = scmp.ne.s32.totalorder %s104, %s118
    %p120 = scmp.eq.s32.totalorder %s26, 0
    %p121 = por %p119, %p120
    %s123 = sadd.s32 %s122, 1
    %p126 = scmp.eq.s32.totalorder %s20, 1
    %p127 = scmp.ne.s32.totalorder %s122, %s124
    %p128 = scmp.eq.s32.totalorder %s20, 0
    %p129 = por %p127, %p128
    %p130 = scmp.ne.s32.totalorder %s122, %s124
    %p131 = scmp.eq.s32.totalorder %s25, 1
    %p132 = por %p130, %p131
    %p133 = scmp.ne.s32.totalorder %s124, %s125
    %p134 = scmp.eq.s32.totalorder %s25, 0
    %p135 = por %p133, %p134
    %p136 = scmp.ne.s32.totalorder %s124, %s125
    %p137 = scmp.eq.s32.totalorder %s26, 1
    %p138 = por %p136, %p137
    %p140 = scmp.ne.s32.totalorder %s125, %s139
    %p141 = scmp.eq.s32.totalorder %s26, 0
    %p142 = por %p140, %p141
    %s144 = sadd.s32 %s143, 1
    %p147 = scmp.eq.s32.totalorder %s20, 1
    %p148 = scmp.ne.s32.totalorder %s143, %s145
    %p149 = scmp.eq.s32.totalorder %s20, 0
    %p150 = por %p148, %p149
    %p151 = scmp.ne.s32.totalorder %s143, %s145
    %p152 = scmp.eq.s32.totalorder %s25, 1
    %p153 = por %p151, %p152
    %p154 = scmp.ne.s32.totalorder %s145, %s146
    %p155 = scmp.eq.s32.totalorder %s25, 0
    %p156 = por %p154, %p155
    %p157 = scmp.ne.s32.totalorder %s145, %s146
    %p158 = scmp.eq.s32.totalorder %s26, 1
    %p159 = por %p157, %p158
    %p161 = scmp.ne.s32.totalorder %s146, %s160
    %p162 = scmp.eq.s32.totalorder %s26, 0
    %p163 = por %p161, %p162
    %s165 = sadd.s32 %s164, 1
    %p168 = scmp.eq.s32.totalorder %s20, 1
    %p169 = scmp.ne.s32.totalorder %s164, %s166
    %p170 = scmp.eq.s32.totalorder %s20, 0
    %p171 = por %p169, %p170
    %p172 = scmp.ne.s32.totalorder %s164, %s166
    %p173 = scmp.eq.s32.totalorder %s25, 1
    %p174 = por %p172, %p173
    %p175 = scmp.ne.s32.totalorder %s166, %s167
    %p176 = scmp.eq.s32.totalorder %s25, 0
    %p177 = por %p175, %p176
    %p178 = scmp.ne.s32.totalorder %s166, %s167
    %p179 = scmp.eq.s32.totalorder %s26, 1
    %p180 = por %p178, %p179
    %p182 = scmp.ne.s32.totalorder %s167, %s181
    %p183 = scmp.eq.s32.totalorder %s26, 0
    %p184 = por %p182, %p183
    %s186 = sadd.s32 %s185, 1
    %p189 = scmp.eq.s32.totalorder %s20, 1
    %p190 = scmp.ne.s32.totalorder %s185, %s187
    %p191 = scmp.eq.s32.totalorder %s20, 0
    %p192 = por %p190, %p191
    %p193 = scmp.ne.s32.totalorder %s185, %s187
    %p194 = scmp.eq.s32.totalorder %s25, 1
    %p195 = por %p193, %p194
    %p196 = scmp.ne.s32.totalorder %s187, %s188
    %p197 = scmp.eq.s32.totalorder %s25, 0
    %p198 = por %p196, %p197
    %p199 = scmp.ne.s32.totalorder %s187, %s188
    %p200 = scmp.eq.s32.totalorder %s26, 1
    %p201 = por %p199, %p200
    %p203 = scmp.ne.s32.totalorder %s188, %s202
    %p204 = scmp.eq.s32.totalorder %s26, 0
    %p205 = por %p203, %p204
    %s207 = sadd.s32 %s206, 1
    %p210 = scmp.eq.s32.totalorder %s20, 1
    %p211 = scmp.ne.s32.totalorder %s206, %s208
    %p212 = scmp.eq.s32.totalorder %s20, 0
    %p213 = por %p211, %p212
    %p214 = scmp.ne.s32.totalorder %s206, %s208
    %p215 = scmp.eq.s32.totalorder %s25, 1
    %p216 = por %p214, %p215
    %p217 = scmp.ne.s32.totalorder %s208, %s209
    %p218 = scmp.eq.s32.totalorder %s25, 0
    %p219 = por %p217, %p218
    %p220 = scmp.ne.s32.totalorder %s208, %s209
    %p221 = scmp.eq.s32.totalorder %s26, 1
    %p222 = por %p220, %p221
    %p224 = scmp.ne.s32.totalorder %s209, %s223
    %p225 = scmp.eq.s32.totalorder %s26, 0
    %p226 = por %p224, %p225
    %s228 = sadd.s32 %s227, 1
    %p231 = scmp.eq.s32.totalorder %s20, 1
    %p232 = scmp.ne.s32.totalorder %s227, %s229
    %p233 = scmp.eq.s32.totalorder %s20, 0
    %p234 = por %p232, %p233
    %p235 = scmp.ne.s32.totalorder %s227, %s229
    %p236 = scmp.eq.s32.totalorder %s25, 1
    %p237 = por %p235, %p236
    %p238 = scmp.ne.s32.totalorder %s229, %s230
    %p239 = scmp.eq.s32.totalorder %s25, 0
    %p240 = por %p238, %p239
    %p241 = scmp.ne.s32.totalorder %s229, %s230
    %p242 = scmp.eq.s32.totalorder %s26, 1
    %p243 = por %p241, %p242
    %p245 = scmp.ne.s32.totalorder %s230, %s244
    %p246 = scmp.eq.s32.totalorder %s26, 0
    %p247 = por %p245, %p246
    %s249 = sadd.s32 %s248, 1
    %p252 = scmp.eq.s32.totalorder %s20, 1
    %p253 = scmp.ne.s32.totalorder %s248, %s250
    %p254 = scmp.eq.s32.totalorder %s20, 0
    %p255 = por %p253, %p254
    %p256 = scmp.ne.s32.totalorder %s248, %s250
    %p257 = scmp.eq.s32.totalorder %s25, 1
    %p258 = por %p256, %p257
    %p259 = scmp.ne.s32.totalorder %s250, %s251
    %p260 = scmp.eq.s32.totalorder %s25, 0
    %p261 = por %p259, %p260
    %p262 = scmp.ne.s32.totalorder %s250, %s251
    %p263 = scmp.eq.s32.totalorder %s26, 1
    %p264 = por %p262, %p263
    %p266 = scmp.ne.s32.totalorder %s251, %s265
    %p267 = scmp.eq.s32.totalorder %s26, 0
    %p268 = por %p266, %p267
    %s270 = sadd.s32 %s269, 1
    %p273 = scmp.eq.s32.totalorder %s20, 1
    %p274 = scmp.ne.s32.totalorder %s269, %s271
    %p275 = scmp.eq.s32.totalorder %s20, 0
    %p276 = por %p274, %p275
    %p277 = scmp.ne.s32.totalorder %s269, %s271
    %p278 = scmp.eq.s32.totalorder %s25, 1
    %p279 = por %p277, %p278
    %p280 = scmp.ne.s32.totalorder %s271, %s272
    %p281 = scmp.eq.s32.totalorder %s25, 0
    %p282 = por %p280, %p281
    %p283 = scmp.ne.s32.totalorder %s271, %s272
    %p284 = scmp.eq.s32.totalorder %s26, 1
    %p285 = por %p283, %p284
    %p287 = scmp.ne.s32.totalorder %s272, %s286
    %p288 = scmp.eq.s32.totalorder %s26, 0
    %p289 = por %p287, %p288
    %s291 = sadd.s32 %s290, 1
    %p294 = scmp.eq.s32.totalorder %s20, 1
    %p295 = scmp.ne.s32.totalorder %s290, %s292
    %p296 = scmp.eq.s32.totalorder %s20, 0
    %p297 = por %p295, %p296
    %p298 = scmp.ne.s32.totalorder %s290, %s292
    %p299 = scmp.eq.s32.totalorder %s25, 1
    %p300 = por %p298, %p299
    %p301 = scmp.ne.s32.totalorder %s292, %s293
    %p302 = scmp.eq.s32.totalorder %s25, 0
    %p303 = por %p301, %p302
    %p304 = scmp.ne.s32.totalorder %s292, %s293
    %p305 = scmp.eq.s32.totalorder %s26, 1
    %p306 = por %p304, %p305
    %p308 = scmp.ne.s32.totalorder %s293, %s307
    %p309 = scmp.eq.s32.totalorder %s26, 0
    %p310 = por %p308, %p309
    %s312 = sadd.s32 %s311, 1
    %p315 = scmp.eq.s32.totalorder %s20, 1
    %p316 = scmp.ne.s32.totalorder %s311, %s313
    %p317 = scmp.eq.s32.totalorder %s20, 0
    %p318 = por %p316, %p317
    %p319 = scmp.ne.s32.totalorder %s311, %s313
    %p320 = scmp.eq.s32.totalorder %s25, 1
    %p321 = por %p319, %p320
    %p322 = scmp.ne.s32.totalorder %s313, %s314
    %p323 = scmp.eq.s32.totalorder %s25, 0
    %p324 = por %p322, %p323
    %p325 = scmp.ne.s32.totalorder %s313, %s314
    %p326 = scmp.eq.s32.totalorder %s26, 1
    %p327 = por %p325, %p326
    %p329 = scmp.ne.s32.totalorder %s314, %s328
    %p330 = scmp.eq.s32.totalorder %s26, 0
    %p331 = por %p329, %p330
    %s332 = ssub.s32 %s20, %s27
    %p333 = scmp.eq.s32.totalorder %s332, 0
    %s335 = sadd.s32 %s334, 1
    %s336 = scalar_select %p333, %s334, %s335
    %p339 = pneg %p333
    %p340 = scmp.eq.s32.totalorder %s20, 1
    %p341 = por %p339, %p340
    %p342 = scmp.ne.s32.totalorder %s334, %s337
    %p343 = scmp.eq.s32.totalorder %s20, 0
    %p344 = por %p342, %p343
    %p345 = scmp.ne.s32.totalorder %s334, %s337
    %p346 = scmp.eq.s32.totalorder %s25, 1
    %p347 = por %p345, %p346
    %p348 = scmp.ne.s32.totalorder %s337, %s338
    %p349 = scmp.eq.s32.totalorder %s25, 0
    %p350 = por %p348, %p349
    %p351 = scmp.ne.s32.totalorder %s337, %s338
    %p352 = scmp.eq.s32.totalorder %s26, 1
    %p353 = por %p351, %p352
    %p355 = scmp.ne.s32.totalorder %s338, %s354
    %p356 = scmp.eq.s32.totalorder %s26, 0
    %p357 = por %p355, %p356
    %p358 = scmp.le.s32.totalorder 1, %s20
    %p359 = scmp.lt.s32.totalorder %s20, 3
    %p360 = pnand %p358, %p359
    %p361 = pneg %p360
    // Predicated region
    $region9: #{_lambda_.13} parent=5 // pred_check
      _
    $region10: #{_lambda_.13} parent=5 // pred_check_branch
      %363 = sbr.rel (%p360) target = $region12
    $region11: #{_lambda_.13} parent=5 // pred_region
      %s364 = ssub.s32 %s20, 1
      // Predicated region
      $region13: #{_lambda_.13} parent=11 // pred_check
        %p365 = pneg %p93
      $region14: #{_lambda_.13} parent=11 // pred_check_branch
        %367 = sbr.rel (%p365) target = $region16
      $region15: #{_lambda_.13} parent=11 // pred_region
        _
      $region16: #{_lambda_.13} parent=11 // pred_fallthru
        _
      // Predicated region
      $region17: #{_lambda_.13} parent=11 // pred_check
        %p368 = pneg %p114
      $region18: #{_lambda_.13} parent=11 // pred_check_branch
        %370 = sbr.rel (%p368) target = $region20
      $region19: #{_lambda_.13} parent=11 // pred_region
        _
      $region20: #{_lambda_.13} parent=11 // pred_fallthru
        _
      // Predicated region
      $region21: #{_lambda_.13} parent=11 // pred_check
        %p371 = pneg %p135
      $region22: #{_lambda_.13} parent=11 // pred_check_branch
        %373 = sbr.rel (%p371) target = $region24
      $region23: #{_lambda_.13} parent=11 // pred_region
        _
      $region24: #{_lambda_.13} parent=11 // pred_fallthru
        _
      // Predicated region
      $region25: #{_lambda_.13} parent=11 // pred_check
        %p374 = pneg %p156
      $region26: #{_lambda_.13} parent=11 // pred_check_branch
        %376 = sbr.rel (%p374) target = $region28
      $region27: #{_lambda_.13} parent=11 // pred_region
        _
      $region28: #{_lambda_.13} parent=11 // pred_fallthru
        _
      // Predicated region
      $region29: #{_lambda_.13} parent=11 // pred_check
        %p377 = pneg %p177
      $region30: #{_lambda_.13} parent=11 // pred_check_branch
        %379 = sbr.rel (%p377) target = $region32
      $region31: #{_lambda_.13} parent=11 // pred_region
        _
      $region32: #{_lambda_.13} parent=11 // pred_fallthru
        _
      // Predicated region
      $region33: #{_lambda_.13} parent=11 // pred_check
        %p380 = pneg %p198
      $region34: #{_lambda_.13} parent=11 // pred_check_branch
        %382 = sbr.rel (%p380) target = $region36
      $region35: #{_lambda_.13} parent=11 // pred_region
        _
      $region36: #{_lambda_.13} parent=11 // pred_fallthru
        _
      // Predicated region
      $region37: #{_lambda_.13} parent=11 // pred_check
        %p383 = pneg %p219
      $region38: #{_lambda_.13} parent=11 // pred_check_branch
        %385 = sbr.rel (%p383) target = $region40
      $region39: #{_lambda_.13} parent=11 // pred_region
        _
      $region40: #{_lambda_.13} parent=11 // pred_fallthru
        _
      // Predicated region
      $region41: #{_lambda_.13} parent=11 // pred_check
        %p386 = pneg %p240
      $region42: #{_lambda_.13} parent=11 // pred_check_branch
        %388 = sbr.rel (%p386) target = $region44
      $region43: #{_lambda_.13} parent=11 // pred_region
        _
      $region44: #{_lambda_.13} parent=11 // pred_fallthru
        _
      // Predicated region
      $region45: #{_lambda_.13} parent=11 // pred_check
        %p389 = pneg %p261
      $region46: #{_lambda_.13} parent=11 // pred_check_branch
        %391 = sbr.rel (%p389) target = $region48
      $region47: #{_lambda_.13} parent=11 // pred_region
        _
      $region48: #{_lambda_.13} parent=11 // pred_fallthru
        _
      // Predicated region
      $region49: #{_lambda_.13} parent=11 // pred_check
        %p392 = pneg %p282
      $region50: #{_lambda_.13} parent=11 // pred_check_branch
        %394 = sbr.rel (%p392) target = $region52
      $region51: #{_lambda_.13} parent=11 // pred_region
        _
      $region52: #{_lambda_.13} parent=11 // pred_fallthru
        _
      // Predicated region
      $region53: #{_lambda_.13} parent=11 // pred_check
        %p395 = pneg %p303
      $region54: #{_lambda_.13} parent=11 // pred_check_branch
        %397 = sbr.rel (%p395) target = $region56
      $region55: #{_lambda_.13} parent=11 // pred_region
        _
      $region56: #{_lambda_.13} parent=11 // pred_fallthru
        _
      // Predicated region
      $region57: #{_lambda_.13} parent=11 // pred_check
        %p398 = pneg %p324
      $region58: #{_lambda_.13} parent=11 // pred_check_branch
        %400 = sbr.rel (%p398) target = $region60
      $region59: #{_lambda_.13} parent=11 // pred_region
        _
      $region60: #{_lambda_.13} parent=11 // pred_fallthru
        _
    $region12: #{_lambda_.13} parent=5 // pred_fallthru
      _
    %p401 = scmp.lt.s32.totalorder %s20, 2
    // Predicated region
    $region61: #{_lambda_.13} parent=5 // pred_check
      %p402 = pneg %p401
    $region62: #{_lambda_.13} parent=5 // pred_check_branch
      %404 = sbr.rel (%p402) target = $region64
    $region63: #{_lambda_.13} parent=5 // pred_region
      // Predicated region
      $region65: #{_lambda_.13} parent=63 // pred_check
        %p405 = pneg %p40
      $region66: #{_lambda_.13} parent=63 // pred_check_branch
        %407 = sbr.rel (%p405) target = $region68
      $region67: #{_lambda_.13} parent=63 // pred_region
        %p408 = scmp.lt.s32.totalorder %s20, 1
        %s409 = scalar_select %p408, %s20, 1
        %s410 = smul.addr %s409, 8
        %s411 = scalar_lea.vmem %s0, %s410
      $region68: #{_lambda_.13} parent=63 // pred_fallthru
        _
      // Predicated region
      $region69: #{_lambda_.13} parent=63 // pred_check
        %p412 = pneg %p66
      $region70: #{_lambda_.13} parent=63 // pred_check_branch
        %414 = sbr.rel (%p412) target = $region72
      $region71: #{_lambda_.13} parent=63 // pred_region
        %p415 = scmp.lt.s32.totalorder %s20, 1
        %s416 = scalar_select %p415, %s20, 1
        %s417 = scalar_lea.vmem %s1, %s416
      $region72: #{_lambda_.13} parent=63 // pred_fallthru
        _
    $region64: #{_lambda_.13} parent=5 // pred_fallthru
      _
    %p418 = scmp.le.s32.totalorder 1, %s20
    %p419 = scmp.lt.s32.totalorder %s20, 3
    %p420 = pnand %p418, %p419
    %p421 = pneg %p420
    // Predicated region
    $region73: #{_lambda_.13} parent=5 // pred_check
      _
    $region74: #{_lambda_.13} parent=5 // pred_check_branch
      %423 = sbr.rel (%p420) target = $region76
    $region75: #{_lambda_.13} parent=5 // pred_region
      %s424 = ssub.s32 %s20, 1
      %p425 = scmp.lt.s32.totalorder %s25, 1
      %s426 = scalar_select %p425, %s25, 1
      %s427 = smul.addr %s426, 8
      %s428 = scalar_lea.vmem %s0, %s427
      %p429 = pneg %p46
      %p430 = pneg %p43
      %p431 = scmp.lt.s32.totalorder %s25, 1
      %s432 = scalar_select %p431, %s25, 1
      %s433 = scalar_lea.vmem %s1, %s432
      %p434 = pneg %p72
      %p435 = pneg %p69
      %p436 = pneg %p93
      %p437 = pneg %p90
      %p438 = pneg %p114
      %p439 = pneg %p111
      %p440 = pneg %p135
      %p441 = pneg %p132
      %p442 = pneg %p156
      %p443 = pneg %p153
      %p444 = pneg %p177
      %p445 = pneg %p174
      %p446 = pneg %p198
      %p447 = pneg %p195
      %p448 = pneg %p219
      %p449 = pneg %p216
      %p450 = pneg %p240
      %p451 = pneg %p237
      %p452 = pneg %p261
      %p453 = pneg %p258
      %p454 = pneg %p282
      %p455 = pneg %p279
      %p456 = pneg %p303
      %p457 = pneg %p300
      %p458 = pneg %p324
      %p459 = pneg %p321
      %p460 = pneg %p350
      %p461 = pneg %p347
      %p462 = scmp.lt.s32.totalorder %s25, 1
      %s463 = scalar_select %p462, %s25, 1
      %s464 = smul.addr %s463, 8
      %s465 = scalar_lea.vmem %s14, %s464
      %p466 = scmp.lt.s32.totalorder %s25, 1
      %s467 = scalar_select %p466, %s25, 1
      %s468 = smul.addr %s467, 8
      %s469 = scalar_lea.vmem %s0, %s468
      %p470 = scmp.lt.s32.totalorder %s25, 1
      %s471 = scalar_select %p470, %s25, 1
      %s472 = scalar_lea.vmem %s1, %s471
      %p473 = scmp.lt.s32.totalorder %s25, 1
      %s474 = scalar_select %p473, %s25, 1
      %s475 = smul.addr %s474, 8
      %s476 = scalar_lea.vmem %s14, %s475
      %v478 = vld [vmem:[%s469] sm:$0xff]
      %v479 = vld [vmem:[%s472] sm:$0x1]
      %v480 = vpack.c.bf16 %v478, %v478
      %v481 = vld [vmem:[%s2] sm:$0xff]
      %v482 = vld [vmem:[%s2 + $0x8] sm:$0xff]
      %v483 = vld [vmem:[%s2 + $0x10] sm:$0xff]
      %v484 = vld [vmem:[%s2 + $0x18] sm:$0xff]
      %v485 = vpack.c.bf16 %v482, %v481
      %v486 = vpack.c.bf16 %v484, %v483
      %v487 = vld [vmem:[%s3] sm:$0x1]
      %v489 = vlaneseq
      %v490 = vshrl.u32 %v489, 7
      %v491 = vsub.s32 0, %v490
      %v492 = vrot.slane %v487, %v491
      %vm494 = vcmask 261120
      %v496 = vsel %vm494, %v480, 0
      %498 = vmatprep.subr.bf16.mxu0 0
      %499 = vmatpush1.bf16.msra.mxu0 0
      %500 = vmatprep.subr.bf16.mxu0 0
      %501 = vmatpush1.bf16.msra.mxu0 0
      %502 = vmatprep.subr.bf16.mxu0 0
      %503 = vmatpush1.bf16.msra.mxu0 0
      %504 = vmatprep.subr.bf16.mxu0 0
      %505 = vmatpush1.bf16.msra.mxu0 0
      %506 = vmatprep.subr.bf16.mxu0 0
      %507 = vmatpush1.bf16.msra.mxu0 0
      %508 = vmatprep.subr.bf16.mxu0 0
      %509 = vmatpush1.bf16.msra.mxu0 0
      %510 = vmatprep.subr.bf16.mxu0 0
      %511 = vmatpush1.bf16.msra.mxu0 %v486
      %512 = vmatprep.subr.bf16.mxu0 0
      %513 = vmatpush1.bf16.msra.mxu0 %v485
      %514 = vmatprep.subr.bf16.mxu0 0
      %515 = vmatpush2.bf16.msra.mxu0 0
      %516 = vmatprep.subr.bf16.mxu0 0
      %517 = vmatpush2.bf16.msra.mxu0 0
      %518 = vmatprep.subr.bf16.mxu0 0
      %519 = vmatpush2.bf16.msra.mxu0 0
      %520 = vmatprep.subr.bf16.mxu0 0
      %521 = vmatpush2.bf16.msra.mxu0 0
      %522 = vmatprep.subr.bf16.mxu0 0
      %523 = vmatpush2.bf16.msra.mxu0 0
      %524 = vmatprep.subr.bf16.mxu0 0
      %525 = vmatpush2.bf16.msra.mxu0 0
      %526 = vmatprep.subr.bf16.mxu0 0
      %527 = vmatpush2.bf16.msra.mxu0 0
      %528 = vmatprep.subr.bf16.mxu0 0
      %529 = vmatpush2.bf16.msra.mxu0 0
      %530 = vmatprep.mubr.bf16.mxu0 0
      %531 = vmatmul.mubr.bf16.gmra.mxu0 %v496
      %v532 = vpop.f32.mrf.mxu0
      %v533 = vadd.f32 %v492, %v532
      %v534 = vpop.f32.mrf.mxu0
      %v535 = vpop.f32.mrf.mxu0
      %v536 = vpop.f32.mrf.mxu0
      %537 = vdwg.mxu0
      %v538 = vpack.c.bf16 %v533, %v533
      %540 = vrot.lane.b32.xlu0 %v538, 96
      %v541 = vpop.permute.xlu0 %540
      %vm542 = vcmask 64512
      %v544 = vsel %vm542, %v538, 0
      %v547 = vsel %vm542, %v541, 0
      %549 = vmatprep.subr.bf16.mxu0 0
      %550 = vmatpush1.bf16.xpose.msra.mxu0 0
      %551 = vmatprep.subr.bf16.mxu0 0
      %552 = vmatpush1.bf16.xpose.msra.mxu0 0
      %553 = vmatprep.subr.bf16.mxu0 0
      %554 = vmatpush1.bf16.xpose.msra.mxu0 0
      %555 = vmatprep.subr.bf16.mxu0 0
      %556 = vmatpush1.bf16.xpose.msra.mxu0 0
      %557 = vmatprep.subr.bf16.mxu0 0
      %558 = vmatpush1.bf16.xpose.msra.mxu0 0
      %559 = vmatprep.subr.bf16.mxu0 0
      %560 = vmatpush1.bf16.xpose.msra.mxu0 0
      %561 = vmatprep.subr.bf16.mxu0 0
      %562 = vmatpush1.bf16.xpose.msra.mxu0 0
      %563 = vmatprep.subr.bf16.mxu0 0
      %564 = vmatpush1.bf16.xpose.msra.mxu0 %v547
      %565 = vmatprep.subr.bf16.mxu0 0
      %566 = vmatpush2.bf16.xpose.msra.mxu0 0
      %567 = vmatprep.subr.bf16.mxu0 0
      %568 = vmatpush2.bf16.xpose.msra.mxu0 0
      %569 = vmatprep.subr.bf16.mxu0 0
      %570 = vmatpush2.bf16.xpose.msra.mxu0 0
      %571 = vmatprep.subr.bf16.mxu0 0
      %572 = vmatpush2.bf16.xpose.msra.mxu0 0
      %573 = vmatprep.subr.bf16.mxu0 0
      %574 = vmatpush2.bf16.xpose.msra.mxu0 0
      %575 = vmatprep.subr.bf16.mxu0 0
      %576 = vmatpush2.bf16.xpose.msra.mxu0 0
      %577 = vmatprep.subr.bf16.mxu0 0
      %578 = vmatpush2.bf16.xpose.msra.mxu0 0
      %579 = vmatprep.subr.bf16.mxu0 0
      %580 = vmatpush2.bf16.xpose.msra.mxu0 0
      %581 = vmatprep.mubr.bf16.mxu0 0
      %582 = vmatmul.mubr.bf16.gmra.mxu0 %v544
      %v583 = vpop.f32.mrf.mxu0
      %v584 = vadd.f32 0.0, %v583
      %v585 = vpop.f32.mrf.mxu0
      %v586 = vpop.f32.mrf.mxu0
      %v587 = vpop.f32.mrf.mxu0
      %588 = vdwg.mxu0
      %v589 = vmul.f32 %v584, 0.35355338
      %v591 = vlaneseq
      %v592 = vshrl.u32 %v591, 7
      %v593 = vsub.s32 0, %v592
      %v594 = vrot.slane %v479, %v593
      %v596 = vadd.f32 %v589, %v594
      %v597 = vsel %vm542, %v596, -inf
      %598 = vmax.xlane.f32.xlu0 %v597
      %v599 = vpop.xlane.xlu0 %598
      %v600 = vsub.f32 %v596, %v599
      %v601 = vmul.f32 %v600, 1.442695
      %v602 = vpow.pop %v601
      %v603 = vsel %vm542, %v602, 0.0
      %604 = vadd.xlane.f32.xlu0 %v603
      %v605 = vpop.xlane.xlu0 %604
      %v606 = vrcp.pop %v605
      %v607 = vmul.f32 %v602, %v606
      %v608 = vpack.c.bf16 %v607, %v607
      %609 = vrot.lane.b32.xlu0 %v538, 64
      %v610 = vpop.permute.xlu0 %609
      %v612 = vsel %vm542, %v608, 0
      %vm614 = vcmask 1043456
      %v616 = vsel %vm614, %v610, 0
      %618 = vmatprep.subr.bf16.mxu0 0
      %619 = vmatpush1.bf16.msra.mxu0 0
      %620 = vmatprep.subr.bf16.mxu0 0
      %621 = vmatpush1.bf16.msra.mxu0 0
      %622 = vmatprep.subr.bf16.mxu0 0
      %623 = vmatpush1.bf16.msra.mxu0 0
      %624 = vmatprep.subr.bf16.mxu0 0
      %625 = vmatpush1.bf16.msra.mxu0 0
      %626 = vmatprep.subr.bf16.mxu0 0
      %627 = vmatpush1.bf16.msra.mxu0 0
      %628 = vmatprep.subr.bf16.mxu0 0
      %629 = vmatpush1.bf16.msra.mxu0 0
      %630 = vmatprep.subr.bf16.mxu0 0
      %631 = vmatpush1.bf16.msra.mxu0 0
      %632 = vmatprep.subr.bf16.mxu0 0
      %633 = vmatpush1.bf16.msra.mxu0 %v616
      %634 = vmatprep.subr.bf16.mxu0 0
      %635 = vmatpush2.bf16.msra.mxu0 0
      %636 = vmatprep.subr.bf16.mxu0 0
      %637 = vmatpush2.bf16.msra.mxu0 0
      %638 = vmatprep.subr.bf16.mxu0 0
      %639 = vmatpush2.bf16.msra.mxu0 0
      %640 = vmatprep.subr.bf16.mxu0 0
      %641 = vmatpush2.bf16.msra.mxu0 0
      %642 = vmatprep.subr.bf16.mxu0 0
      %643 = vmatpush2.bf16.msra.mxu0 0
      %644 = vmatprep.subr.bf16.mxu0 0
      %645 = vmatpush2.bf16.msra.mxu0 0
      %646 = vmatprep.subr.bf16.mxu0 0
      %647 = vmatpush2.bf16.msra.mxu0 0
      %648 = vmatprep.subr.bf16.mxu0 0
      %649 = vmatpush2.bf16.msra.mxu0 0
      %650 = vmatprep.mubr.bf16.mxu0 0
      %651 = vmatmul.mubr.bf16.gmra.mxu0 %v612
      %v652 = vpop.f32.mrf.mxu0
      %v653 = vadd.f32 0.0, %v652
      %v654 = vpop.f32.mrf.mxu0
      %v655 = vpop.f32.mrf.mxu0
      %v656 = vpop.f32.mrf.mxu0
      %657 = vdwg.mxu0
      %658 = vrot.lane.b32.xlu0 %v538, 120
      %v659 = vpop.permute.xlu0 %658
      %660 = vrot.lane.b32.xlu0 %v538, 88
      %v661 = vpop.permute.xlu0 %660
      %v663 = vsel %vm542, %v659, 0
      %v666 = vsel %vm542, %v661, 0
      %668 = vmatprep.subr.bf16.mxu0 0
      %669 = vmatpush1.bf16.xpose.msra.mxu0 0
      %670 = vmatprep.subr.bf16.mxu0 0
      %671 = vmatpush1.bf16.xpose.msra.mxu0 0
      %672 = vmatprep.subr.bf16.mxu0 0
      %673 = vmatpush1.bf16.xpose.msra.mxu0 0
      %674 = vmatprep.subr.bf16.mxu0 0
      %675 = vmatpush1.bf16.xpose.msra.mxu0 0
      %676 = vmatprep.subr.bf16.mxu0 0
      %677 = vmatpush1.bf16.xpose.msra.mxu0 0
      %678 = vmatprep.subr.bf16.mxu0 0
      %679 = vmatpush1.bf16.xpose.msra.mxu0 0
      %680 = vmatprep.subr.bf16.mxu0 0
      %681 = vmatpush1.bf16.xpose.msra.mxu0 0
      %682 = vmatprep.subr.bf16.mxu0 0
      %683 = vmatpush1.bf16.xpose.msra.mxu0 %v666
      %684 = vmatprep.subr.bf16.mxu0 0
      %685 = vmatpush2.bf16.xpose.msra.mxu0 0
      %686 = vmatprep.subr.bf16.mxu0 0
      %687 = vmatpush2.bf16.xpose.msra.mxu0 0
      %688 = vmatprep.subr.bf16.mxu0 0
      %689 = vmatpush2.bf16.xpose.msra.mxu0 0
      %690 = vmatprep.subr.bf16.mxu0 0
      %691 = vmatpush2.bf16.xpose.msra.mxu0 0
      %692 = vmatprep.subr.bf16.mxu0 0
      %693 = vmatpush2.bf16.xpose.msra.mxu0 0
      %694 = vmatprep.subr.bf16.mxu0 0
      %695 = vmatpush2.bf16.xpose.msra.mxu0 0
      %696 = vmatprep.subr.bf16.mxu0 0
      %697 = vmatpush2.bf16.xpose.msra.mxu0 0
      %698 = vmatprep.subr.bf16.mxu0 0
      %699 = vmatpush2.bf16.xpose.msra.mxu0 0
      %700 = vmatprep.mubr.bf16.mxu0 0
      %701 = vmatmul.mubr.bf16.gmra.mxu0 %v663
      %v702 = vpop.f32.mrf.mxu0
      %v703 = vadd.f32 0.0, %v702
      %v704 = vpop.f32.mrf.mxu0
      %v705 = vpop.f32.mrf.mxu0
      %v706 = vpop.f32.mrf.mxu0
      %707 = vdwg.mxu0
      %v708 = vmul.f32 %v703, 0.35355338
      %v709 = vadd.f32 %v708, %v594
      %v710 = vsel %vm542, %v709, -inf
      %711 = vmax.xlane.f32.xlu0 %v710
      %v712 = vpop.xlane.xlu0 %711
      %v713 = vsub.f32 %v709, %v712
      %v714 = vmul.f32 %v713, 1.442695
      %v715 = vpow.pop %v714
      %v716 = vsel %vm542, %v715, 0.0
      %717 = vadd.xlane.f32.xlu0 %v716
      %v718 = vpop.xlane.xlu0 %717
      %v719 = vrcp.pop %v718
      %v720 = vmul.f32 %v715, %v719
      %v721 = vpack.c.bf16 %v720, %v720
      %722 = vrot.lane.b32.xlu0 %v538, 56
      %v723 = vpop.permute.xlu0 %722
      %v725 = vsel %vm542, %v721, 0
      %v728 = vsel %vm614, %v723, 0
      %730 = vmatprep.subr.bf16.mxu0 0
      %731 = vmatpush1.bf16.msra.mxu0 0
      %732 = vmatprep.subr.bf16.mxu0 0
      %733 = vmatpush1.bf16.msra.mxu0 0
      %734 = vmatprep.subr.bf16.mxu0 0
      %735 = vmatpush1.bf16.msra.mxu0 0
      %736 = vmatprep.subr.bf16.mxu0 0
      %737 = vmatpush1.bf16.msra.mxu0 0
      %738 = vmatprep.subr.bf16.mxu0 0
      %739 = vmatpush1.bf16.msra.mxu0 0
      %740 = vmatprep.subr.bf16.mxu0 0
      %741 = vmatpush1.bf16.msra.mxu0 0
      %742 = vmatprep.subr.bf16.mxu0 0
      %743 = vmatpush1.bf16.msra.mxu0 0
      %744 = vmatprep.subr.bf16.mxu0 0
      %745 = vmatpush1.bf16.msra.mxu0 %v728
      %746 = vmatprep.subr.bf16.mxu0 0
      %747 = vmatpush2.bf16.msra.mxu0 0
      %748 = vmatprep.subr.bf16.mxu0 0
      %749 = vmatpush2.bf16.msra.mxu0 0
      %750 = vmatprep.subr.bf16.mxu0 0
      %751 = vmatpush2.bf16.msra.mxu0 0
      %752 = vmatprep.subr.bf16.mxu0 0
      %753 = vmatpush2.bf16.msra.mxu0 0
      %754 = vmatprep.subr.bf16.mxu0 0
      %755 = vmatpush2.bf16.msra.mxu0 0
      %756 = vmatprep.subr.bf16.mxu0 0
      %757 = vmatpush2.bf16.msra.mxu0 0
      %758 = vmatprep.subr.bf16.mxu0 0
      %759 = vmatpush2.bf16.msra.mxu0 0
      %760 = vmatprep.subr.bf16.mxu0 0
      %761 = vmatpush2.bf16.msra.mxu0 0
      %762 = vmatprep.mubr.bf16.mxu0 0
      %763 = vmatmul.mubr.bf16.gmra.mxu0 %v725
      %v764 = vpop.f32.mrf.mxu0
      %v765 = vadd.f32 0.0, %v764
      %v766 = vpop.f32.mrf.mxu0
      %v767 = vpop.f32.mrf.mxu0
      %v768 = vpop.f32.mrf.mxu0
      %769 = vdwg.mxu0
      %770 = vrot.lane.b32.xlu0 %v538, 112
      %v771 = vpop.permute.xlu0 %770
      %772 = vrot.lane.b32.xlu0 %v538, 80
      %v773 = vpop.permute.xlu0 %772
      %v775 = vsel %vm542, %v771, 0
      %v778 = vsel %vm542, %v773, 0
      %780 = vmatprep.subr.bf16.mxu0 0
      %781 = vmatpush1.bf16.xpose.msra.mxu0 0
      %782 = vmatprep.subr.bf16.mxu0 0
      %783 = vmatpush1.bf16.xpose.msra.mxu0 0
      %784 = vmatprep.subr.bf16.mxu0 0
      %785 = vmatpush1.bf16.xpose.msra.mxu0 0
      %786 = vmatprep.subr.bf16.mxu0 0
      %787 = vmatpush1.bf16.xpose.msra.mxu0 0
      %788 = vmatprep.subr.bf16.mxu0 0
      %789 = vmatpush1.bf16.xpose.msra.mxu0 0
      %790 = vmatprep.subr.bf16.mxu0 0
      %791 = vmatpush1.bf16.xpose.msra.mxu0 0
      %792 = vmatprep.subr.bf16.mxu0 0
      %793 = vmatpush1.bf16.xpose.msra.mxu0 0
      %794 = vmatprep.subr.bf16.mxu0 0
      %795 = vmatpush1.bf16.xpose.msra.mxu0 %v778
      %796 = vmatprep.subr.bf16.mxu0 0
      %797 = vmatpush2.bf16.xpose.msra.mxu0 0
      %798 = vmatprep.subr.bf16.mxu0 0
      %799 = vmatpush2.bf16.xpose.msra.mxu0 0
      %800 = vmatprep.subr.bf16.mxu0 0
      %801 = vmatpush2.bf16.xpose.msra.mxu0 0
      %802 = vmatprep.subr.bf16.mxu0 0
      %803 = vmatpush2.bf16.xpose.msra.mxu0 0
      %804 = vmatprep.subr.bf16.mxu0 0
      %805 = vmatpush2.bf16.xpose.msra.mxu0 0
      %806 = vmatprep.subr.bf16.mxu0 0
      %807 = vmatpush2.bf16.xpose.msra.mxu0 0
      %808 = vmatprep.subr.bf16.mxu0 0
      %809 = vmatpush2.bf16.xpose.msra.mxu0 0
      %810 = vmatprep.subr.bf16.mxu0 0
      %811 = vmatpush2.bf16.xpose.msra.mxu0 0
      %812 = vmatprep.mubr.bf16.mxu0 0
      %813 = vmatmul.mubr.bf16.gmra.mxu0 %v775
      %v814 = vpop.f32.mrf.mxu0
      %v815 = vadd.f32 0.0, %v814
      %v816 = vpop.f32.mrf.mxu0
      %v817 = vpop.f32.mrf.mxu0
      %v818 = vpop.f32.mrf.mxu0
      %819 = vdwg.mxu0
      %v820 = vmul.f32 %v815, 0.35355338
      %v821 = vadd.f32 %v820, %v594
      %v822 = vsel %vm542, %v821, -inf
      %823 = vmax.xlane.f32.xlu0 %v822
      %v824 = vpop.xlane.xlu0 %823
      %v825 = vsub.f32 %v821, %v824
      %v826 = vmul.f32 %v825, 1.442695
      %v827 = vpow.pop %v826
      %v828 = vsel %vm542, %v827, 0.0
      %829 = vadd.xlane.f32.xlu0 %v828
      %v830 = vpop.xlane.xlu0 %829
      %v831 = vrcp.pop %v830
      %v832 = vmul.f32 %v827, %v831
      %v833 = vpack.c.bf16 %v832, %v832
      %834 = vrot.lane.b32.xlu0 %v538, 48
      %v835 = vpop.permute.xlu0 %834
      %v837 = vsel %vm542, %v833, 0
      %v840 = vsel %vm614, %v835, 0
      %842 = vmatprep.subr.bf16.mxu0 0
      %843 = vmatpush1.bf16.msra.mxu0 0
      %844 = vmatprep.subr.bf16.mxu0 0
      %845 = vmatpush1.bf16.msra.mxu0 0
      %846 = vmatprep.subr.bf16.mxu0 0
      %847 = vmatpush1.bf16.msra.mxu0 0
      %848 = vmatprep.subr.bf16.mxu0 0
      %849 = vmatpush1.bf16.msra.mxu0 0
      %850 = vmatprep.subr.bf16.mxu0 0
      %851 = vmatpush1.bf16.msra.mxu0 0
      %852 = vmatprep.subr.bf16.mxu0 0
      %853 = vmatpush1.bf16.msra.mxu0 0
      %854 = vmatprep.subr.bf16.mxu0 0
      %855 = vmatpush1.bf16.msra.mxu0 0
      %856 = vmatprep.subr.bf16.mxu0 0
      %857 = vmatpush1.bf16.msra.mxu0 %v840
      %858 = vmatprep.subr.bf16.mxu0 0
      %859 = vmatpush2.bf16.msra.mxu0 0
      %860 = vmatprep.subr.bf16.mxu0 0
      %861 = vmatpush2.bf16.msra.mxu0 0
      %862 = vmatprep.subr.bf16.mxu0 0
      %863 = vmatpush2.bf16.msra.mxu0 0
      %864 = vmatprep.subr.bf16.mxu0 0
      %865 = vmatpush2.bf16.msra.mxu0 0
      %866 = vmatprep.subr.bf16.mxu0 0
      %867 = vmatpush2.bf16.msra.mxu0 0
      %868 = vmatprep.subr.bf16.mxu0 0
      %869 = vmatpush2.bf16.msra.mxu0 0
      %870 = vmatprep.subr.bf16.mxu0 0
      %871 = vmatpush2.bf16.msra.mxu0 0
      %872 = vmatprep.subr.bf16.mxu0 0
      %873 = vmatpush2.bf16.msra.mxu0 0
      %874 = vmatprep.mubr.bf16.mxu0 0
      %875 = vmatmul.mubr.bf16.gmra.mxu0 %v837
      %v876 = vpop.f32.mrf.mxu0
      %v877 = vadd.f32 0.0, %v876
      %v878 = vpop.f32.mrf.mxu0
      %v879 = vpop.f32.mrf.mxu0
      %v880 = vpop.f32.mrf.mxu0
      %881 = vdwg.mxu0
      %882 = vrot.lane.b32.xlu0 %v538, 104
      %v883 = vpop.permute.xlu0 %882
      %884 = vrot.lane.b32.xlu0 %v538, 72
      %v885 = vpop.permute.xlu0 %884
      %v887 = vsel %vm542, %v883, 0
      %v890 = vsel %vm542, %v885, 0
      %892 = vmatprep.subr.bf16.mxu0 0
      %893 = vmatpush1.bf16.xpose.msra.mxu0 0
      %894 = vmatprep.subr.bf16.mxu0 0
      %895 = vmatpush1.bf16.xpose.msra.mxu0 0
      %896 = vmatprep.subr.bf16.mxu0 0
      %897 = vmatpush1.bf16.xpose.msra.mxu0 0
      %898 = vmatprep.subr.bf16.mxu0 0
      %899 = vmatpush1.bf16.xpose.msra.mxu0 0
      %900 = vmatprep.subr.bf16.mxu0 0
      %901 = vmatpush1.bf16.xpose.msra.mxu0 0
      %902 = vmatprep.subr.bf16.mxu0 0
      %903 = vmatpush1.bf16.xpose.msra.mxu0 0
      %904 = vmatprep.subr.bf16.mxu0 0
      %905 = vmatpush1.bf16.xpose.msra.mxu0 0
      %906 = vmatprep.subr.bf16.mxu0 0
      %907 = vmatpush1.bf16.xpose.msra.mxu0 %v890
      %908 = vmatprep.subr.bf16.mxu0 0
      %909 = vmatpush2.bf16.xpose.msra.mxu0 0
      %910 = vmatprep.subr.bf16.mxu0 0
      %911 = vmatpush2.bf16.xpose.msra.mxu0 0
      %912 = vmatprep.subr.bf16.mxu0 0
      %913 = vmatpush2.bf16.xpose.msra.mxu0 0
      %914 = vmatprep.subr.bf16.mxu0 0
      %915 = vmatpush2.bf16.xpose.msra.mxu0 0
      %916 = vmatprep.subr.bf16.mxu0 0
      %917 = vmatpush2.bf16.xpose.msra.mxu0 0
      %918 = vmatprep.subr.bf16.mxu0 0
      %919 = vmatpush2.bf16.xpose.msra.mxu0 0
      %920 = vmatprep.subr.bf16.mxu0 0
      %921 = vmatpush2.bf16.xpose.msra.mxu0 0
      %922 = vmatprep.subr.bf16.mxu0 0
      %923 = vmatpush2.bf16.xpose.msra.mxu0 0
      %924 = vmatprep.mubr.bf16.mxu0 0
      %925 = vmatmul.mubr.bf16.gmra.mxu0 %v887
      %v926 = vpop.f32.mrf.mxu0
      %v927 = vadd.f32 0.0, %v926
      %v928 = vpop.f32.mrf.mxu0
      %v929 = vpop.f32.mrf.mxu0
      %v930 = vpop.f32.mrf.mxu0
      %931 = vdwg.mxu0
      %v932 = vmul.f32 %v927, 0.35355338
      %v933 = vadd.f32 %v932, %v594
      %v934 = vsel %vm542, %v933, -inf
      %935 = vmax.xlane.f32.xlu0 %v934
      %v936 = vpop.xlane.xlu0 %935
      %v937 = vsub.f32 %v933, %v936
      %v938 = vmul.f32 %v937, 1.442695
      %v939 = vpow.pop %v938
      %v940 = vsel %vm542, %v939, 0.0
      %941 = vadd.xlane.f32.xlu0 %v940
      %v942 = vpop.xlane.xlu0 %941
      %v943 = vrcp.pop %v942
      %v944 = vmul.f32 %v939, %v943
      %v945 = vpack.c.bf16 %v944, %v944
      %946 = vrot.lane.b32.xlu0 %v538, 40
      %v947 = vpop.permute.xlu0 %946
      %v949 = vsel %vm542, %v945, 0
      %v952 = vsel %vm614, %v947, 0
      %954 = vmatprep.subr.bf16.mxu0 0
      %955 = vmatpush1.bf16.msra.mxu0 0
      %956 = vmatprep.subr.bf16.mxu0 0
      %957 = vmatpush1.bf16.msra.mxu0 0
      %958 = vmatprep.subr.bf16.mxu0 0
      %959 = vmatpush1.bf16.msra.mxu0 0
      %960 = vmatprep.subr.bf16.mxu0 0
      %961 = vmatpush1.bf16.msra.mxu0 0
      %962 = vmatprep.subr.bf16.mxu0 0
      %963 = vmatpush1.bf16.msra.mxu0 0
      %964 = vmatprep.subr.bf16.mxu0 0
      %965 = vmatpush1.bf16.msra.mxu0 0
      %966 = vmatprep.subr.bf16.mxu0 0
      %967 = vmatpush1.bf16.msra.mxu0 0
      %968 = vmatprep.subr.bf16.mxu0 0
      %969 = vmatpush1.bf16.msra.mxu0 %v952
      %970 = vmatprep.subr.bf16.mxu0 0
      %971 = vmatpush2.bf16.msra.mxu0 0
      %972 = vmatprep.subr.bf16.mxu0 0
      %973 = vmatpush2.bf16.msra.mxu0 0
      %974 = vmatprep.subr.bf16.mxu0 0
      %975 = vmatpush2.bf16.msra.mxu0 0
      %976 = vmatprep.subr.bf16.mxu0 0
      %977 = vmatpush2.bf16.msra.mxu0 0
      %978 = vmatprep.subr.bf16.mxu0 0
      %979 = vmatpush2.bf16.msra.mxu0 0
      %980 = vmatprep.subr.bf16.mxu0 0
      %981 = vmatpush2.bf16.msra.mxu0 0
      %982 = vmatprep.subr.bf16.mxu0 0
      %983 = vmatpush2.bf16.msra.mxu0 0
      %984 = vmatprep.subr.bf16.mxu0 0
      %985 = vmatpush2.bf16.msra.mxu0 0
      %986 = vmatprep.mubr.bf16.mxu0 0
      %987 = vmatmul.mubr.bf16.gmra.mxu0 %v949
      %v988 = vpop.f32.mrf.mxu0
      %v989 = vadd.f32 0.0, %v988
      %v990 = vpop.f32.mrf.mxu0
      %v991 = vpop.f32.mrf.mxu0
      %v992 = vpop.f32.mrf.mxu0
      %993 = vdwg.mxu0
      %995 = vrot.lane.b32.xlu0 %v765, 8
      %v996 = vpop.permute.xlu0 %995
      %999 = vrot.lane.b32.xlu0 %v877, 16
      %v1000 = vpop.permute.xlu0 %999
      %1003 = vrot.lane.b32.xlu0 %v989, 24
      %v1004 = vpop.permute.xlu0 %1003
      %v1006 = vsel %vm542, %v653, %v996
      %vm1007 = vcmask 130048
      %v1008 = vsel %vm1007, %v1006, %v1000
      %vm1009 = vcmask 195584
      %v1010 = vsel %vm1009, %v1008, %v1004
      %v1011 = vpack.c.bf16 %v1010, %v1010
      %v1012 = vld [vmem:[%s4] sm:$0xff]
      %v1013 = vld [vmem:[%s4 + $0x8] sm:$0xff]
      %v1014 = vld [vmem:[%s4 + $0x10] sm:$0xff]
      %v1015 = vld [vmem:[%s4 + $0x18] sm:$0xff]
      %v1016 = vpack.c.bf16 %v1013, %v1012
      %v1017 = vpack.c.bf16 %v1015, %v1014
      %v1018 = vld [vmem:[%s5] sm:$0x1]
      %v1020 = vlaneseq
      %v1021 = vshrl.u32 %v1020, 7
      %v1022 = vsub.s32 0, %v1021
      %v1023 = vrot.slane %v1018, %v1022
      %v1026 = vsel %vm494, %v1011, 0
      %1028 = vmatprep.subr.bf16.mxu0 0
      %1029 = vmatpush1.bf16.msra.mxu0 0
      %1030 = vmatprep.subr.bf16.mxu0 0
      %1031 = vmatpush1.bf16.msra.mxu0 0
      %1032 = vmatprep.subr.bf16.mxu0 0
      %1033 = vmatpush1.bf16.msra.mxu0 0
      %1034 = vmatprep.subr.bf16.mxu0 0
      %1035 = vmatpush1.bf16.msra.mxu0 0
      %1036 = vmatprep.subr.bf16.mxu0 0
      %1037 = vmatpush1.bf16.msra.mxu0 0
      %1038 = vmatprep.subr.bf16.mxu0 0
      %1039 = vmatpush1.bf16.msra.mxu0 0
      %1040 = vmatprep.subr.bf16.mxu0 0
      %1041 = vmatpush1.bf16.msra.mxu0 %v1017
      %1042 = vmatprep.subr.bf16.mxu0 0
      %1043 = vmatpush1.bf16.msra.mxu0 %v1016
      %1044 = vmatprep.subr.bf16.mxu0 0
      %1045 = vmatpush2.bf16.msra.mxu0 0
      %1046 = vmatprep.subr.bf16.mxu0 0
      %1047 = vmatpush2.bf16.msra.mxu0 0
      %1048 = vmatprep.subr.bf16.mxu0 0
      %1049 = vmatpush2.bf16.msra.mxu0 0
      %1050 = vmatprep.subr.bf16.mxu0 0
      %1051 = vmatpush2.bf16.msra.mxu0 0
      %1052 = vmatprep.subr.bf16.mxu0 0
      %1053 = vmatpush2.bf16.msra.mxu0 0
      %1054 = vmatprep.subr.bf16.mxu0 0
      %1055 = vmatpush2.bf16.msra.mxu0 0
      %1056 = vmatprep.subr.bf16.mxu0 0
      %1057 = vmatpush2.bf16.msra.mxu0 0
      %1058 = vmatprep.subr.bf16.mxu0 0
      %1059 = vmatpush2.bf16.msra.mxu0 0
      %1060 = vmatprep.mubr.bf16.mxu0 0
      %1061 = vmatmul.mubr.bf16.gmra.mxu0 %v1026
      %v1062 = vpop.f32.mrf.mxu0
      %v1063 = vadd.f32 %v1023, %v1062
      %v1064 = vpop.f32.mrf.mxu0
      %v1065 = vpop.f32.mrf.mxu0
      %v1066 = vpop.f32.mrf.mxu0
      %1067 = vdwg.mxu0
      %v1068 = vadd.f32 %v1063, %v478
      %v1069 = vpack.c.bf16 %v1068, %v1068
      %v1070 = vld [vmem:[%s8] sm:$0xff]
      %v1071 = vld [vmem:[%s8 + $0x8] sm:$0xff]
      %v1072 = vld [vmem:[%s8 + $0x10] sm:$0xff]
      %v1073 = vld [vmem:[%s8 + $0x18] sm:$0xff]
      %v1074 = vpack.c.bf16 %v1071, %v1070
      %v1075 = vpack.c.bf16 %v1073, %v1072
      %v1076 = vld [vmem:[%s9] sm:$0x1]
      %v1078 = vlaneseq
      %v1079 = vshrl.u32 %v1078, 7
      %v1080 = vsub.s32 0, %v1079
      %v1081 = vrot.slane %v1076, %v1080
      %v1084 = vsel %vm494, %v1069, 0
      %1086 = vmatprep.subr.bf16.mxu0 0
      %1087 = vmatpush1.bf16.msra.mxu0 0
      %1088 = vmatprep.subr.bf16.mxu0 0
      %1089 = vmatpush1.bf16.msra.mxu0 0
      %1090 = vmatprep.subr.bf16.mxu0 0
      %1091 = vmatpush1.bf16.msra.mxu0 0
      %1092 = vmatprep.subr.bf16.mxu0 0
      %1093 = vmatpush1.bf16.msra.mxu0 0
      %1094 = vmatprep.subr.bf16.mxu0 0
      %1095 = vmatpush1.bf16.msra.mxu0 0
      %1096 = vmatprep.subr.bf16.mxu0 0
      %1097 = vmatpush1.bf16.msra.mxu0 0
      %1098 = vmatprep.subr.bf16.mxu0 0
      %1099 = vmatpush1.bf16.msra.mxu0 %v1075
      %1100 = vmatprep.subr.bf16.mxu0 0
      %1101 = vmatpush1.bf16.msra.mxu0 %v1074
      %1102 = vmatprep.subr.bf16.mxu0 0
      %1103 = vmatpush2.bf16.msra.mxu0 0
      %1104 = vmatprep.subr.bf16.mxu0 0
      %1105 = vmatpush2.bf16.msra.mxu0 0
      %1106 = vmatprep.subr.bf16.mxu0 0
      %1107 = vmatpush2.bf16.msra.mxu0 0
      %1108 = vmatprep.subr.bf16.mxu0 0
      %1109 = vmatpush2.bf16.msra.mxu0 0
      %1110 = vmatprep.subr.bf16.mxu0 0
      %1111 = vmatpush2.bf16.msra.mxu0 0
      %1112 = vmatprep.subr.bf16.mxu0 0
      %1113 = vmatpush2.bf16.msra.mxu0 0
      %1114 = vmatprep.subr.bf16.mxu0 0
      %1115 = vmatpush2.bf16.msra.mxu0 0
      %1116 = vmatprep.subr.bf16.mxu0 0
      %1117 = vmatpush2.bf16.msra.mxu0 0
      %1118 = vmatprep.mubr.bf16.mxu0 0
      %1119 = vmatmul.mubr.bf16.gmra.mxu0 %v1084
      %v1120 = vpop.f32.mrf.mxu0
      %v1121 = vadd.f32 %v1081, %v1120
      %v1122 = vpop.f32.mrf.mxu0
      %v1123 = vpop.f32.mrf.mxu0
      %v1124 = vpop.f32.mrf.mxu0
      %1125 = vdwg.mxu0
      %v1126 = vmul.f32 %v1121, 0.5
      %v1127 = vmul.f32 %v1121, 0.70710677
      %v1128 = verf.f32.pop %v1127
      %v1129 = vadd.f32 %v1128, 1.0
      %v1130 = vmul.f32 %v1126, %v1129
      %v1131 = vpack.c.bf16 %v1130, %v1130
      %v1132 = vld [vmem:[%s10] sm:$0xff]
      %v1133 = vld [vmem:[%s10 + $0x8] sm:$0xff]
      %v1134 = vld [vmem:[%s10 + $0x10] sm:$0xff]
      %v1135 = vld [vmem:[%s10 + $0x18] sm:$0xff]
      %v1136 = vld [vmem:[%s10 + $0x20] sm:$0xff]
      %v1137 = vld [vmem:[%s10 + $0x28] sm:$0xff]
      %v1138 = vld [vmem:[%s10 + $0x30] sm:$0xff]
      %v1139 = vld [vmem:[%s10 + $0x38] sm:$0xff]
      %v1140 = vpack.c.bf16 %v1133, %v1132
      %v1141 = vpack.c.bf16 %v1135, %v1134
      %v1142 = vpack.c.bf16 %v1137, %v1136
      %v1143 = vpack.c.bf16 %v1139, %v1138
      %v1144 = vld [vmem:[%s11] sm:$0x1]
      %v1146 = vlaneseq
      %v1147 = vshrl.u32 %v1146, 7
      %v1148 = vsub.s32 0, %v1147
      %v1149 = vrot.slane %v1144, %v1148
      %vm1151 = vcmask 523264
      %v1153 = vsel %vm1151, %v1131, 0
      %1155 = vmatprep.subr.bf16.mxu0 0
      %1156 = vmatpush1.bf16.msra.mxu0 0
      %1157 = vmatprep.subr.bf16.mxu0 0
      %1158 = vmatpush1.bf16.msra.mxu0 0
      %1159 = vmatprep.subr.bf16.mxu0 0
      %1160 = vmatpush1.bf16.msra.mxu0 0
      %1161 = vmatprep.subr.bf16.mxu0 0
      %1162 = vmatpush1.bf16.msra.mxu0 0
      %1163 = vmatprep.subr.bf16.mxu0 0
      %1164 = vmatpush1.bf16.msra.mxu0 %v1143
      %1165 = vmatprep.subr.bf16.mxu0 0
      %1166 = vmatpush1.bf16.msra.mxu0 %v1142
      %1167 = vmatprep.subr.bf16.mxu0 0
      %1168 = vmatpush1.bf16.msra.mxu0 %v1141
      %1169 = vmatprep.subr.bf16.mxu0 0
      %1170 = vmatpush1.bf16.msra.mxu0 %v1140
      %1171 = vmatprep.subr.bf16.mxu0 0
      %1172 = vmatpush2.bf16.msra.mxu0 0
      %1173 = vmatprep.subr.bf16.mxu0 0
      %1174 = vmatpush2.bf16.msra.mxu0 0
      %1175 = vmatprep.subr.bf16.mxu0 0
      %1176 = vmatpush2.bf16.msra.mxu0 0
      %1177 = vmatprep.subr.bf16.mxu0 0
      %1178 = vmatpush2.bf16.msra.mxu0 0
      %1179 = vmatprep.subr.bf16.mxu0 0
      %1180 = vmatpush2.bf16.msra.mxu0 0
      %1181 = vmatprep.subr.bf16.mxu0 0
      %1182 = vmatpush2.bf16.msra.mxu0 0
      %1183 = vmatprep.subr.bf16.mxu0 0
      %1184 = vmatpush2.bf16.msra.mxu0 0
      %1185 = vmatprep.subr.bf16.mxu0 0
      %1186 = vmatpush2.bf16.msra.mxu0 0
      %1187 = vmatprep.mubr.bf16.mxu0 0
      %1188 = vmatmul.mubr.bf16.gmra.mxu0 %v1153
      %v1189 = vpop.f32.mrf.mxu0
      %v1190 = vadd.f32 %v1149, %v1189
      %v1191 = vpop.f32.mrf.mxu0
      %v1192 = vpop.f32.mrf.mxu0
      %v1193 = vpop.f32.mrf.mxu0
      %1194 = vdwg.mxu0
      %v1195 = vadd.f32 %v1190, %v1068
      %v1196 = vld [vmem:[%s12] sm:$0x1]
      %v1197 = vld [vmem:[%s13] sm:$0x1]
      %v1198 = vsel %vm494, %v1195, 0.0
      %1199 = vadd.xlane.f32.xlu0 %v1198
      %v1200 = vpop.xlane.xlu0 %1199
      %v1201 = vrcp.pop 32.0
      %v1202 = vmul.f32 %v1200, %v1201
      %v1203 = vsub.f32 %v1195, %v1202
      %v1204 = vmul.f32 %v1203, %v1203
      %v1205 = vsel %vm494, %v1204, 0.0
      %1206 = vadd.xlane.f32.xlu0 %v1205
      %v1207 = vpop.xlane.xlu0 %1206
      %v1208 = vmul.f32 %v1207, %v1201
      %v1209 = vadd.f32 %v1208, 1e-12
      %v1210 = vrsqrt.pop %v1209
      %v1211 = vmul.f32 %v1203, %v1210
      %v1213 = vlaneseq
      %v1214 = vshrl.u32 %v1213, 7
      %v1215 = vsub.s32 0, %v1214
      %v1216 = vrot.slane %v1196, %v1215
      %v1218 = vmul.f32 %v1211, %v1216
      %v1220 = vlaneseq
      %v1221 = vshrl.u32 %v1220, 7
      %v1222 = vsub.s32 0, %v1221
      %v1223 = vrot.slane %v1197, %v1222
      %v1225 = vadd.f32 %v1218, %v1223
      %1226 = vst.msk [vmem:[%s476] sm:$0xff] %vm494, %v1225
      %p1227 = scmp.lt.s32.totalorder %s25, 1
      %s1228 = scalar_select %p1227, %s25, 1
      %s1229 = smul.addr %s1228, 8
      %s1230 = scalar_lea.vmem %s14, %s1229
      // Predicated region
      $region77: #{_lambda_.13} parent=75 // pred_check
        %p1231 = pneg %p347
      $region78: #{_lambda_.13} parent=75 // pred_check_branch
        %1233 = sbr.rel (%p1231) target = $region80
      $region79: #{_lambda_.13} parent=75 // pred_region
        _
      $region80: #{_lambda_.13} parent=75 // pred_fallthru
        _
    $region76: #{_lambda_.13} parent=5 // pred_fallthru
      _
    %p1234 = scmp.le.s32.totalorder 2, %s20
    // Predicated region
    $region81: #{_lambda_.13} parent=5 // pred_check
      %p1235 = pneg %p1234
    $region82: #{_lambda_.13} parent=5 // pred_check_branch
      %1237 = sbr.rel (%p1235) target = $region84
    $region83: #{_lambda_.13} parent=5 // pred_region
      %s1238 = ssub.s32 %s20, 2
      // Predicated region
      $region85: #{_lambda_.13} parent=83 // pred_check
        %p1239 = pneg %p353
      $region86: #{_lambda_.13} parent=83 // pred_check_branch
        %1241 = sbr.rel (%p1239) target = $region88
      $region87: #{_lambda_.13} parent=83 // pred_region
        %p1242 = scmp.lt.s32.totalorder %s26, 1
        %s1243 = scalar_select %p1242, %s26, 1
        %s1244 = smul.addr %s1243, 8
        %s1245 = scalar_lea.vmem %s14, %s1244
      $region88: #{_lambda_.13} parent=83 // pred_fallthru
        _
    $region84: #{_lambda_.13} parent=5 // pred_fallthru
      _
  $region6: #{_lambda_.13} parent=0 // loop_footer
    %s24 = sadd.s32 1, %s20
  $region7: #{_lambda_.13} parent=0 // loop_footer_branch
    %19 = sbr.rel target = $region3
  $region8: #{_lambda_.13} parent=0 // loop_exit
    _

</llo_original>
